<compile_context>
chip_gen: v7x
topology: tpu7x:2x2x1
jax: 0.10.0
libtpu: 0.0.40
codegen_flags: <defaults>
</compile_context>

<pallas_src>
import jax
import jax.numpy as jnp
import numpy as np
from jax.experimental import pallas as pl
from jax.experimental.pallas import tpu as pltpu

IMAGE_SIZE = 784
H1_DIM = 400
H2_DIM = 200
Z_DIM = 20

MULV_PAD = 128      # fused mu||log_var head padded to one full lane group
BATCH_TILE = 256    # rows per grid step for large batches


def _round_up(v, m):
    return ((v + m - 1) // m) * m


def _vae_kernel(
    x_ref, eps_ref,
    w1_ref, b1_ref, w2_ref, b2_ref, w3_ref, b3_ref,
    w4_ref, b4_ref, w5_ref, b5_ref, w6_ref, b6_ref,
    xrec_ref, mulv_ref,
):
    f32 = jnp.float32
    bf16 = jnp.bfloat16

    x = x_ref[...]                                     # (TB, 784) bf16

    # ---- encode ----
    h1 = jnp.dot(x, w1_ref[...], preferred_element_type=f32)
    h1 = jnp.maximum(h1 + b1_ref[...], 0.0).astype(bf16)
    h2 = jnp.dot(h1, w2_ref[...], preferred_element_type=f32)
    h2 = jnp.maximum(h2 + b2_ref[...], 0.0).astype(bf16)

    # fused mu || log_var head; pad lanes (>= 40) are exactly 0
    mulv = jnp.dot(h2, w3_ref[...], preferred_element_type=f32) + b3_ref[...]

    # ---- reparameterize on the whole 128-lane block (no 20-lane slices) ----
    # mulv lanes: [mu 0:20 | log_var 20:40 | 0].  eps_ref carries eps at lanes
    # 20:40 (zeros elsewhere), so eps * exp(mulv/2) == eps * std at those
    # lanes and 0 everywhere else.  z_full = [mu | eps*std | 0]; w4 holds the
    # decoder weight duplicated at rows 0:20 and 20:40, so one K=128 matmul
    # computes (mu + eps*std) @ W4.
    lane = jax.lax.broadcasted_iota(jnp.int32, (1, MULV_PAD), 1)
    mu_mask = (lane < Z_DIM).astype(f32)
    z_full = mulv * mu_mask + eps_ref[...] * jnp.exp(mulv * 0.5)

    # ---- decode ----
    h3 = jnp.dot(z_full.astype(bf16), w4_ref[...], preferred_element_type=f32)
    h3 = jnp.maximum(h3 + b4_ref[...], 0.0).astype(bf16)
    h4 = jnp.dot(h3, w5_ref[...], preferred_element_type=f32)
    h4 = jnp.maximum(h4 + b5_ref[...], 0.0).astype(bf16)
    logits = jnp.dot(h4, w6_ref[...], preferred_element_type=f32) + b6_ref[...]

    xrec_ref[...] = jax.nn.sigmoid(logits).astype(xrec_ref.dtype)
    mulv_ref[...] = mulv


@jax.jit
def vae_forward(x_bf16, eps_pad, kparams):
    """x_bf16: (B, 784) bf16, eps_pad: (B, 128) f32 with eps at lanes 20:40,
    kparams: prepare_kernel_params().  Returns (x_reconst bf16, mu, log_var)."""
    B = x_bf16.shape[0]

    # Batch tiling: tiny batches -> one step; moderate batches -> two steps so
    # the "parallel" axis shards across v7x's two TensorCores; large batches ->
    # 256-row tiles (full M on v6e/v7x MXU, fewer grid steps).
    if B <= 16:
        tb = B
    elif B <= BATCH_TILE:
        tb = _round_up((B + 1) // 2, 16)
    else:
        tb = BATCH_TILE
    grid = (pl.cdiv(B, tb),)

    def batched(last):
        return pl.BlockSpec((tb, last), lambda i: (i, 0))

    def pinned(arr):
        # Weights/biases: same block every grid step -> stay VMEM-resident.
        return pl.BlockSpec(arr.shape, lambda i: (0, 0))

    weight_args = (
        kparams["w1"], kparams["b1"], kparams["w2"], kparams["b2"],
        kparams["w3"], kparams["b3"], kparams["w4"], kparams["b4"],
        kparams["w5"], kparams["b5"], kparams["w6"], kparams["b6"],
    )

    in_specs = [
        batched(IMAGE_SIZE),             # x (bf16, unpadded)
        batched(MULV_PAD),               # eps at lanes 20:40
    ] + [pinned(w) for w in weight_args]

    out_shapes = (
        jax.ShapeDtypeStruct((B, IMAGE_SIZE), jnp.bfloat16),   # reconstruction
        jax.ShapeDtypeStruct((B, MULV_PAD), jnp.float32),      # fused mu||logvar
    )
    out_specs = (
        batched(IMAGE_SIZE),
        batched(MULV_PAD),
    )

    xrec, mulv = pl.pallas_call(
        _vae_kernel,
        out_shape=out_shapes,
        grid=grid,
        in_specs=in_specs,
        out_specs=out_specs,
        compiler_params=pltpu.CompilerParams(
            dimension_semantics=("parallel",),       # megacore-shard batch on v7x
            vmem_limit_bytes=32 * 1024 * 1024,       # well under v7x's 64 MiB VMEM
        ),
    )(x_bf16, eps_pad, *weight_args)

    mu = mulv[:, :Z_DIM]
    log_var = mulv[:, Z_DIM:2 * Z_DIM]
    return xrec, mu, log_var


def init_params(key):
    """PyTorch-Linear-style init: U(-1/sqrt(fan_in), 1/sqrt(fan_in)).
    Weights stored as (in_features, out_features), biases as (1, out)."""
    dims = [
        ("w1", "b1", IMAGE_SIZE, H1_DIM),
        ("w2", "b2", H1_DIM, H2_DIM),
        ("w31", "b31", H2_DIM, Z_DIM),
        ("w32", "b32", H2_DIM, Z_DIM),
        ("w4", "b4", Z_DIM, H2_DIM),
        ("w5", "b5", H2_DIM, H1_DIM),
        ("w6", "b6", H1_DIM, IMAGE_SIZE),
    ]
    params = {}
    keys = jax.random.split(key, 2 * len(dims))
    for idx, (wn, bn, fin, fout) in enumerate(dims):
        bound = 1.0 / np.sqrt(fin)
        params[wn] = jax.random.uniform(
            keys[2 * idx], (fin, fout), jnp.float32, -bound, bound)
        params[bn] = jax.random.uniform(
            keys[2 * idx + 1], (1, fout), jnp.float32, -bound, bound)
    return params


def prepare_kernel_params(p):
    """Kernel-side weight layout: bf16 weights, f32 biases.
    fc31||fc32 fused and padded to 128 output lanes; fc4 expanded to a
    (128, 200) weight with the decoder matrix duplicated at rows 0:20 and
    20:40 (mu and eps*std lanes) and zeros elsewhere."""
    bf16 = jnp.bfloat16
    kp = {}
    kp["w1"] = p["w1"].astype(bf16)                     # (784, 400)
    kp["b1"] = p["b1"]
    kp["w2"] = p["w2"].astype(bf16)                     # (400, 200)
    kp["b2"] = p["b2"]
    # fused fc31 || fc32, padded to 128 output lanes (pad cols/bias are zero)
    w3 = jnp.concatenate([p["w31"], p["w32"]], axis=1)
    b3 = jnp.concatenate([p["b31"], p["b32"]], axis=1)
    kp["w3"] = jnp.pad(w3, ((0, 0), (0, MULV_PAD - 2 * Z_DIM))).astype(bf16)
    kp["b3"] = jnp.pad(b3, ((0, 0), (0, MULV_PAD - 2 * Z_DIM)))
    # fc4: (20, 200) -> (128, 200); rows 0:20 act on mu lanes, rows 20:40 act
    # on the eps*std lanes, remaining rows are zero.
    w4 = p["w4"]
    kp["w4"] = jnp.concatenate(
        [w4, w4, jnp.zeros((MULV_PAD - 2 * Z_DIM, H2_DIM), w4.dtype)], axis=0
    ).astype(bf16)
    kp["b4"] = p["b4"]
    kp["w5"] = p["w5"].astype(bf16)                     # (200, 400)
    kp["b5"] = p["b5"]
    kp["w6"] = p["w6"].astype(bf16)                     # (400, 784) — unpadded
    kp["b6"] = p["b6"]
    return kp


def vae_forward_ref(x, eps, p):
    """Pure-JAX f32 reference matching the PyTorch forward."""
    h1 = jax.nn.relu(x @ p["w1"] + p["b1"])
    h2 = jax.nn.relu(h1 @ p["w2"] + p["b2"])
    mu = h2 @ p["w31"] + p["b31"]
    log_var = h2 @ p["w32"] + p["b32"]
    z = mu + eps * jnp.exp(log_var / 2)
    h3 = jax.nn.relu(z @ p["w4"] + p["b4"])
    h4 = jax.nn.relu(h3 @ p["w5"] + p["b5"])
    x_reconst = jax.nn.sigmoid(h4 @ p["w6"] + p["b6"])
    return x_reconst, mu, log_var


if __name__ == "__main__":
    key = jax.random.PRNGKey(0)
    k_params, k_x, k_eps = jax.random.split(key, 3)

    params = init_params(k_params)
    kparams = prepare_kernel_params(params)

    # bf16 matmul operands / bf16 reconstruction store (f32 accumulate) vs the
    # pure-f32 reference: bf16-appropriate tolerance.
    RTOL, ATOL = 2e-2, 2e-2

    # B=8: single resident grid step.  B=64: exercises the two-step
    # (megacore-shardable) batch tiling path.
    for B in (8, 64):
        kx_b = jax.random.fold_in(k_x, B)
        keps_b = jax.random.fold_in(k_eps, B)
        # Input "images" in [0, 1], already flattened like x.view(-1, 784)
        x = jax.random.uniform(kx_b, (B, IMAGE_SIZE), jnp.float32)
        # Deterministic stand-in for torch.randn_like(std)
        eps = jax.random.normal(keps_b, (B, Z_DIM), jnp.float32)

        # Kernel-side layouts: bf16 input (the MXU operand dtype anyway); eps
        # placed at lanes 20:40 of a 128-lane block, zeros elsewhere.
        x_bf = x.astype(jnp.bfloat16)
        eps_pad = jnp.pad(eps, ((0, 0), (Z_DIM, MULV_PAD - 2 * Z_DIM)))

        x_reconst, mu, log_var = vae_forward(x_bf, eps_pad, kparams)
        jax.block_until_ready((x_reconst, mu, log_var))

        xr_ref, mu_ref, lv_ref = vae_forward_ref(x, eps, params)
        np.testing.assert_allclose(
            np.asarray(x_reconst.astype(jnp.float32)), np.asarray(xr_ref),
            rtol=RTOL, atol=ATOL)
        np.testing.assert_allclose(np.asarray(mu), np.asarray(mu_ref),
                                   rtol=RTOL, atol=ATOL)
        np.testing.assert_allclose(np.asarray(log_var), np.asarray(lv_ref),
                                   rtol=RTOL, atol=ATOL)

    print("KERNEL_OK")
</pallas_src>

<mosaic_0001>
module attributes {stable_mosaic.version = 11 : i64} {
  func.func @_vae_kernel(%arg0: i32, %arg1: memref<8x784xbf16, #tpu.memory_space<vmem>>, %arg2: memref<8x128xf32, #tpu.memory_space<vmem>>, %arg3: memref<784x400xbf16, #tpu.memory_space<vmem>>, %arg4: memref<1x400xf32, #tpu.memory_space<vmem>>, %arg5: memref<400x200xbf16, #tpu.memory_space<vmem>>, %arg6: memref<1x200xf32, #tpu.memory_space<vmem>>, %arg7: memref<200x128xbf16, #tpu.memory_space<vmem>>, %arg8: memref<1x128xf32, #tpu.memory_space<vmem>>, %arg9: memref<128x200xbf16, #tpu.memory_space<vmem>>, %arg10: memref<1x200xf32, #tpu.memory_space<vmem>>, %arg11: memref<200x400xbf16, #tpu.memory_space<vmem>>, %arg12: memref<1x400xf32, #tpu.memory_space<vmem>>, %arg13: memref<400x784xbf16, #tpu.memory_space<vmem>>, %arg14: memref<1x784xf32, #tpu.memory_space<vmem>>, %arg15: memref<8x784xbf16, #tpu.memory_space<vmem>>, %arg16: memref<8x128xf32, #tpu.memory_space<vmem>>) attributes {dimension_semantics = [#tpu.dimension_semantics<parallel>], iteration_bounds = array<i64: 1>, scalar_prefetch = 0 : i64, scratch_operands = 0 : i64, tpu.core_type = #tpu.core_type<tc>, window_params = [{transform_indices = @transform_0, window_bounds = array<i64: 8, 784>}, {transform_indices = @transform_1, window_bounds = array<i64: 8, 128>}, {pipeline_mode = #tpu.pipeline_mode<synchronous>, transform_indices = @transform_2, window_bounds = array<i64: 784, 400>}, {pipeline_mode = #tpu.pipeline_mode<synchronous>, transform_indices = @transform_3, window_bounds = array<i64: 1, 400>}, {pipeline_mode = #tpu.pipeline_mode<synchronous>, transform_indices = @transform_4, window_bounds = array<i64: 400, 200>}, {pipeline_mode = #tpu.pipeline_mode<synchronous>, transform_indices = @transform_5, window_bounds = array<i64: 1, 200>}, {pipeline_mode = #tpu.pipeline_mode<synchronous>, transform_indices = @transform_6, window_bounds = array<i64: 200, 128>}, {pipeline_mode = #tpu.pipeline_mode<synchronous>, transform_indices = @transform_7, window_bounds = array<i64: 1, 128>}, {pipeline_mode = #tpu.pipeline_mode<synchronous>, transform_indices = @transform_8, window_bounds = array<i64: 128, 200>}, {pipeline_mode = #tpu.pipeline_mode<synchronous>, transform_indices = @transform_9, window_bounds = array<i64: 1, 200>}, {pipeline_mode = #tpu.pipeline_mode<synchronous>, transform_indices = @transform_10, window_bounds = array<i64: 200, 400>}, {pipeline_mode = #tpu.pipeline_mode<synchronous>, transform_indices = @transform_11, window_bounds = array<i64: 1, 400>}, {pipeline_mode = #tpu.pipeline_mode<synchronous>, transform_indices = @transform_12, window_bounds = array<i64: 400, 784>}, {pipeline_mode = #tpu.pipeline_mode<synchronous>, transform_indices = @transform_13, window_bounds = array<i64: 1, 784>}, {transform_indices = @transform_14, window_bounds = array<i64: 8, 784>}, {transform_indices = @transform_15, window_bounds = array<i64: 8, 128>}]} {
    %c0 = arith.constant 0 : index
    %c0_0 = arith.constant 0 : index
    %0 = vector.load %arg1[%c0, %c0_0] : memref<8x784xbf16, #tpu.memory_space<vmem>>, vector<8x784xbf16>
    %c0_1 = arith.constant 0 : index
    %c0_2 = arith.constant 0 : index
    %1 = vector.load %arg3[%c0_1, %c0_2] : memref<784x400xbf16, #tpu.memory_space<vmem>>, vector<784x400xbf16>
    %cst = arith.constant dense<0.000000e+00> : vector<8x400xf32>
    %2 = tpu.matmul %0, %1, %cst {dimension_numbers = #tpu.dot_dimension_numbers<[1], [0], [0], [1], [0, 0, 1, 1], [], []>} : vector<8x784xbf16>, vector<784x400xbf16>, vector<8x400xf32> -> vector<8x400xf32>
    %c0_3 = arith.constant 0 : index
    %c0_4 = arith.constant 0 : index
    %3 = vector.load %arg4[%c0_3, %c0_4] : memref<1x400xf32, #tpu.memory_space<vmem>>, vector<1x400xf32>
    %4 = vector.broadcast %3 : vector<1x400xf32> to vector<8x400xf32>
    %5 = arith.addf %2, %4 : vector<8x400xf32>
    %cst_5 = arith.constant 0.000000e+00 : f32
    %6 = vector.broadcast %cst_5 : f32 to vector<8x400xf32>
    %7 = arith.maximumf %5, %6 : vector<8x400xf32>
    %8 = arith.truncf %7 : vector<8x400xf32> to vector<8x400xbf16>
    %c0_6 = arith.constant 0 : index
    %c0_7 = arith.constant 0 : index
    %9 = vector.load %arg5[%c0_6, %c0_7] : memref<400x200xbf16, #tpu.memory_space<vmem>>, vector<400x200xbf16>
    %cst_8 = arith.constant dense<0.000000e+00> : vector<8x200xf32>
    %10 = tpu.matmul %8, %9, %cst_8 {dimension_numbers = #tpu.dot_dimension_numbers<[1], [0], [0], [1], [0, 0, 1, 1], [], []>} : vector<8x400xbf16>, vector<400x200xbf16>, vector<8x200xf32> -> vector<8x200xf32>
    %c0_9 = arith.constant 0 : index
    %c0_10 = arith.constant 0 : index
    %11 = vector.load %arg6[%c0_9, %c0_10] : memref<1x200xf32, #tpu.memory_space<vmem>>, vector<1x200xf32>
    %12 = vector.broadcast %11 : vector<1x200xf32> to vector<8x200xf32>
    %13 = arith.addf %10, %12 : vector<8x200xf32>
    %cst_11 = arith.constant 0.000000e+00 : f32
    %14 = vector.broadcast %cst_11 : f32 to vector<8x200xf32>
    %15 = arith.maximumf %13, %14 : vector<8x200xf32>
    %16 = arith.truncf %15 : vector<8x200xf32> to vector<8x200xbf16>
    %c0_12 = arith.constant 0 : index
    %c0_13 = arith.constant 0 : index
    %17 = vector.load %arg7[%c0_12, %c0_13] : memref<200x128xbf16, #tpu.memory_space<vmem>>, vector<200x128xbf16>
    %cst_14 = arith.constant dense<0.000000e+00> : vector<8x128xf32>
    %18 = tpu.matmul %16, %17, %cst_14 {dimension_numbers = #tpu.dot_dimension_numbers<[1], [0], [0], [1], [0, 0, 1, 1], [], []>} : vector<8x200xbf16>, vector<200x128xbf16>, vector<8x128xf32> -> vector<8x128xf32>
    %c0_15 = arith.constant 0 : index
    %c0_16 = arith.constant 0 : index
    %19 = vector.load %arg8[%c0_15, %c0_16] : memref<1x128xf32, #tpu.memory_space<vmem>>, vector<1x128xf32>
    %20 = vector.broadcast %19 : vector<1x128xf32> to vector<8x128xf32>
    %21 = arith.addf %18, %20 : vector<8x128xf32>
    %22 = tpu.iota {dimensions = array<i32: 1>} : vector<1x128xi32>
    %c20_i32 = arith.constant 20 : i32
    %23 = vector.broadcast %c20_i32 : i32 to vector<1x128xi32>
    %24 = arith.cmpi slt, %22, %23 : vector<1x128xi32>
    %25 = arith.extui %24 : vector<1x128xi1> to vector<1x128xi32>
    %26 = arith.sitofp %25 : vector<1x128xi32> to vector<1x128xf32>
    %27 = vector.broadcast %26 : vector<1x128xf32> to vector<8x128xf32>
    %28 = arith.mulf %21, %27 : vector<8x128xf32>
    %c0_17 = arith.constant 0 : index
    %c0_18 = arith.constant 0 : index
    %29 = vector.load %arg2[%c0_17, %c0_18] : memref<8x128xf32, #tpu.memory_space<vmem>>, vector<8x128xf32>
    %cst_19 = arith.constant 5.000000e-01 : f32
    %30 = vector.broadcast %cst_19 : f32 to vector<8x128xf32>
    %31 = arith.mulf %21, %30 : vector<8x128xf32>
    %32 = math.exp %31 : vector<8x128xf32>
    %33 = arith.mulf %29, %32 : vector<8x128xf32>
    %34 = arith.addf %28, %33 : vector<8x128xf32>
    %35 = arith.truncf %34 : vector<8x128xf32> to vector<8x128xbf16>
    %c0_20 = arith.constant 0 : index
    %c0_21 = arith.constant 0 : index
    %36 = vector.load %arg9[%c0_20, %c0_21] : memref<128x200xbf16, #tpu.memory_space<vmem>>, vector<128x200xbf16>
    %cst_22 = arith.constant dense<0.000000e+00> : vector<8x200xf32>
    %37 = tpu.matmul %35, %36, %cst_22 {dimension_numbers = #tpu.dot_dimension_numbers<[1], [0], [0], [1], [0, 0, 1, 1], [], []>} : vector<8x128xbf16>, vector<128x200xbf16>, vector<8x200xf32> -> vector<8x200xf32>
    %c0_23 = arith.constant 0 : index
    %c0_24 = arith.constant 0 : index
    %38 = vector.load %arg10[%c0_23, %c0_24] : memref<1x200xf32, #tpu.memory_space<vmem>>, vector<1x200xf32>
    %39 = vector.broadcast %38 : vector<1x200xf32> to vector<8x200xf32>
    %40 = arith.addf %37, %39 : vector<8x200xf32>
    %cst_25 = arith.constant 0.000000e+00 : f32
    %41 = vector.broadcast %cst_25 : f32 to vector<8x200xf32>
    %42 = arith.maximumf %40, %41 : vector<8x200xf32>
    %43 = arith.truncf %42 : vector<8x200xf32> to vector<8x200xbf16>
    %c0_26 = arith.constant 0 : index
    %c0_27 = arith.constant 0 : index
    %44 = vector.load %arg11[%c0_26, %c0_27] : memref<200x400xbf16, #tpu.memory_space<vmem>>, vector<200x400xbf16>
    %cst_28 = arith.constant dense<0.000000e+00> : vector<8x400xf32>
    %45 = tpu.matmul %43, %44, %cst_28 {dimension_numbers = #tpu.dot_dimension_numbers<[1], [0], [0], [1], [0, 0, 1, 1], [], []>} : vector<8x200xbf16>, vector<200x400xbf16>, vector<8x400xf32> -> vector<8x400xf32>
    %c0_29 = arith.constant 0 : index
    %c0_30 = arith.constant 0 : index
    %46 = vector.load %arg12[%c0_29, %c0_30] : memref<1x400xf32, #tpu.memory_space<vmem>>, vector<1x400xf32>
    %47 = vector.broadcast %46 : vector<1x400xf32> to vector<8x400xf32>
    %48 = arith.addf %45, %47 : vector<8x400xf32>
    %cst_31 = arith.constant 0.000000e+00 : f32
    %49 = vector.broadcast %cst_31 : f32 to vector<8x400xf32>
    %50 = arith.maximumf %48, %49 : vector<8x400xf32>
    %51 = arith.truncf %50 : vector<8x400xf32> to vector<8x400xbf16>
    %c0_32 = arith.constant 0 : index
    %c0_33 = arith.constant 0 : index
    %52 = vector.load %arg13[%c0_32, %c0_33] : memref<400x784xbf16, #tpu.memory_space<vmem>>, vector<400x784xbf16>
    %cst_34 = arith.constant dense<0.000000e+00> : vector<8x784xf32>
    %53 = tpu.matmul %51, %52, %cst_34 {dimension_numbers = #tpu.dot_dimension_numbers<[1], [0], [0], [1], [0, 0, 1, 1], [], []>} : vector<8x400xbf16>, vector<400x784xbf16>, vector<8x784xf32> -> vector<8x784xf32>
    %c0_35 = arith.constant 0 : index
    %c0_36 = arith.constant 0 : index
    %54 = vector.load %arg14[%c0_35, %c0_36] : memref<1x784xf32, #tpu.memory_space<vmem>>, vector<1x784xf32>
    %55 = vector.broadcast %54 : vector<1x784xf32> to vector<8x784xf32>
    %56 = arith.addf %53, %55 : vector<8x784xf32>
    %57 = arith.negf %56 : vector<8x784xf32>
    %58 = math.exp %57 : vector<8x784xf32>
    %cst_37 = arith.constant 1.000000e+00 : f32
    %59 = vector.broadcast %cst_37 : f32 to vector<8x784xf32>
    %60 = arith.addf %59, %58 : vector<8x784xf32>
    %61 = arith.divf %59, %60 : vector<8x784xf32>
    %62 = arith.truncf %61 : vector<8x784xf32> to vector<8x784xbf16>
    %c0_38 = arith.constant 0 : index
    %c0_39 = arith.constant 0 : index
    %63 = vector.load %arg15[%c0_38, %c0_39] : memref<8x784xbf16, #tpu.memory_space<vmem>>, vector<8x784xbf16>
    tpu.vector_store %arg15[%c0_38, %c0_39], %62 {strides = array<i32>} : memref<8x784xbf16, #tpu.memory_space<vmem>>, vector<8x784xbf16>,
    %c0_40 = arith.constant 0 : index
    %c0_41 = arith.constant 0 : index
    %64 = vector.load %arg16[%c0_40, %c0_41] : memref<8x128xf32, #tpu.memory_space<vmem>>, vector<8x128xf32>
    tpu.vector_store %arg16[%c0_40, %c0_41], %21 {strides = array<i32>} : memref<8x128xf32, #tpu.memory_space<vmem>>, vector<8x128xf32>,
    return
  }
  func.func @transform_0(%arg0: i32) -> (i32, i32) {
    %c0_i32 = arith.constant 0 : i32
    %c0_i32_0 = arith.constant 0 : i32
    return %arg0, %c0_i32 : i32, i32
  }
  func.func @transform_1(%arg0: i32) -> (i32, i32) {
    %c0_i32 = arith.constant 0 : i32
    %c0_i32_0 = arith.constant 0 : i32
    return %arg0, %c0_i32 : i32, i32
  }
  func.func @transform_2(%arg0: i32) -> (i32, i32) {
    %c0_i32 = arith.constant 0 : i32
    %c0_i32_0 = arith.constant 0 : i32
    %c0_i32_1 = arith.constant 0 : i32
    return %c0_i32, %c0_i32_0 : i32, i32
  }
  func.func @transform_3(%arg0: i32) -> (i32, i32) {
    %c0_i32 = arith.constant 0 : i32
    %c0_i32_0 = arith.constant 0 : i32
    %c0_i32_1 = arith.constant 0 : i32
    return %c0_i32, %c0_i32_0 : i32, i32
  }
  func.func @transform_4(%arg0: i32) -> (i32, i32) {
    %c0_i32 = arith.constant 0 : i32
    %c0_i32_0 = arith.constant 0 : i32
    %c0_i32_1 = arith.constant 0 : i32
    return %c0_i32, %c0_i32_0 : i32, i32
  }
  func.func @transform_5(%arg0: i32) -> (i32, i32) {
    %c0_i32 = arith.constant 0 : i32
    %c0_i32_0 = arith.constant 0 : i32
    %c0_i32_1 = arith.constant 0 : i32
    return %c0_i32, %c0_i32_0 : i32, i32
  }
  func.func @transform_6(%arg0: i32) -> (i32, i32) {
    %c0_i32 = arith.constant 0 : i32
    %c0_i32_0 = arith.constant 0 : i32
    %c0_i32_1 = arith.constant 0 : i32
    return %c0_i32, %c0_i32_0 : i32, i32
  }
  func.func @transform_7(%arg0: i32) -> (i32, i32) {
    %c0_i32 = arith.constant 0 : i32
    %c0_i32_0 = arith.constant 0 : i32
    %c0_i32_1 = arith.constant 0 : i32
    return %c0_i32, %c0_i32_0 : i32, i32
  }
  func.func @transform_8(%arg0: i32) -> (i32, i32) {
    %c0_i32 = arith.constant 0 : i32
    %c0_i32_0 = arith.constant 0 : i32
    %c0_i32_1 = arith.constant 0 : i32
    return %c0_i32, %c0_i32_0 : i32, i32
  }
  func.func @transform_9(%arg0: i32) -> (i32, i32) {
    %c0_i32 = arith.constant 0 : i32
    %c0_i32_0 = arith.constant 0 : i32
    %c0_i32_1 = arith.constant 0 : i32
    return %c0_i32, %c0_i32_0 : i32, i32
  }
  func.func @transform_10(%arg0: i32) -> (i32, i32) {
    %c0_i32 = arith.constant 0 : i32
    %c0_i32_0 = arith.constant 0 : i32
    %c0_i32_1 = arith.constant 0 : i32
    return %c0_i32, %c0_i32_0 : i32, i32
  }
  func.func @transform_11(%arg0: i32) -> (i32, i32) {
    %c0_i32 = arith.constant 0 : i32
    %c0_i32_0 = arith.constant 0 : i32
    %c0_i32_1 = arith.constant 0 : i32
    return %c0_i32, %c0_i32_0 : i32, i32
  }
  func.func @transform_12(%arg0: i32) -> (i32, i32) {
    %c0_i32 = arith.constant 0 : i32
    %c0_i32_0 = arith.constant 0 : i32
    %c0_i32_1 = arith.constant 0 : i32
    return %c0_i32, %c0_i32_0 : i32, i32
  }
  func.func @transform_13(%arg0: i32) -> (i32, i32) {
    %c0_i32 = arith.constant 0 : i32
    %c0_i32_0 = arith.constant 0 : i32
    %c0_i32_1 = arith.constant 0 : i32
    return %c0_i32, %c0_i32_0 : i32, i32
  }
  func.func @transform_14(%arg0: i32) -> (i32, i32) {
    %c0_i32 = arith.constant 0 : i32
    %c0_i32_0 = arith.constant 0 : i32
    return %arg0, %c0_i32 : i32, i32
  }
  func.func @transform_15(%arg0: i32) -> (i32, i32) {
    %c0_i32 = arith.constant 0 : i32
    %c0_i32_0 = arith.constant 0 : i32
    return %arg0, %c0_i32 : i32, i32
  }
}

</mosaic_0001>

<llo_original>
// kernel: vae_forward.1
$region0: #{vae_forward.1}
  #allocation0 [shape = 'u32[]', space=smem, size = 0x4, offset = 0x4, fixed_abs, tag = 'smem constant byte address 0x4 - core index']
  #allocation1 [shape = 'u32[144,128]{1,0:T(1,128)}', space=vmem, size = 0x12000, scoped, tag = 'internal scratch']
  %s0 = inlined_call_operand.vmem [shape: bf16[8,784], index: 0, kind: input, shape index: {}]
  %s1 = inlined_call_operand.vmem [shape: f32[8,128], index: 1, kind: input, shape index: {}]
  %s2 = inlined_call_operand.vmem [shape: bf16[784,400], index: 2, kind: input, shape index: {}]
  %s3 = inlined_call_operand.vmem [shape: f32[1,400], index: 3, kind: input, shape index: {}]
  %s4 = inlined_call_operand.vmem [shape: bf16[400,200], index: 4, kind: input, shape index: {}]
  %s5 = inlined_call_operand.vmem [shape: f32[1,200], index: 5, kind: input, shape index: {}]
  %s6 = inlined_call_operand.vmem [shape: bf16[200,128], index: 6, kind: input, shape index: {}]
  %s7 = inlined_call_operand.vmem [shape: f32[1,128], index: 7, kind: input, shape index: {}]
  %s8 = inlined_call_operand.vmem [shape: bf16[128,200], index: 8, kind: input, shape index: {}]
  %s9 = inlined_call_operand.vmem [shape: f32[1,200], index: 9, kind: input, shape index: {}]
  %s10 = inlined_call_operand.vmem [shape: bf16[200,400], index: 10, kind: input, shape index: {}]
  %s11 = inlined_call_operand.vmem [shape: f32[1,400], index: 11, kind: input, shape index: {}]
  %s12 = inlined_call_operand.vmem [shape: bf16[400,784], index: 12, kind: input, shape index: {}]
  %s13 = inlined_call_operand.vmem [shape: f32[1,784], index: 13, kind: input, shape index: {}]
  %s14 = inlined_call_operand.hbm [shape: bf16[8,784], index: 14, kind: output, shape index: {0}]
  %s15 = inlined_call_operand.vmem [shape: f32[8,128], index: 15, kind: output, shape index: {1}]
  %16 = xla_tuple %s14, %s15
  %s17 = sld [smem:[#allocation0]]
  $region74: #{vae_forward.1} parent=0
    _
  %s19 = ssub.s32 1, %s17
  %s20 = scalar_select 0, %s19, %s17
  $region1: #{vae_forward.1} parent=0
    #allocation2 [shape = 'u8[14336]{0}', space=vmem, size = 0x3800, scoped, tag = 'output window, operand 0, single buffered']
    #allocation3 [shape = 's32[1]{0}', space=sflag, size = 0x4, scoped, tag = 'scoped memory for vae_forward.1']
    %21 = vsyncpa [#allocation3], 0
    // Predicated region
    $region2: #{vae_forward.1} parent=1 // pred_check
      _
    $region3: #{vae_forward.1} parent=1 // pred_check_branch
      %23 = sbr.rel (0) target = $region5
    $region4: #{vae_forward.1} parent=1 // pred_region
      _
    $region5: #{vae_forward.1} parent=1 // pred_fallthru
      _
    // Predicated region
    $region6: #{vae_forward.1} parent=1 // pred_check
      _
    $region7: #{vae_forward.1} parent=1 // pred_check_branch
      %25 = sbr.rel (0) target = $region9
    $region8: #{vae_forward.1} parent=1 // pred_region
      _
    $region9: #{vae_forward.1} parent=1 // pred_fallthru
      _
    // Predicated region
    $region10: #{vae_forward.1} parent=1 // pred_check
      _
    $region11: #{vae_forward.1} parent=1 // pred_check_branch
      %27 = sbr.rel (0) target = $region13
    $region12: #{vae_forward.1} parent=1 // pred_region
      _
    $region13: #{vae_forward.1} parent=1 // pred_fallthru
      _
    // Predicated region
    $region14: #{vae_forward.1} parent=1 // pred_check
      _
    $region15: #{vae_forward.1} parent=1 // pred_check_branch
      %29 = sbr.rel (0) target = $region17
    $region16: #{vae_forward.1} parent=1 // pred_region
      _
    $region17: #{vae_forward.1} parent=1 // pred_fallthru
      _
    // Predicated region
    $region18: #{vae_forward.1} parent=1 // pred_check
      _
    $region19: #{vae_forward.1} parent=1 // pred_check_branch
      %31 = sbr.rel (0) target = $region21
    $region20: #{vae_forward.1} parent=1 // pred_region
      _
    $region21: #{vae_forward.1} parent=1 // pred_fallthru
      _
    // Predicated region
    $region22: #{vae_forward.1} parent=1 // pred_check
      _
    $region23: #{vae_forward.1} parent=1 // pred_check_branch
      %33 = sbr.rel (0) target = $region25
    $region24: #{vae_forward.1} parent=1 // pred_region
      _
    $region25: #{vae_forward.1} parent=1 // pred_fallthru
      _
    // Predicated region
    $region26: #{vae_forward.1} parent=1 // pred_check
      _
    $region27: #{vae_forward.1} parent=1 // pred_check_branch
      %35 = sbr.rel (0) target = $region29
    $region28: #{vae_forward.1} parent=1 // pred_region
      _
    $region29: #{vae_forward.1} parent=1 // pred_fallthru
      _
    // Predicated region
    $region30: #{vae_forward.1} parent=1 // pred_check
      _
    $region31: #{vae_forward.1} parent=1 // pred_check_branch
      %37 = sbr.rel (0) target = $region33
    $region32: #{vae_forward.1} parent=1 // pred_region
      _
    $region33: #{vae_forward.1} parent=1 // pred_fallthru
      _
    // Predicated region
    $region34: #{vae_forward.1} parent=1 // pred_check
      _
    $region35: #{vae_forward.1} parent=1 // pred_check_branch
      %39 = sbr.rel (0) target = $region37
    $region36: #{vae_forward.1} parent=1 // pred_region
      _
    $region37: #{vae_forward.1} parent=1 // pred_fallthru
      _
    // Predicated region
    $region38: #{vae_forward.1} parent=1 // pred_check
      _
    $region39: #{vae_forward.1} parent=1 // pred_check_branch
      %41 = sbr.rel (0) target = $region41
    $region40: #{vae_forward.1} parent=1 // pred_region
      _
    $region41: #{vae_forward.1} parent=1 // pred_fallthru
      _
    // Predicated region
    $region42: #{vae_forward.1} parent=1 // pred_check
      _
    $region43: #{vae_forward.1} parent=1 // pred_check_branch
      %43 = sbr.rel (0) target = $region45
    $region44: #{vae_forward.1} parent=1 // pred_region
      _
    $region45: #{vae_forward.1} parent=1 // pred_fallthru
      _
    // Predicated region
    $region46: #{vae_forward.1} parent=1 // pred_check
      _
    $region47: #{vae_forward.1} parent=1 // pred_check_branch
      %45 = sbr.rel (0) target = $region49
    $region48: #{vae_forward.1} parent=1 // pred_region
      _
    $region49: #{vae_forward.1} parent=1 // pred_fallthru
      _
    // Predicated region
    $region50: #{vae_forward.1} parent=1 // pred_check
      _
    $region51: #{vae_forward.1} parent=1 // pred_check_branch
      %47 = sbr.rel (0) target = $region53
    $region52: #{vae_forward.1} parent=1 // pred_region
      _
    $region53: #{vae_forward.1} parent=1 // pred_fallthru
      _
    // Predicated region
    $region54: #{vae_forward.1} parent=1 // pred_check
      _
    $region55: #{vae_forward.1} parent=1 // pred_check_branch
      %49 = sbr.rel (0) target = $region57
    $region56: #{vae_forward.1} parent=1 // pred_region
      _
    $region57: #{vae_forward.1} parent=1 // pred_fallthru
      _
    %v51 = vld [vmem:[%s0] sm:$0xff]
    %v52 = vld [vmem:[%s0 + $0x8] sm:$0xff]
    %v53 = vld [vmem:[%s0 + $0x10] sm:$0xff]
    %v54 = vld [vmem:[%s0 + $0x18] sm:$0xf]
    %v55 = vld [vmem:[%s2] sm:$0xff]
    %v56 = vld [vmem:[%s2 + $0x8] sm:$0xff]
    %v57 = vld [vmem:[%s2 + $0x10] sm:$0xff]
    %v58 = vld [vmem:[%s2 + $0x18] sm:$0xff]
    %v59 = vld [vmem:[%s2 + $0x20] sm:$0xff]
    %v60 = vld [vmem:[%s2 + $0x28] sm:$0xff]
    %v61 = vld [vmem:[%s2 + $0x30] sm:$0xff]
    %v62 = vld [vmem:[%s2 + $0x38] sm:$0xff]
    %v63 = vld [vmem:[%s2 + $0x40] sm:$0xff]
    %v64 = vld [vmem:[%s2 + $0x48] sm:$0xff]
    %v65 = vld [vmem:[%s2 + $0x50] sm:$0xff]
    %v66 = vld [vmem:[%s2 + $0x58] sm:$0xff]
    %v67 = vld [vmem:[%s2 + $0x60] sm:$0xff]
    %v68 = vld [vmem:[%s2 + $0x68] sm:$0xff]
    %v69 = vld [vmem:[%s2 + $0x70] sm:$0xff]
    %v70 = vld [vmem:[%s2 + $0x78] sm:$0xff]
    %v71 = vld [vmem:[%s2 + $0x80] sm:$0xff]
    %v72 = vld [vmem:[%s2 + $0x88] sm:$0xff]
    %v73 = vld [vmem:[%s2 + $0x90] sm:$0xff]
    %v74 = vld [vmem:[%s2 + $0x98] sm:$0xff]
    %v75 = vld [vmem:[%s2 + $0xa0] sm:$0xff]
    %v76 = vld [vmem:[%s2 + $0xa8] sm:$0xff]
    %v77 = vld [vmem:[%s2 + $0xb0] sm:$0xff]
    %v78 = vld [vmem:[%s2 + $0xb8] sm:$0xff]
    %v79 = vld [vmem:[%s2 + $0xc0] sm:$0xff]
    %v80 = vld [vmem:[%s2 + $0xc8] sm:$0xff]
    %v81 = vld [vmem:[%s2 + $0xd0] sm:$0xff]
    %v82 = vld [vmem:[%s2 + $0xd8] sm:$0xff]
    %v83 = vld [vmem:[%s2 + $0xe0] sm:$0xff]
    %v84 = vld [vmem:[%s2 + $0xe8] sm:$0xff]
    %v85 = vld [vmem:[%s2 + $0xf0] sm:$0xff]
    %v86 = vld [vmem:[%s2 + $0xf8] sm:$0xff]
    %v87 = vld [vmem:[%s2 + $0x100] sm:$0xff]
    %v88 = vld [vmem:[%s2 + $0x108] sm:$0xff]
    %v89 = vld [vmem:[%s2 + $0x110] sm:$0xff]
    %v90 = vld [vmem:[%s2 + $0x118] sm:$0xff]
    %v91 = vld [vmem:[%s2 + $0x120] sm:$0xff]
    %v92 = vld [vmem:[%s2 + $0x128] sm:$0xff]
    %v93 = vld [vmem:[%s2 + $0x130] sm:$0xff]
    %v94 = vld [vmem:[%s2 + $0x138] sm:$0xff]
    %v95 = vld [vmem:[%s2 + $0x140] sm:$0xff]
    %v96 = vld [vmem:[%s2 + $0x148] sm:$0xff]
    %v97 = vld [vmem:[%s2 + $0x150] sm:$0xff]
    %v98 = vld [vmem:[%s2 + $0x158] sm:$0xff]
    %v99 = vld [vmem:[%s2 + $0x160] sm:$0xff]
    %v100 = vld [vmem:[%s2 + $0x168] sm:$0xff]
    %v101 = vld [vmem:[%s2 + $0x170] sm:$0xff]
    %v102 = vld [vmem:[%s2 + $0x178] sm:$0xff]
    %v103 = vld [vmem:[%s2 + $0x180] sm:$0xff]
    %v104 = vld [vmem:[%s2 + $0x188] sm:$0xff]
    %v105 = vld [vmem:[%s2 + $0x190] sm:$0xff]
    %v106 = vld [vmem:[%s2 + $0x198] sm:$0xff]
    %v107 = vld [vmem:[%s2 + $0x1a0] sm:$0xff]
    %v108 = vld [vmem:[%s2 + $0x1a8] sm:$0xff]
    %v109 = vld [vmem:[%s2 + $0x1b0] sm:$0xff]
    %v110 = vld [vmem:[%s2 + $0x1b8] sm:$0xff]
    %v111 = vld [vmem:[%s2 + $0x1c0] sm:$0xff]
    %v112 = vld [vmem:[%s2 + $0x1c8] sm:$0xff]
    %v113 = vld [vmem:[%s2 + $0x1d0] sm:$0xff]
    %v114 = vld [vmem:[%s2 + $0x1d8] sm:$0xff]
    %v115 = vld [vmem:[%s2 + $0x1e0] sm:$0xff]
    %v116 = vld [vmem:[%s2 + $0x1e8] sm:$0xff]
    %v117 = vld [vmem:[%s2 + $0x1f0] sm:$0xff]
    %v118 = vld [vmem:[%s2 + $0x1f8] sm:$0xff]
    %v119 = vld [vmem:[%s2 + $0x200] sm:$0xff]
    %v120 = vld [vmem:[%s2 + $0x208] sm:$0xff]
    %v121 = vld [vmem:[%s2 + $0x210] sm:$0xff]
    %v122 = vld [vmem:[%s2 + $0x218] sm:$0xff]
    %v123 = vld [vmem:[%s2 + $0x220] sm:$0xff]
    %v124 = vld [vmem:[%s2 + $0x228] sm:$0xff]
    %v125 = vld [vmem:[%s2 + $0x230] sm:$0xff]
    %v126 = vld [vmem:[%s2 + $0x238] sm:$0xff]
    %v127 = vld [vmem:[%s2 + $0x240] sm:$0xff]
    %v128 = vld [vmem:[%s2 + $0x248] sm:$0xff]
    %v129 = vld [vmem:[%s2 + $0x250] sm:$0xff]
    %v130 = vld [vmem:[%s2 + $0x258] sm:$0xff]
    %v131 = vld [vmem:[%s2 + $0x260] sm:$0xff]
    %v132 = vld [vmem:[%s2 + $0x268] sm:$0xff]
    %v133 = vld [vmem:[%s2 + $0x270] sm:$0xff]
    %v134 = vld [vmem:[%s2 + $0x278] sm:$0xff]
    %v135 = vld [vmem:[%s2 + $0x280] sm:$0xff]
    %v136 = vld [vmem:[%s2 + $0x288] sm:$0xff]
    %v137 = vld [vmem:[%s2 + $0x290] sm:$0xff]
    %v138 = vld [vmem:[%s2 + $0x298] sm:$0xff]
    %v139 = vld [vmem:[%s2 + $0x2a0] sm:$0xff]
    %v140 = vld [vmem:[%s2 + $0x2a8] sm:$0xff]
    %v141 = vld [vmem:[%s2 + $0x2b0] sm:$0xff]
    %v142 = vld [vmem:[%s2 + $0x2b8] sm:$0xff]
    %v143 = vld [vmem:[%s2 + $0x2c0] sm:$0xff]
    %v144 = vld [vmem:[%s2 + $0x2c8] sm:$0xff]
    %v145 = vld [vmem:[%s2 + $0x2d0] sm:$0xff]
    %v146 = vld [vmem:[%s2 + $0x2d8] sm:$0xff]
    %v147 = vld [vmem:[%s2 + $0x2e0] sm:$0xff]
    %v148 = vld [vmem:[%s2 + $0x2e8] sm:$0xff]
    %v149 = vld [vmem:[%s2 + $0x2f0] sm:$0xff]
    %v150 = vld [vmem:[%s2 + $0x2f8] sm:$0xff]
    %v151 = vld [vmem:[%s2 + $0x300] sm:$0xff]
    %v152 = vld [vmem:[%s2 + $0x308] sm:$0xff]
    %v153 = vld [vmem:[%s2 + $0x310] sm:$0xff]
    %v154 = vld [vmem:[%s2 + $0x318] sm:$0xff]
    %v155 = vld [vmem:[%s2 + $0x320] sm:$0xff]
    %v156 = vld [vmem:[%s2 + $0x328] sm:$0xff]
    %v157 = vld [vmem:[%s2 + $0x330] sm:$0xff]
    %v158 = vld [vmem:[%s2 + $0x338] sm:$0xff]
    %v159 = vld [vmem:[%s2 + $0x340] sm:$0xff]
    %v160 = vld [vmem:[%s2 + $0x348] sm:$0xff]
    %v161 = vld [vmem:[%s2 + $0x350] sm:$0xff]
    %v162 = vld [vmem:[%s2 + $0x358] sm:$0xff]
    %v163 = vld [vmem:[%s2 + $0x360] sm:$0xff]
    %v164 = vld [vmem:[%s2 + $0x368] sm:$0xff]
    %v165 = vld [vmem:[%s2 + $0x370] sm:$0xff]
    %v166 = vld [vmem:[%s2 + $0x378] sm:$0xff]
    %v167 = vld [vmem:[%s2 + $0x380] sm:$0xff]
    %v168 = vld [vmem:[%s2 + $0x388] sm:$0xff]
    %v169 = vld [vmem:[%s2 + $0x390] sm:$0xff]
    %v170 = vld [vmem:[%s2 + $0x398] sm:$0xff]
    %v171 = vld [vmem:[%s2 + $0x3a0] sm:$0xff]
    %v172 = vld [vmem:[%s2 + $0x3a8] sm:$0xff]
    %v173 = vld [vmem:[%s2 + $0x3b0] sm:$0xff]
    %v174 = vld [vmem:[%s2 + $0x3b8] sm:$0xff]
    %v175 = vld [vmem:[%s2 + $0x3c0] sm:$0xff]
    %v176 = vld [vmem:[%s2 + $0x3c8] sm:$0xff]
    %v177 = vld [vmem:[%s2 + $0x3d0] sm:$0xff]
    %v178 = vld [vmem:[%s2 + $0x3d8] sm:$0xff]
    %v179 = vld [vmem:[%s2 + $0x3e0] sm:$0xff]
    %v180 = vld [vmem:[%s2 + $0x3e8] sm:$0xff]
    %v181 = vld [vmem:[%s2 + $0x3f0] sm:$0xff]
    %v182 = vld [vmem:[%s2 + $0x3f8] sm:$0xff]
    %v183 = vld [vmem:[%s2 + $0x400] sm:$0xff]
    %v184 = vld [vmem:[%s2 + $0x408] sm:$0xff]
    %v185 = vld [vmem:[%s2 + $0x410] sm:$0xff]
    %v186 = vld [vmem:[%s2 + $0x418] sm:$0xff]
    %v187 = vld [vmem:[%s2 + $0x420] sm:$0xff]
    %v188 = vld [vmem:[%s2 + $0x428] sm:$0xff]
    %v189 = vld [vmem:[%s2 + $0x430] sm:$0xff]
    %v190 = vld [vmem:[%s2 + $0x438] sm:$0xff]
    %v191 = vld [vmem:[%s2 + $0x440] sm:$0xff]
    %v192 = vld [vmem:[%s2 + $0x448] sm:$0xff]
    %v193 = vld [vmem:[%s2 + $0x450] sm:$0xff]
    %v194 = vld [vmem:[%s2 + $0x458] sm:$0xff]
    %v195 = vld [vmem:[%s2 + $0x460] sm:$0xff]
    %v196 = vld [vmem:[%s2 + $0x468] sm:$0xff]
    %v197 = vld [vmem:[%s2 + $0x470] sm:$0xff]
    %v198 = vld [vmem:[%s2 + $0x478] sm:$0xff]
    %v199 = vld [vmem:[%s2 + $0x480] sm:$0xff]
    %v200 = vld [vmem:[%s2 + $0x488] sm:$0xff]
    %v201 = vld [vmem:[%s2 + $0x490] sm:$0xff]
    %v202 = vld [vmem:[%s2 + $0x498] sm:$0xff]
    %v203 = vld [vmem:[%s2 + $0x4a0] sm:$0xff]
    %v204 = vld [vmem:[%s2 + $0x4a8] sm:$0xff]
    %v205 = vld [vmem:[%s2 + $0x4b0] sm:$0xff]
    %v206 = vld [vmem:[%s2 + $0x4b8] sm:$0xff]
    %v207 = vld [vmem:[%s2 + $0x4c0] sm:$0xff]
    %v208 = vld [vmem:[%s2 + $0x4c8] sm:$0xff]
    %v209 = vld [vmem:[%s2 + $0x4d0] sm:$0xff]
    %v210 = vld [vmem:[%s2 + $0x4d8] sm:$0xff]
    %v211 = vld [vmem:[%s2 + $0x4e0] sm:$0xff]
    %v212 = vld [vmem:[%s2 + $0x4e8] sm:$0xff]
    %v213 = vld [vmem:[%s2 + $0x4f0] sm:$0xff]
    %v214 = vld [vmem:[%s2 + $0x4f8] sm:$0xff]
    %v215 = vld [vmem:[%s2 + $0x500] sm:$0xff]
    %v216 = vld [vmem:[%s2 + $0x508] sm:$0xff]
    %v217 = vld [vmem:[%s2 + $0x510] sm:$0xff]
    %v218 = vld [vmem:[%s2 + $0x518] sm:$0xff]
    %v219 = vld [vmem:[%s2 + $0x520] sm:$0xff]
    %v220 = vld [vmem:[%s2 + $0x528] sm:$0xff]
    %v221 = vld [vmem:[%s2 + $0x530] sm:$0xff]
    %v222 = vld [vmem:[%s2 + $0x538] sm:$0xff]
    %v223 = vld [vmem:[%s2 + $0x540] sm:$0xff]
    %v224 = vld [vmem:[%s2 + $0x548] sm:$0xff]
    %v225 = vld [vmem:[%s2 + $0x550] sm:$0xff]
    %v226 = vld [vmem:[%s2 + $0x558] sm:$0xff]
    %v227 = vld [vmem:[%s2 + $0x560] sm:$0xff]
    %v228 = vld [vmem:[%s2 + $0x568] sm:$0xff]
    %v229 = vld [vmem:[%s2 + $0x570] sm:$0xff]
    %v230 = vld [vmem:[%s2 + $0x578] sm:$0xff]
    %v231 = vld [vmem:[%s2 + $0x580] sm:$0xff]
    %v232 = vld [vmem:[%s2 + $0x588] sm:$0xff]
    %v233 = vld [vmem:[%s2 + $0x590] sm:$0xff]
    %v234 = vld [vmem:[%s2 + $0x598] sm:$0xff]
    %v235 = vld [vmem:[%s2 + $0x5a0] sm:$0xff]
    %v236 = vld [vmem:[%s2 + $0x5a8] sm:$0xff]
    %v237 = vld [vmem:[%s2 + $0x5b0] sm:$0xff]
    %v238 = vld [vmem:[%s2 + $0x5b8] sm:$0xff]
    %v239 = vld [vmem:[%s2 + $0x5c0] sm:$0xff]
    %v240 = vld [vmem:[%s2 + $0x5c8] sm:$0xff]
    %v241 = vld [vmem:[%s2 + $0x5d0] sm:$0xff]
    %v242 = vld [vmem:[%s2 + $0x5d8] sm:$0xff]
    %v243 = vld [vmem:[%s2 + $0x5e0] sm:$0xff]
    %v244 = vld [vmem:[%s2 + $0x5e8] sm:$0xff]
    %v245 = vld [vmem:[%s2 + $0x5f0] sm:$0xff]
    %v246 = vld [vmem:[%s2 + $0x5f8] sm:$0xff]
    %v247 = vld [vmem:[%s2 + $0x600] sm:$0xff]
    %v248 = vld [vmem:[%s2 + $0x608] sm:$0xff]
    %v249 = vld [vmem:[%s2 + $0x610] sm:$0xff]
    %v250 = vld [vmem:[%s2 + $0x618] sm:$0xff]
    %v251 = vld [vmem:[%s3] sm:$0xf]
    %v253 = vlaneseq
    %v254 = vshrl.u32 %v253, 7
    %v255 = vsub.s32 0, %v254
    %v256 = vrot.slane %v251, %v255
    %v257 = vlaneseq
    %v258 = vshrl.u32 %v257, 7
    %v259 = vsub.s32 1, %v258
    %v260 = vrot.slane %v251, %v259
    %v261 = vlaneseq
    %v262 = vshrl.u32 %v261, 7
    %v263 = vsub.s32 2, %v262
    %v264 = vrot.slane %v251, %v263
    %v265 = vlaneseq
    %v266 = vshrl.u32 %v265, 7
    %v267 = vsub.s32 3, %v266
    %v268 = vrot.slane %v251, %v267
    %v277 = vunpack.c.l.b16 %v51
    %v278 = vunpack.c.h.b16 %v51
    %v279 = vunpack.c.l.b16 %v52
    %v280 = vunpack.c.h.b16 %v52
    %v281 = vunpack.c.l.b16 %v53
    %v282 = vunpack.c.h.b16 %v53
    %v283 = vunpack.c.l.b16 %v54
    %v284 = vpack.c.b16 %v277, %v277
    %v285 = vpack.c.b16 %v278, %v278
    %v286 = vpack.c.b16 %v279, %v279
    %v287 = vpack.c.b16 %v280, %v280
    %v288 = vpack.c.b16 %v281, %v281
    %v289 = vpack.c.b16 %v282, %v282
    %v290 = vpack.c.b16 %v283, %v283
    %v493 = vunpack.c.l.b16 %v55
    %v494 = vunpack.c.h.b16 %v55
    %v495 = vunpack.c.l.b16 %v56
    %v496 = vunpack.c.h.b16 %v56
    %v497 = vunpack.c.l.b16 %v57
    %v498 = vunpack.c.h.b16 %v57
    %v499 = vunpack.c.l.b16 %v58
    %v500 = vunpack.c.h.b16 %v58
    %v501 = vunpack.c.l.b16 %v59
    %v502 = vunpack.c.h.b16 %v59
    %v503 = vunpack.c.l.b16 %v60
    %v504 = vunpack.c.h.b16 %v60
    %v505 = vunpack.c.l.b16 %v61
    %v506 = vunpack.c.h.b16 %v61
    %v507 = vunpack.c.l.b16 %v62
    %v508 = vunpack.c.h.b16 %v62
    %v509 = vunpack.c.l.b16 %v63
    %v510 = vunpack.c.h.b16 %v63
    %v511 = vunpack.c.l.b16 %v64
    %v512 = vunpack.c.h.b16 %v64
    %v513 = vunpack.c.l.b16 %v65
    %v514 = vunpack.c.h.b16 %v65
    %v515 = vunpack.c.l.b16 %v66
    %v516 = vunpack.c.h.b16 %v66
    %v517 = vunpack.c.l.b16 %v67
    %v518 = vunpack.c.h.b16 %v67
    %v519 = vunpack.c.l.b16 %v68
    %v520 = vunpack.c.h.b16 %v68
    %v521 = vunpack.c.l.b16 %v69
    %v522 = vunpack.c.h.b16 %v69
    %v523 = vunpack.c.l.b16 %v70
    %v524 = vunpack.c.h.b16 %v70
    %v525 = vunpack.c.l.b16 %v71
    %v526 = vunpack.c.h.b16 %v71
    %v527 = vunpack.c.l.b16 %v72
    %v528 = vunpack.c.h.b16 %v72
    %v529 = vunpack.c.l.b16 %v73
    %v530 = vunpack.c.h.b16 %v73
    %v531 = vunpack.c.l.b16 %v74
    %v532 = vunpack.c.h.b16 %v74
    %v533 = vunpack.c.l.b16 %v75
    %v534 = vunpack.c.h.b16 %v75
    %v535 = vunpack.c.l.b16 %v76
    %v536 = vunpack.c.h.b16 %v76
    %v537 = vunpack.c.l.b16 %v77
    %v538 = vunpack.c.h.b16 %v77
    %v539 = vunpack.c.l.b16 %v78
    %v540 = vunpack.c.h.b16 %v78
    %v541 = vunpack.c.l.b16 %v79
    %v542 = vunpack.c.h.b16 %v79
    %v543 = vunpack.c.l.b16 %v80
    %v544 = vunpack.c.h.b16 %v80
    %v545 = vunpack.c.l.b16 %v81
    %v546 = vunpack.c.h.b16 %v81
    %v547 = vunpack.c.l.b16 %v82
    %v548 = vunpack.c.h.b16 %v82
    %v549 = vunpack.c.l.b16 %v83
    %v550 = vunpack.c.h.b16 %v83
    %v551 = vunpack.c.l.b16 %v84
    %v552 = vunpack.c.h.b16 %v84
    %v553 = vunpack.c.l.b16 %v85
    %v554 = vunpack.c.h.b16 %v85
    %v555 = vunpack.c.l.b16 %v86
    %v556 = vunpack.c.h.b16 %v86
    %v557 = vunpack.c.l.b16 %v87
    %v558 = vunpack.c.h.b16 %v87
    %v559 = vunpack.c.l.b16 %v88
    %v560 = vunpack.c.h.b16 %v88
    %v561 = vunpack.c.l.b16 %v89
    %v562 = vunpack.c.h.b16 %v89
    %v563 = vunpack.c.l.b16 %v90
    %v564 = vunpack.c.h.b16 %v90
    %v565 = vunpack.c.l.b16 %v91
    %v566 = vunpack.c.h.b16 %v91
    %v567 = vunpack.c.l.b16 %v92
    %v568 = vunpack.c.h.b16 %v92
    %v569 = vunpack.c.l.b16 %v93
    %v570 = vunpack.c.h.b16 %v93
    %v571 = vunpack.c.l.b16 %v94
    %v572 = vunpack.c.h.b16 %v94
    %v573 = vunpack.c.l.b16 %v95
    %v574 = vunpack.c.h.b16 %v95
    %v575 = vunpack.c.l.b16 %v96
    %v576 = vunpack.c.h.b16 %v96
    %v577 = vunpack.c.l.b16 %v97
    %v578 = vunpack.c.h.b16 %v97
    %v579 = vunpack.c.l.b16 %v98
    %v580 = vunpack.c.h.b16 %v98
    %v581 = vunpack.c.l.b16 %v99
    %v582 = vunpack.c.h.b16 %v99
    %v583 = vunpack.c.l.b16 %v100
    %v584 = vunpack.c.h.b16 %v100
    %v585 = vunpack.c.l.b16 %v101
    %v586 = vunpack.c.h.b16 %v101
    %v587 = vunpack.c.l.b16 %v102
    %v588 = vunpack.c.h.b16 %v102
    %v589 = vunpack.c.l.b16 %v103
    %v590 = vunpack.c.h.b16 %v103
    %v591 = vunpack.c.l.b16 %v104
    %v592 = vunpack.c.h.b16 %v104
    %v593 = vunpack.c.l.b16 %v105
    %v594 = vunpack.c.h.b16 %v105
    %v595 = vunpack.c.l.b16 %v106
    %v596 = vunpack.c.h.b16 %v106
    %v597 = vunpack.c.l.b16 %v107
    %v598 = vunpack.c.h.b16 %v107
    %v599 = vunpack.c.l.b16 %v108
    %v600 = vunpack.c.h.b16 %v108
    %v601 = vunpack.c.l.b16 %v109
    %v602 = vunpack.c.h.b16 %v109
    %v603 = vunpack.c.l.b16 %v110
    %v604 = vunpack.c.h.b16 %v110
    %v605 = vunpack.c.l.b16 %v111
    %v606 = vunpack.c.h.b16 %v111
    %v607 = vunpack.c.l.b16 %v112
    %v608 = vunpack.c.h.b16 %v112
    %v609 = vunpack.c.l.b16 %v113
    %v610 = vunpack.c.h.b16 %v113
    %v611 = vunpack.c.l.b16 %v114
    %v612 = vunpack.c.h.b16 %v114
    %v613 = vunpack.c.l.b16 %v115
    %v614 = vunpack.c.h.b16 %v115
    %v615 = vunpack.c.l.b16 %v116
    %v616 = vunpack.c.h.b16 %v116
    %v617 = vunpack.c.l.b16 %v117
    %v618 = vunpack.c.h.b16 %v117
    %v619 = vunpack.c.l.b16 %v118
    %v620 = vunpack.c.h.b16 %v118
    %v621 = vunpack.c.l.b16 %v119
    %v622 = vunpack.c.h.b16 %v119
    %v623 = vunpack.c.l.b16 %v120
    %v624 = vunpack.c.h.b16 %v120
    %v625 = vunpack.c.l.b16 %v121
    %v626 = vunpack.c.h.b16 %v121
    %v627 = vunpack.c.l.b16 %v122
    %v628 = vunpack.c.h.b16 %v122
    %v629 = vunpack.c.l.b16 %v123
    %v630 = vunpack.c.h.b16 %v123
    %v631 = vunpack.c.l.b16 %v124
    %v632 = vunpack.c.h.b16 %v124
    %v633 = vunpack.c.l.b16 %v125
    %v634 = vunpack.c.h.b16 %v125
    %v635 = vunpack.c.l.b16 %v126
    %v636 = vunpack.c.h.b16 %v126
    %v637 = vunpack.c.l.b16 %v127
    %v638 = vunpack.c.h.b16 %v127
    %v639 = vunpack.c.l.b16 %v128
    %v640 = vunpack.c.h.b16 %v128
    %v641 = vunpack.c.l.b16 %v129
    %v642 = vunpack.c.h.b16 %v129
    %v643 = vunpack.c.l.b16 %v130
    %v644 = vunpack.c.h.b16 %v130
    %v645 = vunpack.c.l.b16 %v131
    %v646 = vunpack.c.h.b16 %v131
    %v647 = vunpack.c.l.b16 %v132
    %v648 = vunpack.c.h.b16 %v132
    %v649 = vunpack.c.l.b16 %v133
    %v650 = vunpack.c.h.b16 %v133
    %v651 = vunpack.c.l.b16 %v134
    %v652 = vunpack.c.h.b16 %v134
    %v653 = vunpack.c.l.b16 %v135
    %v654 = vunpack.c.h.b16 %v135
    %v655 = vunpack.c.l.b16 %v136
    %v656 = vunpack.c.h.b16 %v136
    %v657 = vunpack.c.l.b16 %v137
    %v658 = vunpack.c.h.b16 %v137
    %v659 = vunpack.c.l.b16 %v138
    %v660 = vunpack.c.h.b16 %v138
    %v661 = vunpack.c.l.b16 %v139
    %v662 = vunpack.c.h.b16 %v139
    %v663 = vunpack.c.l.b16 %v140
    %v664 = vunpack.c.h.b16 %v140
    %v665 = vunpack.c.l.b16 %v141
    %v666 = vunpack.c.h.b16 %v141
    %v667 = vunpack.c.l.b16 %v142
    %v668 = vunpack.c.h.b16 %v142
    %v669 = vunpack.c.l.b16 %v143
    %v670 = vunpack.c.h.b16 %v143
    %v671 = vunpack.c.l.b16 %v144
    %v672 = vunpack.c.h.b16 %v144
    %v673 = vunpack.c.l.b16 %v145
    %v674 = vunpack.c.h.b16 %v145
    %v675 = vunpack.c.l.b16 %v146
    %v676 = vunpack.c.h.b16 %v146
    %v677 = vunpack.c.l.b16 %v147
    %v678 = vunpack.c.h.b16 %v147
    %v679 = vunpack.c.l.b16 %v148
    %v680 = vunpack.c.h.b16 %v148
    %v681 = vunpack.c.l.b16 %v149
    %v682 = vunpack.c.h.b16 %v149
    %v683 = vunpack.c.l.b16 %v150
    %v684 = vunpack.c.h.b16 %v150
    %v685 = vunpack.c.l.b16 %v151
    %v686 = vunpack.c.h.b16 %v151
    %v687 = vunpack.c.l.b16 %v152
    %v688 = vunpack.c.h.b16 %v152
    %v689 = vunpack.c.l.b16 %v153
    %v690 = vunpack.c.h.b16 %v153
    %v691 = vunpack.c.l.b16 %v154
    %v692 = vunpack.c.h.b16 %v154
    %v693 = vunpack.c.l.b16 %v155
    %v694 = vunpack.c.h.b16 %v155
    %v695 = vunpack.c.l.b16 %v156
    %v696 = vunpack.c.h.b16 %v156
    %v697 = vunpack.c.l.b16 %v157
    %v698 = vunpack.c.h.b16 %v157
    %v699 = vunpack.c.l.b16 %v158
    %v700 = vunpack.c.h.b16 %v158
    %v701 = vunpack.c.l.b16 %v159
    %v702 = vunpack.c.h.b16 %v159
    %v703 = vunpack.c.l.b16 %v160
    %v704 = vunpack.c.h.b16 %v160
    %v705 = vunpack.c.l.b16 %v161
    %v706 = vunpack.c.h.b16 %v161
    %v707 = vunpack.c.l.b16 %v162
    %v708 = vunpack.c.h.b16 %v162
    %v709 = vunpack.c.l.b16 %v163
    %v710 = vunpack.c.h.b16 %v163
    %v711 = vunpack.c.l.b16 %v164
    %v712 = vunpack.c.h.b16 %v164
    %v713 = vunpack.c.l.b16 %v165
    %v714 = vunpack.c.h.b16 %v165
    %v715 = vunpack.c.l.b16 %v166
    %v716 = vunpack.c.h.b16 %v166
    %v717 = vunpack.c.l.b16 %v167
    %v718 = vunpack.c.h.b16 %v167
    %v719 = vunpack.c.l.b16 %v168
    %v720 = vunpack.c.h.b16 %v168
    %v721 = vunpack.c.l.b16 %v169
    %v722 = vunpack.c.h.b16 %v169
    %v723 = vunpack.c.l.b16 %v170
    %v724 = vunpack.c.h.b16 %v170
    %v725 = vunpack.c.l.b16 %v171
    %v726 = vunpack.c.h.b16 %v171
    %v727 = vunpack.c.l.b16 %v172
    %v728 = vunpack.c.h.b16 %v172
    %v729 = vunpack.c.l.b16 %v173
    %v730 = vunpack.c.h.b16 %v173
    %v731 = vunpack.c.l.b16 %v174
    %v732 = vunpack.c.h.b16 %v174
    %v733 = vunpack.c.l.b16 %v175
    %v734 = vunpack.c.h.b16 %v175
    %v735 = vunpack.c.l.b16 %v176
    %v736 = vunpack.c.h.b16 %v176
    %v737 = vunpack.c.l.b16 %v177
    %v738 = vunpack.c.h.b16 %v177
    %v739 = vunpack.c.l.b16 %v178
    %v740 = vunpack.c.h.b16 %v178
    %v741 = vunpack.c.l.b16 %v179
    %v742 = vunpack.c.h.b16 %v179
    %v743 = vunpack.c.l.b16 %v180
    %v744 = vunpack.c.h.b16 %v180
    %v745 = vunpack.c.l.b16 %v181
    %v746 = vunpack.c.h.b16 %v181
    %v747 = vunpack.c.l.b16 %v182
    %v748 = vunpack.c.h.b16 %v182
    %v749 = vunpack.c.l.b16 %v183
    %v750 = vunpack.c.h.b16 %v183
    %v751 = vunpack.c.l.b16 %v184
    %v752 = vunpack.c.h.b16 %v184
    %v753 = vunpack.c.l.b16 %v185
    %v754 = vunpack.c.h.b16 %v185
    %v755 = vunpack.c.l.b16 %v186
    %v756 = vunpack.c.h.b16 %v186
    %v757 = vunpack.c.l.b16 %v187
    %v758 = vunpack.c.h.b16 %v187
    %v759 = vunpack.c.l.b16 %v188
    %v760 = vunpack.c.h.b16 %v188
    %v761 = vunpack.c.l.b16 %v189
    %v762 = vunpack.c.h.b16 %v189
    %v763 = vunpack.c.l.b16 %v190
    %v764 = vunpack.c.h.b16 %v190
    %v765 = vunpack.c.l.b16 %v191
    %v766 = vunpack.c.h.b16 %v191
    %v767 = vunpack.c.l.b16 %v192
    %v768 = vunpack.c.h.b16 %v192
    %v769 = vunpack.c.l.b16 %v193
    %v770 = vunpack.c.h.b16 %v193
    %v771 = vunpack.c.l.b16 %v194
    %v772 = vunpack.c.h.b16 %v194
    %v773 = vunpack.c.l.b16 %v195
    %v774 = vunpack.c.h.b16 %v195
    %v775 = vunpack.c.l.b16 %v196
    %v776 = vunpack.c.h.b16 %v196
    %v777 = vunpack.c.l.b16 %v197
    %v778 = vunpack.c.h.b16 %v197
    %v779 = vunpack.c.l.b16 %v198
    %v780 = vunpack.c.h.b16 %v198
    %v781 = vunpack.c.l.b16 %v199
    %v782 = vunpack.c.h.b16 %v199
    %v783 = vunpack.c.l.b16 %v200
    %v784 = vunpack.c.h.b16 %v200
    %v785 = vunpack.c.l.b16 %v201
    %v786 = vunpack.c.h.b16 %v201
    %v787 = vunpack.c.l.b16 %v202
    %v788 = vunpack.c.h.b16 %v202
    %v789 = vunpack.c.l.b16 %v203
    %v790 = vunpack.c.h.b16 %v203
    %v791 = vunpack.c.l.b16 %v204
    %v792 = vunpack.c.h.b16 %v204
    %v793 = vunpack.c.l.b16 %v205
    %v794 = vunpack.c.h.b16 %v205
    %v795 = vunpack.c.l.b16 %v206
    %v796 = vunpack.c.h.b16 %v206
    %v797 = vunpack.c.l.b16 %v207
    %v798 = vunpack.c.h.b16 %v207
    %v799 = vunpack.c.l.b16 %v208
    %v800 = vunpack.c.h.b16 %v208
    %v801 = vunpack.c.l.b16 %v209
    %v802 = vunpack.c.h.b16 %v209
    %v803 = vunpack.c.l.b16 %v210
    %v804 = vunpack.c.h.b16 %v210
    %v805 = vunpack.c.l.b16 %v211
    %v806 = vunpack.c.h.b16 %v211
    %v807 = vunpack.c.l.b16 %v212
    %v808 = vunpack.c.h.b16 %v212
    %v809 = vunpack.c.l.b16 %v213
    %v810 = vunpack.c.h.b16 %v213
    %v811 = vunpack.c.l.b16 %v214
    %v812 = vunpack.c.h.b16 %v214
    %v813 = vunpack.c.l.b16 %v215
    %v814 = vunpack.c.h.b16 %v215
    %v815 = vunpack.c.l.b16 %v216
    %v816 = vunpack.c.h.b16 %v216
    %v817 = vunpack.c.l.b16 %v217
    %v818 = vunpack.c.h.b16 %v217
    %v819 = vunpack.c.l.b16 %v218
    %v820 = vunpack.c.h.b16 %v218
    %v821 = vunpack.c.l.b16 %v219
    %v822 = vunpack.c.h.b16 %v219
    %v823 = vunpack.c.l.b16 %v220
    %v824 = vunpack.c.h.b16 %v220
    %v825 = vunpack.c.l.b16 %v221
    %v826 = vunpack.c.h.b16 %v221
    %v827 = vunpack.c.l.b16 %v222
    %v828 = vunpack.c.h.b16 %v222
    %v829 = vunpack.c.l.b16 %v223
    %v830 = vunpack.c.h.b16 %v223
    %v831 = vunpack.c.l.b16 %v224
    %v832 = vunpack.c.h.b16 %v224
    %v833 = vunpack.c.l.b16 %v225
    %v834 = vunpack.c.h.b16 %v225
    %v835 = vunpack.c.l.b16 %v226
    %v836 = vunpack.c.h.b16 %v226
    %v837 = vunpack.c.l.b16 %v227
    %v838 = vunpack.c.h.b16 %v227
    %v839 = vunpack.c.l.b16 %v228
    %v840 = vunpack.c.h.b16 %v228
    %v841 = vunpack.c.l.b16 %v229
    %v842 = vunpack.c.h.b16 %v229
    %v843 = vunpack.c.l.b16 %v230
    %v844 = vunpack.c.h.b16 %v230
    %v845 = vunpack.c.l.b16 %v231
    %v846 = vunpack.c.h.b16 %v231
    %v847 = vunpack.c.l.b16 %v232
    %v848 = vunpack.c.h.b16 %v232
    %v849 = vunpack.c.l.b16 %v233
    %v850 = vunpack.c.h.b16 %v233
    %v851 = vunpack.c.l.b16 %v234
    %v852 = vunpack.c.h.b16 %v234
    %v853 = vunpack.c.l.b16 %v235
    %v854 = vunpack.c.h.b16 %v235
    %v855 = vunpack.c.l.b16 %v236
    %v856 = vunpack.c.h.b16 %v236
    %v857 = vunpack.c.l.b16 %v237
    %v858 = vunpack.c.h.b16 %v237
    %v859 = vunpack.c.l.b16 %v238
    %v860 = vunpack.c.h.b16 %v238
    %v861 = vunpack.c.l.b16 %v239
    %v862 = vunpack.c.h.b16 %v239
    %v863 = vunpack.c.l.b16 %v240
    %v864 = vunpack.c.h.b16 %v240
    %v865 = vunpack.c.l.b16 %v241
    %v866 = vunpack.c.h.b16 %v241
    %v867 = vunpack.c.l.b16 %v242
    %v868 = vunpack.c.h.b16 %v242
    %v869 = vunpack.c.l.b16 %v243
    %v870 = vunpack.c.h.b16 %v243
    %v871 = vunpack.c.l.b16 %v244
    %v872 = vunpack.c.h.b16 %v244
    %v873 = vunpack.c.l.b16 %v245
    %v874 = vunpack.c.h.b16 %v245
    %v875 = vunpack.c.l.b16 %v246
    %v876 = vunpack.c.h.b16 %v246
    %v877 = vunpack.c.l.b16 %v247
    %v878 = vunpack.c.h.b16 %v247
    %v879 = vunpack.c.l.b16 %v248
    %v880 = vunpack.c.h.b16 %v248
    %v881 = vunpack.c.l.b16 %v249
    %v882 = vunpack.c.h.b16 %v249
    %v883 = vunpack.c.l.b16 %v250
    %v884 = vunpack.c.h.b16 %v250
    %v885 = vpack.c.b16 %v497, %v493
    %v886 = vpack.c.b16 %v498, %v494
    %v887 = vpack.c.b16 %v499, %v495
    %v888 = vpack.c.b16 %v500, %v496
    %v889 = vpack.c.b16 %v505, %v501
    %v890 = vpack.c.b16 %v506, %v502
    %v891 = vpack.c.b16 %v507, %v503
    %v892 = vpack.c.b16 %v508, %v504
    %v893 = vpack.c.b16 %v513, %v509
    %v894 = vpack.c.b16 %v514, %v510
    %v895 = vpack.c.b16 %v515, %v511
    %v896 = vpack.c.b16 %v516, %v512
    %v897 = vpack.c.b16 %v521, %v517
    %v898 = vpack.c.b16 %v522, %v518
    %v899 = vpack.c.b16 %v523, %v519
    %v900 = vpack.c.b16 %v524, %v520
    %v901 = vpack.c.b16 %v529, %v525
    %v902 = vpack.c.b16 %v530, %v526
    %v903 = vpack.c.b16 %v531, %v527
    %v904 = vpack.c.b16 %v532, %v528
    %v905 = vpack.c.b16 %v537, %v533
    %v906 = vpack.c.b16 %v538, %v534
    %v907 = vpack.c.b16 %v539, %v535
    %v908 = vpack.c.b16 %v540, %v536
    %v909 = vpack.c.b16 %v545, %v541
    %v910 = vpack.c.b16 %v546, %v542
    %v911 = vpack.c.b16 %v547, %v543
    %v912 = vpack.c.b16 %v548, %v544
    %v913 = vpack.c.b16 %v553, %v549
    %v914 = vpack.c.b16 %v554, %v550
    %v915 = vpack.c.b16 %v555, %v551
    %v916 = vpack.c.b16 %v556, %v552
    %v917 = vpack.c.b16 %v561, %v557
    %v918 = vpack.c.b16 %v562, %v558
    %v919 = vpack.c.b16 %v563, %v559
    %v920 = vpack.c.b16 %v564, %v560
    %v921 = vpack.c.b16 %v569, %v565
    %v922 = vpack.c.b16 %v570, %v566
    %v923 = vpack.c.b16 %v571, %v567
    %v924 = vpack.c.b16 %v572, %v568
    %v925 = vpack.c.b16 %v577, %v573
    %v926 = vpack.c.b16 %v578, %v574
    %v927 = vpack.c.b16 %v579, %v575
    %v928 = vpack.c.b16 %v580, %v576
    %v929 = vpack.c.b16 %v585, %v581
    %v930 = vpack.c.b16 %v586, %v582
    %v931 = vpack.c.b16 %v587, %v583
    %v932 = vpack.c.b16 %v588, %v584
    %v933 = vpack.c.b16 %v593, %v589
    %v934 = vpack.c.b16 %v594, %v590
    %v935 = vpack.c.b16 %v595, %v591
    %v936 = vpack.c.b16 %v596, %v592
    %v937 = vpack.c.b16 %v601, %v597
    %v938 = vpack.c.b16 %v602, %v598
    %v939 = vpack.c.b16 %v603, %v599
    %v940 = vpack.c.b16 %v604, %v600
    %v941 = vpack.c.b16 %v609, %v605
    %v942 = vpack.c.b16 %v610, %v606
    %v943 = vpack.c.b16 %v611, %v607
    %v944 = vpack.c.b16 %v612, %v608
    %v945 = vpack.c.b16 %v617, %v613
    %v946 = vpack.c.b16 %v618, %v614
    %v947 = vpack.c.b16 %v619, %v615
    %v948 = vpack.c.b16 %v620, %v616
    %v949 = vpack.c.b16 %v625, %v621
    %v950 = vpack.c.b16 %v626, %v622
    %v951 = vpack.c.b16 %v627, %v623
    %v952 = vpack.c.b16 %v628, %v624
    %v953 = vpack.c.b16 %v633, %v629
    %v954 = vpack.c.b16 %v634, %v630
    %v955 = vpack.c.b16 %v635, %v631
    %v956 = vpack.c.b16 %v636, %v632
    %v957 = vpack.c.b16 %v641, %v637
    %v958 = vpack.c.b16 %v642, %v638
    %v959 = vpack.c.b16 %v643, %v639
    %v960 = vpack.c.b16 %v644, %v640
    %v961 = vpack.c.b16 %v649, %v645
    %v962 = vpack.c.b16 %v650, %v646
    %v963 = vpack.c.b16 %v651, %v647
    %v964 = vpack.c.b16 %v652, %v648
    %v965 = vpack.c.b16 %v657, %v653
    %v966 = vpack.c.b16 %v658, %v654
    %v967 = vpack.c.b16 %v659, %v655
    %v968 = vpack.c.b16 %v660, %v656
    %v969 = vpack.c.b16 %v665, %v661
    %v970 = vpack.c.b16 %v666, %v662
    %v971 = vpack.c.b16 %v667, %v663
    %v972 = vpack.c.b16 %v668, %v664
    %v973 = vpack.c.b16 %v673, %v669
    %v974 = vpack.c.b16 %v674, %v670
    %v975 = vpack.c.b16 %v675, %v671
    %v976 = vpack.c.b16 %v676, %v672
    %v977 = vpack.c.b16 %v681, %v677
    %v978 = vpack.c.b16 %v682, %v678
    %v979 = vpack.c.b16 %v683, %v679
    %v980 = vpack.c.b16 %v684, %v680
    %v981 = vpack.c.b16 %v689, %v685
    %v982 = vpack.c.b16 %v690, %v686
    %v983 = vpack.c.b16 %v691, %v687
    %v984 = vpack.c.b16 %v692, %v688
    %v985 = vpack.c.b16 %v697, %v693
    %v986 = vpack.c.b16 %v698, %v694
    %v987 = vpack.c.b16 %v699, %v695
    %v988 = vpack.c.b16 %v700, %v696
    %v989 = vpack.c.b16 %v705, %v701
    %v990 = vpack.c.b16 %v706, %v702
    %v991 = vpack.c.b16 %v707, %v703
    %v992 = vpack.c.b16 %v708, %v704
    %v993 = vpack.c.b16 %v713, %v709
    %v994 = vpack.c.b16 %v714, %v710
    %v995 = vpack.c.b16 %v715, %v711
    %v996 = vpack.c.b16 %v716, %v712
    %v997 = vpack.c.b16 %v721, %v717
    %v998 = vpack.c.b16 %v722, %v718
    %v999 = vpack.c.b16 %v723, %v719
    %v1000 = vpack.c.b16 %v724, %v720
    %v1001 = vpack.c.b16 %v729, %v725
    %v1002 = vpack.c.b16 %v730, %v726
    %v1003 = vpack.c.b16 %v731, %v727
    %v1004 = vpack.c.b16 %v732, %v728
    %v1005 = vpack.c.b16 %v737, %v733
    %v1006 = vpack.c.b16 %v738, %v734
    %v1007 = vpack.c.b16 %v739, %v735
    %v1008 = vpack.c.b16 %v740, %v736
    %v1009 = vpack.c.b16 %v745, %v741
    %v1010 = vpack.c.b16 %v746, %v742
    %v1011 = vpack.c.b16 %v747, %v743
    %v1012 = vpack.c.b16 %v748, %v744
    %v1013 = vpack.c.b16 %v753, %v749
    %v1014 = vpack.c.b16 %v754, %v750
    %v1015 = vpack.c.b16 %v755, %v751
    %v1016 = vpack.c.b16 %v756, %v752
    %v1017 = vpack.c.b16 %v761, %v757
    %v1018 = vpack.c.b16 %v762, %v758
    %v1019 = vpack.c.b16 %v763, %v759
    %v1020 = vpack.c.b16 %v764, %v760
    %v1021 = vpack.c.b16 %v769, %v765
    %v1022 = vpack.c.b16 %v770, %v766
    %v1023 = vpack.c.b16 %v771, %v767
    %v1024 = vpack.c.b16 %v772, %v768
    %v1025 = vpack.c.b16 %v777, %v773
    %v1026 = vpack.c.b16 %v778, %v774
    %v1027 = vpack.c.b16 %v779, %v775
    %v1028 = vpack.c.b16 %v780, %v776
    %v1029 = vpack.c.b16 %v785, %v781
    %v1030 = vpack.c.b16 %v786, %v782
    %v1031 = vpack.c.b16 %v787, %v783
    %v1032 = vpack.c.b16 %v788, %v784
    %v1033 = vpack.c.b16 %v793, %v789
    %v1034 = vpack.c.b16 %v794, %v790
    %v1035 = vpack.c.b16 %v795, %v791
    %v1036 = vpack.c.b16 %v796, %v792
    %v1037 = vpack.c.b16 %v801, %v797
    %v1038 = vpack.c.b16 %v802, %v798
    %v1039 = vpack.c.b16 %v803, %v799
    %v1040 = vpack.c.b16 %v804, %v800
    %v1041 = vpack.c.b16 %v809, %v805
    %v1042 = vpack.c.b16 %v810, %v806
    %v1043 = vpack.c.b16 %v811, %v807
    %v1044 = vpack.c.b16 %v812, %v808
    %v1045 = vpack.c.b16 %v817, %v813
    %v1046 = vpack.c.b16 %v818, %v814
    %v1047 = vpack.c.b16 %v819, %v815
    %v1048 = vpack.c.b16 %v820, %v816
    %v1049 = vpack.c.b16 %v825, %v821
    %v1050 = vpack.c.b16 %v826, %v822
    %v1051 = vpack.c.b16 %v827, %v823
    %v1052 = vpack.c.b16 %v828, %v824
    %v1053 = vpack.c.b16 %v833, %v829
    %v1054 = vpack.c.b16 %v834, %v830
    %v1055 = vpack.c.b16 %v835, %v831
    %v1056 = vpack.c.b16 %v836, %v832
    %v1057 = vpack.c.b16 %v841, %v837
    %v1058 = vpack.c.b16 %v842, %v838
    %v1059 = vpack.c.b16 %v843, %v839
    %v1060 = vpack.c.b16 %v844, %v840
    %v1061 = vpack.c.b16 %v849, %v845
    %v1062 = vpack.c.b16 %v850, %v846
    %v1063 = vpack.c.b16 %v851, %v847
    %v1064 = vpack.c.b16 %v852, %v848
    %v1065 = vpack.c.b16 %v857, %v853
    %v1066 = vpack.c.b16 %v858, %v854
    %v1067 = vpack.c.b16 %v859, %v855
    %v1068 = vpack.c.b16 %v860, %v856
    %v1069 = vpack.c.b16 %v865, %v861
    %v1070 = vpack.c.b16 %v866, %v862
    %v1071 = vpack.c.b16 %v867, %v863
    %v1072 = vpack.c.b16 %v868, %v864
    %v1073 = vpack.c.b16 %v873, %v869
    %v1074 = vpack.c.b16 %v874, %v870
    %v1075 = vpack.c.b16 %v875, %v871
    %v1076 = vpack.c.b16 %v876, %v872
    %v1077 = vpack.c.b16 %v881, %v877
    %v1078 = vpack.c.b16 %v882, %v878
    %v1079 = vpack.c.b16 %v883, %v879
    %v1080 = vpack.c.b16 %v884, %v880
    %vm1277 = vcmask 130048
    %v1279 = vsel %vm1277, %v290, 0
    %1281 = vmatprep.subr.bf16.mxu0 %v886
    %1282 = vmatpush1.bf16.msra.mxu0 %v885
    %1283 = vmatprep.subr.bf16.mxu0 %v890
    %1284 = vmatpush1.bf16.msra.mxu0 %v889
    %1285 = vmatprep.subr.bf16.mxu0 %v894
    %1286 = vmatpush1.bf16.msra.mxu0 %v893
    %1287 = vmatprep.subr.bf16.mxu0 %v898
    %1288 = vmatpush1.bf16.msra.mxu0 %v897
    %1289 = vmatprep.subr.bf16.mxu0 %v902
    %1290 = vmatpush1.bf16.msra.mxu0 %v901
    %1291 = vmatprep.subr.bf16.mxu0 %v906
    %1292 = vmatpush1.bf16.msra.mxu0 %v905
    %1293 = vmatprep.subr.bf16.mxu0 %v910
    %1294 = vmatpush1.bf16.msra.mxu0 %v909
    %1295 = vmatprep.subr.bf16.mxu0 %v914
    %1296 = vmatpush1.bf16.msra.mxu0 %v913
    %1297 = vmatprep.subr.bf16.mxu0 %v918
    %1298 = vmatpush1.bf16.msra.mxu0 %v917
    %1299 = vmatprep.subr.bf16.mxu0 %v922
    %1300 = vmatpush1.bf16.msra.mxu0 %v921
    %1301 = vmatprep.subr.bf16.mxu0 %v926
    %1302 = vmatpush1.bf16.msra.mxu0 %v925
    %1303 = vmatprep.subr.bf16.mxu0 %v930
    %1304 = vmatpush1.bf16.msra.mxu0 %v929
    %1305 = vmatprep.subr.bf16.mxu0 %v934
    %1306 = vmatpush1.bf16.msra.mxu0 %v933
    %1307 = vmatprep.subr.bf16.mxu0 %v938
    %1308 = vmatpush1.bf16.msra.mxu0 %v937
    %1309 = vmatprep.subr.bf16.mxu0 %v942
    %1310 = vmatpush1.bf16.msra.mxu0 %v941
    %1311 = vmatprep.subr.bf16.mxu0 %v946
    %1312 = vmatpush1.bf16.msra.mxu0 %v945
    %1313 = vmatprep.mubr.bf16.mxu0 %v285
    %1314 = vmatmul.mubr.bf16.gmra.mrb[0].mxu0 %v284
    %v1315 = vpop.f32.mrb[0].mxu0
    %v1316 = vadd.f32 %v256, %v1315
    %v1317 = vpop.f32.mrb[0].mxu0
    %v1318 = vadd.f32 %v260, %v1317
    %v1319 = vpop.f32.mrb[0].mxu0
    %v1320 = vpop.f32.mrb[0].mxu0
    %1321 = vdwg.mxu0
    %1322 = vmatprep.subr.bf16.mxu0 %v950
    %1323 = vmatpush1.bf16.msra.mxu0 %v949
    %1324 = vmatprep.subr.bf16.mxu0 %v954
    %1325 = vmatpush1.bf16.msra.mxu0 %v953
    %1326 = vmatprep.subr.bf16.mxu0 %v958
    %1327 = vmatpush1.bf16.msra.mxu0 %v957
    %1328 = vmatprep.subr.bf16.mxu0 %v962
    %1329 = vmatpush1.bf16.msra.mxu0 %v961
    %1330 = vmatprep.subr.bf16.mxu0 %v966
    %1331 = vmatpush1.bf16.msra.mxu0 %v965
    %1332 = vmatprep.subr.bf16.mxu0 %v970
    %1333 = vmatpush1.bf16.msra.mxu0 %v969
    %1334 = vmatprep.subr.bf16.mxu0 %v974
    %1335 = vmatpush1.bf16.msra.mxu0 %v973
    %1336 = vmatprep.subr.bf16.mxu0 %v978
    %1337 = vmatpush1.bf16.msra.mxu0 %v977
    %1338 = vmatprep.subr.bf16.mxu0 %v982
    %1339 = vmatpush1.bf16.msra.mxu0 %v981
    %1340 = vmatprep.subr.bf16.mxu0 %v986
    %1341 = vmatpush1.bf16.msra.mxu0 %v985
    %1342 = vmatprep.subr.bf16.mxu0 %v990
    %1343 = vmatpush1.bf16.msra.mxu0 %v989
    %1344 = vmatprep.subr.bf16.mxu0 %v994
    %1345 = vmatpush1.bf16.msra.mxu0 %v993
    %1346 = vmatprep.subr.bf16.mxu0 %v998
    %1347 = vmatpush1.bf16.msra.mxu0 %v997
    %1348 = vmatprep.subr.bf16.mxu0 %v1002
    %1349 = vmatpush1.bf16.msra.mxu0 %v1001
    %1350 = vmatprep.subr.bf16.mxu0 %v1006
    %1351 = vmatpush1.bf16.msra.mxu0 %v1005
    %1352 = vmatprep.subr.bf16.mxu0 %v1010
    %1353 = vmatpush1.bf16.msra.mxu0 %v1009
    %1354 = vmatprep.mubr.bf16.mxu0 %v287
    %1355 = vmatmul.mubr.bf16.gmra.mrb[0].mxu0 %v286
    %v1356 = vpop.f32.mrb[0].mxu0
    %v1357 = vadd.f32 %v1316, %v1356
    %v1358 = vpop.f32.mrb[0].mxu0
    %v1359 = vadd.f32 %v1318, %v1358
    %v1360 = vpop.f32.mrb[0].mxu0
    %v1361 = vpop.f32.mrb[0].mxu0
    %1362 = vdwg.mxu0
    %1363 = vmatprep.subr.bf16.mxu0 %v1014
    %1364 = vmatpush1.bf16.msra.mxu0 %v1013
    %1365 = vmatprep.subr.bf16.mxu0 %v1018
    %1366 = vmatpush1.bf16.msra.mxu0 %v1017
    %1367 = vmatprep.subr.bf16.mxu0 %v1022
    %1368 = vmatpush1.bf16.msra.mxu0 %v1021
    %1369 = vmatprep.subr.bf16.mxu0 %v1026
    %1370 = vmatpush1.bf16.msra.mxu0 %v1025
    %1371 = vmatprep.subr.bf16.mxu0 %v1030
    %1372 = vmatpush1.bf16.msra.mxu0 %v1029
    %1373 = vmatprep.subr.bf16.mxu0 %v1034
    %1374 = vmatpush1.bf16.msra.mxu0 %v1033
    %1375 = vmatprep.subr.bf16.mxu0 %v1038
    %1376 = vmatpush1.bf16.msra.mxu0 %v1037
    %1377 = vmatprep.subr.bf16.mxu0 %v1042
    %1378 = vmatpush1.bf16.msra.mxu0 %v1041
    %1379 = vmatprep.subr.bf16.mxu0 %v1046
    %1380 = vmatpush1.bf16.msra.mxu0 %v1045
    %1381 = vmatprep.subr.bf16.mxu0 %v1050
    %1382 = vmatpush1.bf16.msra.mxu0 %v1049
    %1383 = vmatprep.subr.bf16.mxu0 %v1054
    %1384 = vmatpush1.bf16.msra.mxu0 %v1053
    %1385 = vmatprep.subr.bf16.mxu0 %v1058
    %1386 = vmatpush1.bf16.msra.mxu0 %v1057
    %1387 = vmatprep.subr.bf16.mxu0 %v1062
    %1388 = vmatpush1.bf16.msra.mxu0 %v1061
    %1389 = vmatprep.subr.bf16.mxu0 %v1066
    %1390 = vmatpush1.bf16.msra.mxu0 %v1065
    %1391 = vmatprep.subr.bf16.mxu0 %v1070
    %1392 = vmatpush1.bf16.msra.mxu0 %v1069
    %1393 = vmatprep.subr.bf16.mxu0 %v1074
    %1394 = vmatpush1.bf16.msra.mxu0 %v1073
    %1395 = vmatprep.mubr.bf16.mxu0 %v289
    %1396 = vmatmul.mubr.bf16.gmra.mrb[0].mxu0 %v288
    %v1397 = vpop.f32.mrb[0].mxu0
    %v1398 = vadd.f32 %v1357, %v1397
    %v1399 = vpop.f32.mrb[0].mxu0
    %v1400 = vadd.f32 %v1359, %v1399
    %v1401 = vpop.f32.mrb[0].mxu0
    %v1402 = vpop.f32.mrb[0].mxu0
    %1403 = vdwg.mxu0
    %1404 = vmatprep.subr.bf16.mxu0 %v1078
    %1405 = vmatpush1.bf16.msra.mxu0 %v1077
    %1406 = vmatprep.subr.bf16.mxu0 0
    %1407 = vmatpush1.bf16.msra.mxu0 0
    %1408 = vmatprep.subr.bf16.mxu0 0
    %1409 = vmatpush1.bf16.msra.mxu0 0
    %1410 = vmatprep.subr.bf16.mxu0 0
    %1411 = vmatpush1.bf16.msra.mxu0 0
    %1412 = vmatprep.subr.bf16.mxu0 0
    %1413 = vmatpush1.bf16.msra.mxu0 0
    %1414 = vmatprep.subr.bf16.mxu0 0
    %1415 = vmatpush1.bf16.msra.mxu0 0
    %1416 = vmatprep.subr.bf16.mxu0 0
    %1417 = vmatpush1.bf16.msra.mxu0 0
    %1418 = vmatprep.subr.bf16.mxu0 0
    %1419 = vmatpush1.bf16.msra.mxu0 0
    %1420 = vmatprep.subr.bf16.mxu0 0
    %1421 = vmatpush1.bf16.msra.mxu0 0
    %1422 = vmatprep.subr.bf16.mxu0 0
    %1423 = vmatpush1.bf16.msra.mxu0 0
    %1424 = vmatprep.subr.bf16.mxu0 0
    %1425 = vmatpush1.bf16.msra.mxu0 0
    %1426 = vmatprep.subr.bf16.mxu0 0
    %1427 = vmatpush1.bf16.msra.mxu0 0
    %1428 = vmatprep.subr.bf16.mxu0 0
    %1429 = vmatpush1.bf16.msra.mxu0 0
    %1430 = vmatprep.subr.bf16.mxu0 0
    %1431 = vmatpush1.bf16.msra.mxu0 0
    %1432 = vmatprep.subr.bf16.mxu0 0
    %1433 = vmatpush1.bf16.msra.mxu0 0
    %1434 = vmatprep.subr.bf16.mxu0 0
    %1435 = vmatpush1.bf16.msra.mxu0 0
    %1436 = vmatprep.mubr.bf16.mxu0 0
    %1437 = vmatmul.mubr.bf16.gmra.mrb[0].mxu0 %v1279
    %v1438 = vpop.f32.mrb[0].mxu0
    %v1439 = vadd.f32 %v1398, %v1438
    %v1440 = vpop.f32.mrb[0].mxu0
    %v1441 = vadd.f32 %v1400, %v1440
    %v1442 = vpop.f32.mrb[0].mxu0
    %v1443 = vpop.f32.mrb[0].mxu0
    %1444 = vdwg.mxu0
    %1445 = vmatprep.subr.bf16.mxu0 %v888
    %1446 = vmatpush1.bf16.msra.mxu0 %v887
    %1447 = vmatprep.subr.bf16.mxu0 %v892
    %1448 = vmatpush1.bf16.msra.mxu0 %v891
    %1449 = vmatprep.subr.bf16.mxu0 %v896
    %1450 = vmatpush1.bf16.msra.mxu0 %v895
    %1451 = vmatprep.subr.bf16.mxu0 %v900
    %1452 = vmatpush1.bf16.msra.mxu0 %v899
    %1453 = vmatprep.subr.bf16.mxu0 %v904
    %1454 = vmatpush1.bf16.msra.mxu0 %v903
    %1455 = vmatprep.subr.bf16.mxu0 %v908
    %1456 = vmatpush1.bf16.msra.mxu0 %v907
    %1457 = vmatprep.subr.bf16.mxu0 %v912
    %1458 = vmatpush1.bf16.msra.mxu0 %v911
    %1459 = vmatprep.subr.bf16.mxu0 %v916
    %1460 = vmatpush1.bf16.msra.mxu0 %v915
    %1461 = vmatprep.subr.bf16.mxu0 %v920
    %1462 = vmatpush1.bf16.msra.mxu0 %v919
    %1463 = vmatprep.subr.bf16.mxu0 %v924
    %1464 = vmatpush1.bf16.msra.mxu0 %v923
    %1465 = vmatprep.subr.bf16.mxu0 %v928
    %1466 = vmatpush1.bf16.msra.mxu0 %v927
    %1467 = vmatprep.subr.bf16.mxu0 %v932
    %1468 = vmatpush1.bf16.msra.mxu0 %v931
    %1469 = vmatprep.subr.bf16.mxu0 %v936
    %1470 = vmatpush1.bf16.msra.mxu0 %v935
    %1471 = vmatprep.subr.bf16.mxu0 %v940
    %1472 = vmatpush1.bf16.msra.mxu0 %v939
    %1473 = vmatprep.subr.bf16.mxu0 %v944
    %1474 = vmatpush1.bf16.msra.mxu0 %v943
    %1475 = vmatprep.subr.bf16.mxu0 %v948
    %1476 = vmatpush1.bf16.msra.mxu0 %v947
    %1477 = vmatprep.mubr.bf16.mxu0 %v285
    %1478 = vmatmul.mubr.bf16.gmra.mrb[0].mxu0 %v284
    %v1479 = vpop.f32.mrb[0].mxu0
    %v1480 = vadd.f32 %v264, %v1479
    %v1481 = vpop.f32.mrb[0].mxu0
    %v1482 = vadd.f32 %v268, %v1481
    %v1483 = vpop.f32.mrb[0].mxu0
    %v1484 = vpop.f32.mrb[0].mxu0
    %1485 = vdwg.mxu0
    %1486 = vmatprep.subr.bf16.mxu0 %v952
    %1487 = vmatpush1.bf16.msra.mxu0 %v951
    %1488 = vmatprep.subr.bf16.mxu0 %v956
    %1489 = vmatpush1.bf16.msra.mxu0 %v955
    %1490 = vmatprep.subr.bf16.mxu0 %v960
    %1491 = vmatpush1.bf16.msra.mxu0 %v959
    %1492 = vmatprep.subr.bf16.mxu0 %v964
    %1493 = vmatpush1.bf16.msra.mxu0 %v963
    %1494 = vmatprep.subr.bf16.mxu0 %v968
    %1495 = vmatpush1.bf16.msra.mxu0 %v967
    %1496 = vmatprep.subr.bf16.mxu0 %v972
    %1497 = vmatpush1.bf16.msra.mxu0 %v971
    %1498 = vmatprep.subr.bf16.mxu0 %v976
    %1499 = vmatpush1.bf16.msra.mxu0 %v975
    %1500 = vmatprep.subr.bf16.mxu0 %v980
    %1501 = vmatpush1.bf16.msra.mxu0 %v979
    %1502 = vmatprep.subr.bf16.mxu0 %v984
    %1503 = vmatpush1.bf16.msra.mxu0 %v983
    %1504 = vmatprep.subr.bf16.mxu0 %v988
    %1505 = vmatpush1.bf16.msra.mxu0 %v987
    %1506 = vmatprep.subr.bf16.mxu0 %v992
    %1507 = vmatpush1.bf16.msra.mxu0 %v991
    %1508 = vmatprep.subr.bf16.mxu0 %v996
    %1509 = vmatpush1.bf16.msra.mxu0 %v995
    %1510 = vmatprep.subr.bf16.mxu0 %v1000
    %1511 = vmatpush1.bf16.msra.mxu0 %v999
    %1512 = vmatprep.subr.bf16.mxu0 %v1004
    %1513 = vmatpush1.bf16.msra.mxu0 %v1003
    %1514 = vmatprep.subr.bf16.mxu0 %v1008
    %1515 = vmatpush1.bf16.msra.mxu0 %v1007
    %1516 = vmatprep.subr.bf16.mxu0 %v1012
    %1517 = vmatpush1.bf16.msra.mxu0 %v1011
    %1518 = vmatprep.mubr.bf16.mxu0 %v287
    %1519 = vmatmul.mubr.bf16.gmra.mrb[0].mxu0 %v286
    %v1520 = vpop.f32.mrb[0].mxu0
    %v1521 = vadd.f32 %v1480, %v1520
    %v1522 = vpop.f32.mrb[0].mxu0
    %v1523 = vadd.f32 %v1482, %v1522
    %v1524 = vpop.f32.mrb[0].mxu0
    %v1525 = vpop.f32.mrb[0].mxu0
    %1526 = vdwg.mxu0
    %1527 = vmatprep.subr.bf16.mxu0 %v1016
    %1528 = vmatpush1.bf16.msra.mxu0 %v1015
    %1529 = vmatprep.subr.bf16.mxu0 %v1020
    %1530 = vmatpush1.bf16.msra.mxu0 %v1019
    %1531 = vmatprep.subr.bf16.mxu0 %v1024
    %1532 = vmatpush1.bf16.msra.mxu0 %v1023
    %1533 = vmatprep.subr.bf16.mxu0 %v1028
    %1534 = vmatpush1.bf16.msra.mxu0 %v1027
    %1535 = vmatprep.subr.bf16.mxu0 %v1032
    %1536 = vmatpush1.bf16.msra.mxu0 %v1031
    %1537 = vmatprep.subr.bf16.mxu0 %v1036
    %1538 = vmatpush1.bf16.msra.mxu0 %v1035
    %1539 = vmatprep.subr.bf16.mxu0 %v1040
    %1540 = vmatpush1.bf16.msra.mxu0 %v1039
    %1541 = vmatprep.subr.bf16.mxu0 %v1044
    %1542 = vmatpush1.bf16.msra.mxu0 %v1043
    %1543 = vmatprep.subr.bf16.mxu0 %v1048
    %1544 = vmatpush1.bf16.msra.mxu0 %v1047
    %1545 = vmatprep.subr.bf16.mxu0 %v1052
    %1546 = vmatpush1.bf16.msra.mxu0 %v1051
    %1547 = vmatprep.subr.bf16.mxu0 %v1056
    %1548 = vmatpush1.bf16.msra.mxu0 %v1055
    %1549 = vmatprep.subr.bf16.mxu0 %v1060
    %1550 = vmatpush1.bf16.msra.mxu0 %v1059
    %1551 = vmatprep.subr.bf16.mxu0 %v1064
    %1552 = vmatpush1.bf16.msra.mxu0 %v1063
    %1553 = vmatprep.subr.bf16.mxu0 %v1068
    %1554 = vmatpush1.bf16.msra.mxu0 %v1067
    %1555 = vmatprep.subr.bf16.mxu0 %v1072
    %1556 = vmatpush1.bf16.msra.mxu0 %v1071
    %1557 = vmatprep.subr.bf16.mxu0 %v1076
    %1558 = vmatpush1.bf16.msra.mxu0 %v1075
    %1559 = vmatprep.mubr.bf16.mxu0 %v289
    %1560 = vmatmul.mubr.bf16.gmra.mrb[0].mxu0 %v288
    %v1561 = vpop.f32.mrb[0].mxu0
    %v1562 = vadd.f32 %v1521, %v1561
    %v1563 = vpop.f32.mrb[0].mxu0
    %v1564 = vadd.f32 %v1523, %v1563
    %v1565 = vpop.f32.mrb[0].mxu0
    %v1566 = vpop.f32.mrb[0].mxu0
    %1567 = vdwg.mxu0
    %1568 = vmatprep.subr.bf16.mxu0 %v1080
    %1569 = vmatpush1.bf16.msra.mxu0 %v1079
    %1570 = vmatprep.subr.bf16.mxu0 0
    %1571 = vmatpush1.bf16.msra.mxu0 0
    %1572 = vmatprep.subr.bf16.mxu0 0
    %1573 = vmatpush1.bf16.msra.mxu0 0
    %1574 = vmatprep.subr.bf16.mxu0 0
    %1575 = vmatpush1.bf16.msra.mxu0 0
    %1576 = vmatprep.subr.bf16.mxu0 0
    %1577 = vmatpush1.bf16.msra.mxu0 0
    %1578 = vmatprep.subr.bf16.mxu0 0
    %1579 = vmatpush1.bf16.msra.mxu0 0
    %1580 = vmatprep.subr.bf16.mxu0 0
    %1581 = vmatpush1.bf16.msra.mxu0 0
    %1582 = vmatprep.subr.bf16.mxu0 0
    %1583 = vmatpush1.bf16.msra.mxu0 0
    %1584 = vmatprep.subr.bf16.mxu0 0
    %1585 = vmatpush1.bf16.msra.mxu0 0
    %1586 = vmatprep.subr.bf16.mxu0 0
    %1587 = vmatpush1.bf16.msra.mxu0 0
    %1588 = vmatprep.subr.bf16.mxu0 0
    %1589 = vmatpush1.bf16.msra.mxu0 0
    %1590 = vmatprep.subr.bf16.mxu0 0
    %1591 = vmatpush1.bf16.msra.mxu0 0
    %1592 = vmatprep.subr.bf16.mxu0 0
    %1593 = vmatpush1.bf16.msra.mxu0 0
    %1594 = vmatprep.subr.bf16.mxu0 0
    %1595 = vmatpush1.bf16.msra.mxu0 0
    %1596 = vmatprep.subr.bf16.mxu0 0
    %1597 = vmatpush1.bf16.msra.mxu0 0
    %1598 = vmatprep.subr.bf16.mxu0 0
    %1599 = vmatpush1.bf16.msra.mxu0 0
    %1600 = vmatprep.mubr.bf16.mxu0 0
    %1601 = vmatmul.mubr.bf16.gmra.mrb[0].mxu0 %v1279
    %v1602 = vpop.f32.mrb[0].mxu0
    %v1603 = vadd.f32 %v1562, %v1602
    %v1604 = vpop.f32.mrb[0].mxu0
    %v1605 = vadd.f32 %v1564, %v1604
    %v1606 = vpop.f32.mrb[0].mxu0
    %v1607 = vpop.f32.mrb[0].mxu0
    %1608 = vdwg.mxu0
    %v1609 = vmax.f32 %v1439, 0.0
    %v1610 = vmax.f32 %v1441, 0.0
    %v1611 = vmax.f32 %v1603, 0.0
    %v1612 = vmax.f32 %v1605, 0.0
    %v1613 = vpack.c.bf16 %v1609, %v1609
    %v1614 = vpack.c.bf16 %v1610, %v1610
    %v1615 = vpack.c.bf16 %v1611, %v1611
    %v1616 = vpack.c.bf16 %v1612, %v1612
    %v1617 = vld [vmem:[%s4] sm:$0xff]
    %v1618 = vld [vmem:[%s4 + $0x8] sm:$0xff]
    %v1619 = vld [vmem:[%s4 + $0x10] sm:$0xff]
    %v1620 = vld [vmem:[%s4 + $0x18] sm:$0xff]
    %v1621 = vld [vmem:[%s4 + $0x20] sm:$0xff]
    %v1622 = vld [vmem:[%s4 + $0x28] sm:$0xff]
    %v1623 = vld [vmem:[%s4 + $0x30] sm:$0xff]
    %v1624 = vld [vmem:[%s4 + $0x38] sm:$0xff]
    %v1625 = vld [vmem:[%s4 + $0x40] sm:$0xff]
    %v1626 = vld [vmem:[%s4 + $0x48] sm:$0xff]
    %v1627 = vld [vmem:[%s4 + $0x50] sm:$0xff]
    %v1628 = vld [vmem:[%s4 + $0x58] sm:$0xff]
    %v1629 = vld [vmem:[%s4 + $0x60] sm:$0xff]
    %v1630 = vld [vmem:[%s4 + $0x68] sm:$0xff]
    %v1631 = vld [vmem:[%s4 + $0x70] sm:$0xff]
    %v1632 = vld [vmem:[%s4 + $0x78] sm:$0xff]
    %v1633 = vld [vmem:[%s4 + $0x80] sm:$0xff]
    %v1634 = vld [vmem:[%s4 + $0x88] sm:$0xff]
    %v1635 = vld [vmem:[%s4 + $0x90] sm:$0xff]
    %v1636 = vld [vmem:[%s4 + $0x98] sm:$0xff]
    %v1637 = vld [vmem:[%s4 + $0xa0] sm:$0xff]
    %v1638 = vld [vmem:[%s4 + $0xa8] sm:$0xff]
    %v1639 = vld [vmem:[%s4 + $0xb0] sm:$0xff]
    %v1640 = vld [vmem:[%s4 + $0xb8] sm:$0xff]
    %v1641 = vld [vmem:[%s4 + $0xc0] sm:$0xff]
    %v1642 = vld [vmem:[%s4 + $0xc8] sm:$0xff]
    %v1643 = vld [vmem:[%s4 + $0xd0] sm:$0xff]
    %v1644 = vld [vmem:[%s4 + $0xd8] sm:$0xff]
    %v1645 = vld [vmem:[%s4 + $0xe0] sm:$0xff]
    %v1646 = vld [vmem:[%s4 + $0xe8] sm:$0xff]
    %v1647 = vld [vmem:[%s4 + $0xf0] sm:$0xff]
    %v1648 = vld [vmem:[%s4 + $0xf8] sm:$0xff]
    %v1649 = vld [vmem:[%s4 + $0x100] sm:$0xff]
    %v1650 = vld [vmem:[%s4 + $0x108] sm:$0xff]
    %v1651 = vld [vmem:[%s4 + $0x110] sm:$0xff]
    %v1652 = vld [vmem:[%s4 + $0x118] sm:$0xff]
    %v1653 = vld [vmem:[%s4 + $0x120] sm:$0xff]
    %v1654 = vld [vmem:[%s4 + $0x128] sm:$0xff]
    %v1655 = vld [vmem:[%s4 + $0x130] sm:$0xff]
    %v1656 = vld [vmem:[%s4 + $0x138] sm:$0xff]
    %v1657 = vld [vmem:[%s4 + $0x140] sm:$0xff]
    %v1658 = vld [vmem:[%s4 + $0x148] sm:$0xff]
    %v1659 = vld [vmem:[%s4 + $0x150] sm:$0xff]
    %v1660 = vld [vmem:[%s4 + $0x158] sm:$0xff]
    %v1661 = vld [vmem:[%s4 + $0x160] sm:$0xff]
    %v1662 = vld [vmem:[%s4 + $0x168] sm:$0xff]
    %v1663 = vld [vmem:[%s4 + $0x170] sm:$0xff]
    %v1664 = vld [vmem:[%s4 + $0x178] sm:$0xff]
    %v1665 = vld [vmem:[%s4 + $0x180] sm:$0xff]
    %v1666 = vld [vmem:[%s4 + $0x188] sm:$0xff]
    %v1667 = vld [vmem:[%s5] sm:$0x3]
    %v1669 = vlaneseq
    %v1670 = vshrl.u32 %v1669, 7
    %v1671 = vsub.s32 0, %v1670
    %v1672 = vrot.slane %v1667, %v1671
    %v1673 = vlaneseq
    %v1674 = vshrl.u32 %v1673, 7
    %v1675 = vsub.s32 1, %v1674
    %v1676 = vrot.slane %v1667, %v1675
    %v1729 = vunpack.c.l.b16 %v1617
    %v1730 = vunpack.c.h.b16 %v1617
    %v1731 = vunpack.c.l.b16 %v1618
    %v1732 = vunpack.c.h.b16 %v1618
    %v1733 = vunpack.c.l.b16 %v1619
    %v1734 = vunpack.c.h.b16 %v1619
    %v1735 = vunpack.c.l.b16 %v1620
    %v1736 = vunpack.c.h.b16 %v1620
    %v1737 = vunpack.c.l.b16 %v1621
    %v1738 = vunpack.c.h.b16 %v1621
    %v1739 = vunpack.c.l.b16 %v1622
    %v1740 = vunpack.c.h.b16 %v1622
    %v1741 = vunpack.c.l.b16 %v1623
    %v1742 = vunpack.c.h.b16 %v1623
    %v1743 = vunpack.c.l.b16 %v1624
    %v1744 = vunpack.c.h.b16 %v1624
    %v1745 = vunpack.c.l.b16 %v1625
    %v1746 = vunpack.c.h.b16 %v1625
    %v1747 = vunpack.c.l.b16 %v1626
    %v1748 = vunpack.c.h.b16 %v1626
    %v1749 = vunpack.c.l.b16 %v1627
    %v1750 = vunpack.c.h.b16 %v1627
    %v1751 = vunpack.c.l.b16 %v1628
    %v1752 = vunpack.c.h.b16 %v1628
    %v1753 = vunpack.c.l.b16 %v1629
    %v1754 = vunpack.c.h.b16 %v1629
    %v1755 = vunpack.c.l.b16 %v1630
    %v1756 = vunpack.c.h.b16 %v1630
    %v1757 = vunpack.c.l.b16 %v1631
    %v1758 = vunpack.c.h.b16 %v1631
    %v1759 = vunpack.c.l.b16 %v1632
    %v1760 = vunpack.c.h.b16 %v1632
    %v1761 = vunpack.c.l.b16 %v1633
    %v1762 = vunpack.c.h.b16 %v1633
    %v1763 = vunpack.c.l.b16 %v1634
    %v1764 = vunpack.c.h.b16 %v1634
    %v1765 = vunpack.c.l.b16 %v1635
    %v1766 = vunpack.c.h.b16 %v1635
    %v1767 = vunpack.c.l.b16 %v1636
    %v1768 = vunpack.c.h.b16 %v1636
    %v1769 = vunpack.c.l.b16 %v1637
    %v1770 = vunpack.c.h.b16 %v1637
    %v1771 = vunpack.c.l.b16 %v1638
    %v1772 = vunpack.c.h.b16 %v1638
    %v1773 = vunpack.c.l.b16 %v1639
    %v1774 = vunpack.c.h.b16 %v1639
    %v1775 = vunpack.c.l.b16 %v1640
    %v1776 = vunpack.c.h.b16 %v1640
    %v1777 = vunpack.c.l.b16 %v1641
    %v1778 = vunpack.c.h.b16 %v1641
    %v1779 = vunpack.c.l.b16 %v1642
    %v1780 = vunpack.c.h.b16 %v1642
    %v1781 = vunpack.c.l.b16 %v1643
    %v1782 = vunpack.c.h.b16 %v1643
    %v1783 = vunpack.c.l.b16 %v1644
    %v1784 = vunpack.c.h.b16 %v1644
    %v1785 = vunpack.c.l.b16 %v1645
    %v1786 = vunpack.c.h.b16 %v1645
    %v1787 = vunpack.c.l.b16 %v1646
    %v1788 = vunpack.c.h.b16 %v1646
    %v1789 = vunpack.c.l.b16 %v1647
    %v1790 = vunpack.c.h.b16 %v1647
    %v1791 = vunpack.c.l.b16 %v1648
    %v1792 = vunpack.c.h.b16 %v1648
    %v1793 = vunpack.c.l.b16 %v1649
    %v1794 = vunpack.c.h.b16 %v1649
    %v1795 = vunpack.c.l.b16 %v1650
    %v1796 = vunpack.c.h.b16 %v1650
    %v1797 = vunpack.c.l.b16 %v1651
    %v1798 = vunpack.c.h.b16 %v1651
    %v1799 = vunpack.c.l.b16 %v1652
    %v1800 = vunpack.c.h.b16 %v1652
    %v1801 = vunpack.c.l.b16 %v1653
    %v1802 = vunpack.c.h.b16 %v1653
    %v1803 = vunpack.c.l.b16 %v1654
    %v1804 = vunpack.c.h.b16 %v1654
    %v1805 = vunpack.c.l.b16 %v1655
    %v1806 = vunpack.c.h.b16 %v1655
    %v1807 = vunpack.c.l.b16 %v1656
    %v1808 = vunpack.c.h.b16 %v1656
    %v1809 = vunpack.c.l.b16 %v1657
    %v1810 = vunpack.c.h.b16 %v1657
    %v1811 = vunpack.c.l.b16 %v1658
    %v1812 = vunpack.c.h.b16 %v1658
    %v1813 = vunpack.c.l.b16 %v1659
    %v1814 = vunpack.c.h.b16 %v1659
    %v1815 = vunpack.c.l.b16 %v1660
    %v1816 = vunpack.c.h.b16 %v1660
    %v1817 = vunpack.c.l.b16 %v1661
    %v1818 = vunpack.c.h.b16 %v1661
    %v1819 = vunpack.c.l.b16 %v1662
    %v1820 = vunpack.c.h.b16 %v1662
    %v1821 = vunpack.c.l.b16 %v1663
    %v1822 = vunpack.c.h.b16 %v1663
    %v1823 = vunpack.c.l.b16 %v1664
    %v1824 = vunpack.c.h.b16 %v1664
    %v1825 = vunpack.c.l.b16 %v1665
    %v1826 = vunpack.c.h.b16 %v1665
    %v1827 = vunpack.c.l.b16 %v1666
    %v1828 = vunpack.c.h.b16 %v1666
    %v1829 = vpack.c.b16 %v1731, %v1729
    %v1830 = vpack.c.b16 %v1732, %v1730
    %v1831 = vpack.c.b16 %v1735, %v1733
    %v1832 = vpack.c.b16 %v1736, %v1734
    %v1833 = vpack.c.b16 %v1739, %v1737
    %v1834 = vpack.c.b16 %v1740, %v1738
    %v1835 = vpack.c.b16 %v1743, %v1741
    %v1836 = vpack.c.b16 %v1744, %v1742
    %v1837 = vpack.c.b16 %v1747, %v1745
    %v1838 = vpack.c.b16 %v1748, %v1746
    %v1839 = vpack.c.b16 %v1751, %v1749
    %v1840 = vpack.c.b16 %v1752, %v1750
    %v1841 = vpack.c.b16 %v1755, %v1753
    %v1842 = vpack.c.b16 %v1756, %v1754
    %v1843 = vpack.c.b16 %v1759, %v1757
    %v1844 = vpack.c.b16 %v1760, %v1758
    %v1845 = vpack.c.b16 %v1763, %v1761
    %v1846 = vpack.c.b16 %v1764, %v1762
    %v1847 = vpack.c.b16 %v1767, %v1765
    %v1848 = vpack.c.b16 %v1768, %v1766
    %v1849 = vpack.c.b16 %v1771, %v1769
    %v1850 = vpack.c.b16 %v1772, %v1770
    %v1851 = vpack.c.b16 %v1775, %v1773
    %v1852 = vpack.c.b16 %v1776, %v1774
    %v1853 = vpack.c.b16 %v1779, %v1777
    %v1854 = vpack.c.b16 %v1780, %v1778
    %v1855 = vpack.c.b16 %v1783, %v1781
    %v1856 = vpack.c.b16 %v1784, %v1782
    %v1857 = vpack.c.b16 %v1787, %v1785
    %v1858 = vpack.c.b16 %v1788, %v1786
    %v1859 = vpack.c.b16 %v1791, %v1789
    %v1860 = vpack.c.b16 %v1792, %v1790
    %v1861 = vpack.c.b16 %v1795, %v1793
    %v1862 = vpack.c.b16 %v1796, %v1794
    %v1863 = vpack.c.b16 %v1799, %v1797
    %v1864 = vpack.c.b16 %v1800, %v1798
    %v1865 = vpack.c.b16 %v1803, %v1801
    %v1866 = vpack.c.b16 %v1804, %v1802
    %v1867 = vpack.c.b16 %v1807, %v1805
    %v1868 = vpack.c.b16 %v1808, %v1806
    %v1869 = vpack.c.b16 %v1811, %v1809
    %v1870 = vpack.c.b16 %v1812, %v1810
    %v1871 = vpack.c.b16 %v1815, %v1813
    %v1872 = vpack.c.b16 %v1816, %v1814
    %v1873 = vpack.c.b16 %v1819, %v1817
    %v1874 = vpack.c.b16 %v1820, %v1818
    %v1875 = vpack.c.b16 %v1823, %v1821
    %v1876 = vpack.c.b16 %v1824, %v1822
    %v1877 = vpack.c.b16 %v1827, %v1825
    %v1878 = vpack.c.b16 %v1828, %v1826
    %v1930 = vsel %vm1277, %v1616, 0
    %1932 = vmatprep.subr.bf16.mxu0 %v1830
    %1933 = vmatpush1.bf16.msra.mxu0 %v1829
    %1934 = vmatprep.subr.bf16.mxu0 %v1832
    %1935 = vmatpush1.bf16.msra.mxu0 %v1831
    %1936 = vmatprep.subr.bf16.mxu0 %v1834
    %1937 = vmatpush1.bf16.msra.mxu0 %v1833
    %1938 = vmatprep.subr.bf16.mxu0 %v1836
    %1939 = vmatpush1.bf16.msra.mxu0 %v1835
    %1940 = vmatprep.subr.bf16.mxu0 %v1838
    %1941 = vmatpush1.bf16.msra.mxu0 %v1837
    %1942 = vmatprep.subr.bf16.mxu0 %v1840
    %1943 = vmatpush1.bf16.msra.mxu0 %v1839
    %1944 = vmatprep.subr.bf16.mxu0 %v1842
    %1945 = vmatpush1.bf16.msra.mxu0 %v1841
    %1946 = vmatprep.subr.bf16.mxu0 %v1844
    %1947 = vmatpush1.bf16.msra.mxu0 %v1843
    %1948 = vmatprep.subr.bf16.mxu0 %v1846
    %1949 = vmatpush1.bf16.msra.mxu0 %v1845
    %1950 = vmatprep.subr.bf16.mxu0 %v1848
    %1951 = vmatpush1.bf16.msra.mxu0 %v1847
    %1952 = vmatprep.subr.bf16.mxu0 %v1850
    %1953 = vmatpush1.bf16.msra.mxu0 %v1849
    %1954 = vmatprep.subr.bf16.mxu0 %v1852
    %1955 = vmatpush1.bf16.msra.mxu0 %v1851
    %1956 = vmatprep.subr.bf16.mxu0 %v1854
    %1957 = vmatpush1.bf16.msra.mxu0 %v1853
    %1958 = vmatprep.subr.bf16.mxu0 %v1856
    %1959 = vmatpush1.bf16.msra.mxu0 %v1855
    %1960 = vmatprep.subr.bf16.mxu0 %v1858
    %1961 = vmatpush1.bf16.msra.mxu0 %v1857
    %1962 = vmatprep.subr.bf16.mxu0 %v1860
    %1963 = vmatpush1.bf16.msra.mxu0 %v1859
    %1964 = vmatprep.mubr.bf16.mxu0 %v1614
    %1965 = vmatmul.mubr.bf16.gmra.mrb[0].mxu0 %v1613
    %v1966 = vpop.f32.mrb[0].mxu0
    %v1967 = vadd.f32 %v1672, %v1966
    %v1968 = vpop.f32.mrb[0].mxu0
    %v1969 = vadd.f32 %v1676, %v1968
    %v1970 = vpop.f32.mrb[0].mxu0
    %v1971 = vpop.f32.mrb[0].mxu0
    %1972 = vdwg.mxu0
    %1973 = vmatprep.subr.bf16.mxu0 %v1862
    %1974 = vmatpush1.bf16.msra.mxu0 %v1861
    %1975 = vmatprep.subr.bf16.mxu0 %v1864
    %1976 = vmatpush1.bf16.msra.mxu0 %v1863
    %1977 = vmatprep.subr.bf16.mxu0 %v1866
    %1978 = vmatpush1.bf16.msra.mxu0 %v1865
    %1979 = vmatprep.subr.bf16.mxu0 %v1868
    %1980 = vmatpush1.bf16.msra.mxu0 %v1867
    %1981 = vmatprep.subr.bf16.mxu0 %v1870
    %1982 = vmatpush1.bf16.msra.mxu0 %v1869
    %1983 = vmatprep.subr.bf16.mxu0 %v1872
    %1984 = vmatpush1.bf16.msra.mxu0 %v1871
    %1985 = vmatprep.subr.bf16.mxu0 %v1874
    %1986 = vmatpush1.bf16.msra.mxu0 %v1873
    %1987 = vmatprep.subr.bf16.mxu0 %v1876
    %1988 = vmatpush1.bf16.msra.mxu0 %v1875
    %1989 = vmatprep.subr.bf16.mxu0 %v1878
    %1990 = vmatpush1.bf16.msra.mxu0 %v1877
    %1991 = vmatprep.subr.bf16.mxu0 0
    %1992 = vmatpush1.bf16.msra.mxu0 0
    %1993 = vmatprep.subr.bf16.mxu0 0
    %1994 = vmatpush1.bf16.msra.mxu0 0
    %1995 = vmatprep.subr.bf16.mxu0 0
    %1996 = vmatpush1.bf16.msra.mxu0 0
    %1997 = vmatprep.subr.bf16.mxu0 0
    %1998 = vmatpush1.bf16.msra.mxu0 0
    %1999 = vmatprep.subr.bf16.mxu0 0
    %2000 = vmatpush1.bf16.msra.mxu0 0
    %2001 = vmatprep.subr.bf16.mxu0 0
    %2002 = vmatpush1.bf16.msra.mxu0 0
    %2003 = vmatprep.subr.bf16.mxu0 0
    %2004 = vmatpush1.bf16.msra.mxu0 0
    %2005 = vmatprep.mubr.bf16.mxu0 %v1930
    %2006 = vmatmul.mubr.bf16.gmra.mrb[0].mxu0 %v1615
    %v2007 = vpop.f32.mrb[0].mxu0
    %v2008 = vadd.f32 %v1967, %v2007
    %v2009 = vpop.f32.mrb[0].mxu0
    %v2010 = vadd.f32 %v1969, %v2009
    %v2011 = vpop.f32.mrb[0].mxu0
    %v2012 = vpop.f32.mrb[0].mxu0
    %2013 = vdwg.mxu0
    %v2014 = vmax.f32 %v2008, 0.0
    %v2015 = vmax.f32 %v2010, 0.0
    %v2016 = vpack.c.bf16 %v2014, %v2014
    %v2017 = vpack.c.bf16 %v2015, %v2015
    %v2018 = vld [vmem:[%s6] sm:$0xf]
    %v2019 = vld [vmem:[%s6 + $0x4] sm:$0xf]
    %v2020 = vld [vmem:[%s6 + $0x8] sm:$0xf]
    %v2021 = vld [vmem:[%s6 + $0xc] sm:$0xf]
    %v2022 = vld [vmem:[%s6 + $0x10] sm:$0xf]
    %v2023 = vld [vmem:[%s6 + $0x14] sm:$0xf]
    %v2024 = vld [vmem:[%s6 + $0x18] sm:$0xf]
    %v2025 = vld [vmem:[%s6 + $0x1c] sm:$0xf]
    %v2026 = vld [vmem:[%s6 + $0x20] sm:$0xf]
    %v2027 = vld [vmem:[%s6 + $0x24] sm:$0xf]
    %v2028 = vld [vmem:[%s6 + $0x28] sm:$0xf]
    %v2029 = vld [vmem:[%s6 + $0x2c] sm:$0xf]
    %v2030 = vld [vmem:[%s6 + $0x30] sm:$0xf]
    %v2031 = vld [vmem:[%s6 + $0x34] sm:$0xf]
    %v2032 = vld [vmem:[%s6 + $0x38] sm:$0xf]
    %v2033 = vld [vmem:[%s6 + $0x3c] sm:$0xf]
    %v2034 = vld [vmem:[%s6 + $0x40] sm:$0xf]
    %v2035 = vld [vmem:[%s6 + $0x44] sm:$0xf]
    %v2036 = vld [vmem:[%s6 + $0x48] sm:$0xf]
    %v2037 = vld [vmem:[%s6 + $0x4c] sm:$0xf]
    %v2038 = vld [vmem:[%s6 + $0x50] sm:$0xf]
    %v2039 = vld [vmem:[%s6 + $0x54] sm:$0xf]
    %v2040 = vld [vmem:[%s6 + $0x58] sm:$0xf]
    %v2041 = vld [vmem:[%s6 + $0x5c] sm:$0xf]
    %v2042 = vld [vmem:[%s6 + $0x60] sm:$0xf]
    %v2043 = vld [vmem:[%s7] sm:$0x1]
    %v2045 = vlaneseq
    %v2046 = vshrl.u32 %v2045, 7
    %v2047 = vsub.s32 0, %v2046
    %v2048 = vrot.slane %v2043, %v2047
    %v2075 = vunpack.c.l.b16 %v2018
    %v2076 = vunpack.c.l.b16 %v2019
    %v2077 = vunpack.c.l.b16 %v2020
    %v2078 = vunpack.c.l.b16 %v2021
    %v2079 = vunpack.c.l.b16 %v2022
    %v2080 = vunpack.c.l.b16 %v2023
    %v2081 = vunpack.c.l.b16 %v2024
    %v2082 = vunpack.c.l.b16 %v2025
    %v2083 = vunpack.c.l.b16 %v2026
    %v2084 = vunpack.c.l.b16 %v2027
    %v2085 = vunpack.c.l.b16 %v2028
    %v2086 = vunpack.c.l.b16 %v2029
    %v2087 = vunpack.c.l.b16 %v2030
    %v2088 = vunpack.c.l.b16 %v2031
    %v2089 = vunpack.c.l.b16 %v2032
    %v2090 = vunpack.c.l.b16 %v2033
    %v2091 = vunpack.c.l.b16 %v2034
    %v2092 = vunpack.c.l.b16 %v2035
    %v2093 = vunpack.c.l.b16 %v2036
    %v2094 = vunpack.c.l.b16 %v2037
    %v2095 = vunpack.c.l.b16 %v2038
    %v2096 = vunpack.c.l.b16 %v2039
    %v2097 = vunpack.c.l.b16 %v2040
    %v2098 = vunpack.c.l.b16 %v2041
    %v2099 = vunpack.c.l.b16 %v2042
    %v2100 = vpack.c.b16 %v2076, %v2075
    %v2101 = vpack.c.b16 %v2078, %v2077
    %v2102 = vpack.c.b16 %v2080, %v2079
    %v2103 = vpack.c.b16 %v2082, %v2081
    %v2104 = vpack.c.b16 %v2084, %v2083
    %v2105 = vpack.c.b16 %v2086, %v2085
    %v2106 = vpack.c.b16 %v2088, %v2087
    %v2107 = vpack.c.b16 %v2090, %v2089
    %v2108 = vpack.c.b16 %v2092, %v2091
    %v2109 = vpack.c.b16 %v2094, %v2093
    %v2110 = vpack.c.b16 %v2096, %v2095
    %v2111 = vpack.c.b16 %v2098, %v2097
    %v2112 = vpack.c.b16 %v2099, %v2099
    %vm2125 = vcmask 588800
    %v2127 = vsel %vm2125, %v2017, 0
    %vm2129 = vcmask 1043456
    %v2131 = vsel %vm2129, %v2112, 0
    %2133 = vmatprep.subr.bf16.mxu0 0
    %2134 = vmatpush1.bf16.msra.mxu0 %v2100
    %2135 = vmatprep.subr.bf16.mxu0 0
    %2136 = vmatpush1.bf16.msra.mxu0 %v2101
    %2137 = vmatprep.subr.bf16.mxu0 0
    %2138 = vmatpush1.bf16.msra.mxu0 %v2102
    %2139 = vmatprep.subr.bf16.mxu0 0
    %2140 = vmatpush1.bf16.msra.mxu0 %v2103
    %2141 = vmatprep.subr.bf16.mxu0 0
    %2142 = vmatpush1.bf16.msra.mxu0 %v2104
    %2143 = vmatprep.subr.bf16.mxu0 0
    %2144 = vmatpush1.bf16.msra.mxu0 %v2105
    %2145 = vmatprep.subr.bf16.mxu0 0
    %2146 = vmatpush1.bf16.msra.mxu0 %v2106
    %2147 = vmatprep.subr.bf16.mxu0 0
    %2148 = vmatpush1.bf16.msra.mxu0 %v2107
    %2149 = vmatprep.subr.bf16.mxu0 0
    %2150 = vmatpush1.bf16.msra.mxu0 %v2108
    %2151 = vmatprep.subr.bf16.mxu0 0
    %2152 = vmatpush1.bf16.msra.mxu0 %v2109
    %2153 = vmatprep.subr.bf16.mxu0 0
    %2154 = vmatpush1.bf16.msra.mxu0 %v2110
    %2155 = vmatprep.subr.bf16.mxu0 0
    %2156 = vmatpush1.bf16.msra.mxu0 %v2111
    %2157 = vmatprep.subr.bf16.mxu0 0
    %2158 = vmatpush1.bf16.msra.mxu0 %v2131
    %2159 = vmatprep.subr.bf16.mxu0 0
    %2160 = vmatpush1.bf16.msra.mxu0 0
    %2161 = vmatprep.subr.bf16.mxu0 0
    %2162 = vmatpush1.bf16.msra.mxu0 0
    %2163 = vmatprep.subr.bf16.mxu0 0
    %2164 = vmatpush1.bf16.msra.mxu0 0
    %2165 = vmatprep.mubr.bf16.mxu0 %v2127
    %2166 = vmatmul.mubr.bf16.gmra.mrb[0].mxu0 %v2016
    %v2167 = vpop.f32.mrb[0].mxu0
    %v2168 = vadd.f32 %v2048, %v2167
    %v2169 = vpop.f32.mrb[0].mxu0
    %v2170 = vpop.f32.mrb[0].mxu0
    %v2171 = vpop.f32.mrb[0].mxu0
    %2172 = vdwg.mxu0
    %v2173 = vlaneseq
    %v2174 = vand.u32 %v2173, 127
    %vm2175 = vcmp.lt.s32.totalorder %v2174, 20
    %v2176 = vsel %vm2175, 1, 0
    %v2177 = vcvt.s32.f32 %v2176
    %v2178 = vmul.f32 %v2168, %v2177
    %v2179 = vld [vmem:[%s1] sm:$0xff]
    %v2180 = vmul.f32 %v2168, 0.5
    %v2181 = vmul.f32 %v2180, 1.442695
    %v2182 = vpow.pop %v2181
    %v2183 = vmul.f32 %v2179, %v2182
    %v2184 = vadd.f32 %v2178, %v2183
    %v2185 = vpack.c.bf16 %v2184, %v2184
    %v2186 = vld [vmem:[%s8] sm:$0xff]
    %v2187 = vld [vmem:[%s8 + $0x8] sm:$0xff]
    %v2188 = vld [vmem:[%s8 + $0x10] sm:$0xff]
    %v2189 = vld [vmem:[%s8 + $0x18] sm:$0xff]
    %v2190 = vld [vmem:[%s8 + $0x20] sm:$0xff]
    %v2191 = vld [vmem:[%s8 + $0x28] sm:$0xff]
    %v2192 = vld [vmem:[%s8 + $0x30] sm:$0xff]
    %v2193 = vld [vmem:[%s8 + $0x38] sm:$0xff]
    %v2194 = vld [vmem:[%s8 + $0x40] sm:$0xff]
    %v2195 = vld [vmem:[%s8 + $0x48] sm:$0xff]
    %v2196 = vld [vmem:[%s8 + $0x50] sm:$0xff]
    %v2197 = vld [vmem:[%s8 + $0x58] sm:$0xff]
    %v2198 = vld [vmem:[%s8 + $0x60] sm:$0xff]
    %v2199 = vld [vmem:[%s8 + $0x68] sm:$0xff]
    %v2200 = vld [vmem:[%s8 + $0x70] sm:$0xff]
    %v2201 = vld [vmem:[%s8 + $0x78] sm:$0xff]
    %v2202 = vld [vmem:[%s9] sm:$0x3]
    %v2204 = vlaneseq
    %v2205 = vshrl.u32 %v2204, 7
    %v2206 = vsub.s32 0, %v2205
    %v2207 = vrot.slane %v2202, %v2206
    %v2208 = vlaneseq
    %v2209 = vshrl.u32 %v2208, 7
    %v2210 = vsub.s32 1, %v2209
    %v2211 = vrot.slane %v2202, %v2210
    %v2230 = vunpack.c.l.b16 %v2186
    %v2231 = vunpack.c.h.b16 %v2186
    %v2232 = vunpack.c.l.b16 %v2187
    %v2233 = vunpack.c.h.b16 %v2187
    %v2234 = vunpack.c.l.b16 %v2188
    %v2235 = vunpack.c.h.b16 %v2188
    %v2236 = vunpack.c.l.b16 %v2189
    %v2237 = vunpack.c.h.b16 %v2189
    %v2238 = vunpack.c.l.b16 %v2190
    %v2239 = vunpack.c.h.b16 %v2190
    %v2240 = vunpack.c.l.b16 %v2191
    %v2241 = vunpack.c.h.b16 %v2191
    %v2242 = vunpack.c.l.b16 %v2192
    %v2243 = vunpack.c.h.b16 %v2192
    %v2244 = vunpack.c.l.b16 %v2193
    %v2245 = vunpack.c.h.b16 %v2193
    %v2246 = vunpack.c.l.b16 %v2194
    %v2247 = vunpack.c.h.b16 %v2194
    %v2248 = vunpack.c.l.b16 %v2195
    %v2249 = vunpack.c.h.b16 %v2195
    %v2250 = vunpack.c.l.b16 %v2196
    %v2251 = vunpack.c.h.b16 %v2196
    %v2252 = vunpack.c.l.b16 %v2197
    %v2253 = vunpack.c.h.b16 %v2197
    %v2254 = vunpack.c.l.b16 %v2198
    %v2255 = vunpack.c.h.b16 %v2198
    %v2256 = vunpack.c.l.b16 %v2199
    %v2257 = vunpack.c.h.b16 %v2199
    %v2258 = vunpack.c.l.b16 %v2200
    %v2259 = vunpack.c.h.b16 %v2200
    %v2260 = vunpack.c.l.b16 %v2201
    %v2261 = vunpack.c.h.b16 %v2201
    %v2262 = vpack.c.b16 %v2232, %v2230
    %v2263 = vpack.c.b16 %v2233, %v2231
    %v2264 = vpack.c.b16 %v2236, %v2234
    %v2265 = vpack.c.b16 %v2237, %v2235
    %v2266 = vpack.c.b16 %v2240, %v2238
    %v2267 = vpack.c.b16 %v2241, %v2239
    %v2268 = vpack.c.b16 %v2244, %v2242
    %v2269 = vpack.c.b16 %v2245, %v2243
    %v2270 = vpack.c.b16 %v2248, %v2246
    %v2271 = vpack.c.b16 %v2249, %v2247
    %v2272 = vpack.c.b16 %v2252, %v2250
    %v2273 = vpack.c.b16 %v2253, %v2251
    %v2274 = vpack.c.b16 %v2256, %v2254
    %v2275 = vpack.c.b16 %v2257, %v2255
    %v2276 = vpack.c.b16 %v2260, %v2258
    %v2277 = vpack.c.b16 %v2261, %v2259
    %2294 = vmatprep.subr.bf16.mxu0 %v2263
    %2295 = vmatpush1.bf16.msra.mxu0 %v2262
    %2296 = vmatprep.subr.bf16.mxu0 %v2265
    %2297 = vmatpush1.bf16.msra.mxu0 %v2264
    %2298 = vmatprep.subr.bf16.mxu0 %v2267
    %2299 = vmatpush1.bf16.msra.mxu0 %v2266
    %2300 = vmatprep.subr.bf16.mxu0 %v2269
    %2301 = vmatpush1.bf16.msra.mxu0 %v2268
    %2302 = vmatprep.subr.bf16.mxu0 %v2271
    %2303 = vmatpush1.bf16.msra.mxu0 %v2270
    %2304 = vmatprep.subr.bf16.mxu0 %v2273
    %2305 = vmatpush1.bf16.msra.mxu0 %v2272
    %2306 = vmatprep.subr.bf16.mxu0 %v2275
    %2307 = vmatpush1.bf16.msra.mxu0 %v2274
    %2308 = vmatprep.subr.bf16.mxu0 %v2277
    %2309 = vmatpush1.bf16.msra.mxu0 %v2276
    %2310 = vmatprep.subr.bf16.mxu0 0
    %2311 = vmatpush1.bf16.msra.mxu0 0
    %2312 = vmatprep.subr.bf16.mxu0 0
    %2313 = vmatpush1.bf16.msra.mxu0 0
    %2314 = vmatprep.subr.bf16.mxu0 0
    %2315 = vmatpush1.bf16.msra.mxu0 0
    %2316 = vmatprep.subr.bf16.mxu0 0
    %2317 = vmatpush1.bf16.msra.mxu0 0
    %2318 = vmatprep.subr.bf16.mxu0 0
    %2319 = vmatpush1.bf16.msra.mxu0 0
    %2320 = vmatprep.subr.bf16.mxu0 0
    %2321 = vmatpush1.bf16.msra.mxu0 0
    %2322 = vmatprep.subr.bf16.mxu0 0
    %2323 = vmatpush1.bf16.msra.mxu0 0
    %2324 = vmatprep.subr.bf16.mxu0 0
    %2325 = vmatpush1.bf16.msra.mxu0 0
    %2326 = vmatprep.mubr.bf16.mxu0 0
    %2327 = vmatmul.mubr.bf16.gmra.mrb[0].mxu0 %v2185
    %v2328 = vpop.f32.mrb[0].mxu0
    %v2329 = vadd.f32 %v2207, %v2328
    %v2330 = vpop.f32.mrb[0].mxu0
    %v2331 = vadd.f32 %v2211, %v2330
    %v2332 = vpop.f32.mrb[0].mxu0
    %v2333 = vpop.f32.mrb[0].mxu0
    %2334 = vdwg.mxu0
    %v2335 = vmax.f32 %v2329, 0.0
    %v2336 = vmax.f32 %v2331, 0.0
    %v2337 = vpack.c.bf16 %v2335, %v2335
    %v2338 = vpack.c.bf16 %v2336, %v2336
    %v2339 = vld [vmem:[%s10] sm:$0xff]
    %v2340 = vld [vmem:[%s10 + $0x8] sm:$0xff]
    %v2341 = vld [vmem:[%s10 + $0x10] sm:$0xff]
    %v2342 = vld [vmem:[%s10 + $0x18] sm:$0xff]
    %v2343 = vld [vmem:[%s10 + $0x20] sm:$0xff]
    %v2344 = vld [vmem:[%s10 + $0x28] sm:$0xff]
    %v2345 = vld [vmem:[%s10 + $0x30] sm:$0xff]
    %v2346 = vld [vmem:[%s10 + $0x38] sm:$0xff]
    %v2347 = vld [vmem:[%s10 + $0x40] sm:$0xff]
    %v2348 = vld [vmem:[%s10 + $0x48] sm:$0xff]
    %v2349 = vld [vmem:[%s10 + $0x50] sm:$0xff]
    %v2350 = vld [vmem:[%s10 + $0x58] sm:$0xff]
    %v2351 = vld [vmem:[%s10 + $0x60] sm:$0xff]
    %v2352 = vld [vmem:[%s10 + $0x68] sm:$0xff]
    %v2353 = vld [vmem:[%s10 + $0x70] sm:$0xff]
    %v2354 = vld [vmem:[%s10 + $0x78] sm:$0xff]
    %v2355 = vld [vmem:[%s10 + $0x80] sm:$0xff]
    %v2356 = vld [vmem:[%s10 + $0x88] sm:$0xff]
    %v2357 = vld [vmem:[%s10 + $0x90] sm:$0xff]
    %v2358 = vld [vmem:[%s10 + $0x98] sm:$0xff]
    %v2359 = vld [vmem:[%s10 + $0xa0] sm:$0xff]
    %v2360 = vld [vmem:[%s10 + $0xa8] sm:$0xff]
    %v2361 = vld [vmem:[%s10 + $0xb0] sm:$0xff]
    %v2362 = vld [vmem:[%s10 + $0xb8] sm:$0xff]
    %v2363 = vld [vmem:[%s10 + $0xc0] sm:$0xff]
    %v2364 = vld [vmem:[%s10 + $0xc8] sm:$0xff]
    %v2365 = vld [vmem:[%s10 + $0xd0] sm:$0xff]
    %v2366 = vld [vmem:[%s10 + $0xd8] sm:$0xff]
    %v2367 = vld [vmem:[%s10 + $0xe0] sm:$0xff]
    %v2368 = vld [vmem:[%s10 + $0xe8] sm:$0xff]
    %v2369 = vld [vmem:[%s10 + $0xf0] sm:$0xff]
    %v2370 = vld [vmem:[%s10 + $0xf8] sm:$0xff]
    %v2371 = vld [vmem:[%s10 + $0x100] sm:$0xff]
    %v2372 = vld [vmem:[%s10 + $0x108] sm:$0xff]
    %v2373 = vld [vmem:[%s10 + $0x110] sm:$0xff]
    %v2374 = vld [vmem:[%s10 + $0x118] sm:$0xff]
    %v2375 = vld [vmem:[%s10 + $0x120] sm:$0xff]
    %v2376 = vld [vmem:[%s10 + $0x128] sm:$0xff]
    %v2377 = vld [vmem:[%s10 + $0x130] sm:$0xff]
    %v2378 = vld [vmem:[%s10 + $0x138] sm:$0xff]
    %v2379 = vld [vmem:[%s10 + $0x140] sm:$0xff]
    %v2380 = vld [vmem:[%s10 + $0x148] sm:$0xff]
    %v2381 = vld [vmem:[%s10 + $0x150] sm:$0xff]
    %v2382 = vld [vmem:[%s10 + $0x158] sm:$0xff]
    %v2383 = vld [vmem:[%s10 + $0x160] sm:$0xff]
    %v2384 = vld [vmem:[%s10 + $0x168] sm:$0xff]
    %v2385 = vld [vmem:[%s10 + $0x170] sm:$0xff]
    %v2386 = vld [vmem:[%s10 + $0x178] sm:$0xff]
    %v2387 = vld [vmem:[%s10 + $0x180] sm:$0xff]
    %v2388 = vld [vmem:[%s10 + $0x188] sm:$0xff]
    %v2389 = vld [vmem:[%s11] sm:$0xf]
    %v2391 = vlaneseq
    %v2392 = vshrl.u32 %v2391, 7
    %v2393 = vsub.s32 0, %v2392
    %v2394 = vrot.slane %v2389, %v2393
    %v2395 = vlaneseq
    %v2396 = vshrl.u32 %v2395, 7
    %v2397 = vsub.s32 1, %v2396
    %v2398 = vrot.slane %v2389, %v2397
    %v2399 = vlaneseq
    %v2400 = vshrl.u32 %v2399, 7
    %v2401 = vsub.s32 2, %v2400
    %v2402 = vrot.slane %v2389, %v2401
    %v2403 = vlaneseq
    %v2404 = vshrl.u32 %v2403, 7
    %v2405 = vsub.s32 3, %v2404
    %v2406 = vrot.slane %v2389, %v2405
    %v2461 = vunpack.c.l.b16 %v2339
    %v2462 = vunpack.c.h.b16 %v2339
    %v2463 = vunpack.c.l.b16 %v2340
    %v2464 = vunpack.c.h.b16 %v2340
    %v2465 = vunpack.c.l.b16 %v2341
    %v2466 = vunpack.c.h.b16 %v2341
    %v2467 = vunpack.c.l.b16 %v2342
    %v2468 = vunpack.c.h.b16 %v2342
    %v2469 = vunpack.c.l.b16 %v2343
    %v2470 = vunpack.c.h.b16 %v2343
    %v2471 = vunpack.c.l.b16 %v2344
    %v2472 = vunpack.c.h.b16 %v2344
    %v2473 = vunpack.c.l.b16 %v2345
    %v2474 = vunpack.c.h.b16 %v2345
    %v2475 = vunpack.c.l.b16 %v2346
    %v2476 = vunpack.c.h.b16 %v2346
    %v2477 = vunpack.c.l.b16 %v2347
    %v2478 = vunpack.c.h.b16 %v2347
    %v2479 = vunpack.c.l.b16 %v2348
    %v2480 = vunpack.c.h.b16 %v2348
    %v2481 = vunpack.c.l.b16 %v2349
    %v2482 = vunpack.c.h.b16 %v2349
    %v2483 = vunpack.c.l.b16 %v2350
    %v2484 = vunpack.c.h.b16 %v2350
    %v2485 = vunpack.c.l.b16 %v2351
    %v2486 = vunpack.c.h.b16 %v2351
    %v2487 = vunpack.c.l.b16 %v2352
    %v2488 = vunpack.c.h.b16 %v2352
    %v2489 = vunpack.c.l.b16 %v2353
    %v2490 = vunpack.c.h.b16 %v2353
    %v2491 = vunpack.c.l.b16 %v2354
    %v2492 = vunpack.c.h.b16 %v2354
    %v2493 = vunpack.c.l.b16 %v2355
    %v2494 = vunpack.c.h.b16 %v2355
    %v2495 = vunpack.c.l.b16 %v2356
    %v2496 = vunpack.c.h.b16 %v2356
    %v2497 = vunpack.c.l.b16 %v2357
    %v2498 = vunpack.c.h.b16 %v2357
    %v2499 = vunpack.c.l.b16 %v2358
    %v2500 = vunpack.c.h.b16 %v2358
    %v2501 = vunpack.c.l.b16 %v2359
    %v2502 = vunpack.c.h.b16 %v2359
    %v2503 = vunpack.c.l.b16 %v2360
    %v2504 = vunpack.c.h.b16 %v2360
    %v2505 = vunpack.c.l.b16 %v2361
    %v2506 = vunpack.c.h.b16 %v2361
    %v2507 = vunpack.c.l.b16 %v2362
    %v2508 = vunpack.c.h.b16 %v2362
    %v2509 = vunpack.c.l.b16 %v2363
    %v2510 = vunpack.c.h.b16 %v2363
    %v2511 = vunpack.c.l.b16 %v2364
    %v2512 = vunpack.c.h.b16 %v2364
    %v2513 = vunpack.c.l.b16 %v2365
    %v2514 = vunpack.c.h.b16 %v2365
    %v2515 = vunpack.c.l.b16 %v2366
    %v2516 = vunpack.c.h.b16 %v2366
    %v2517 = vunpack.c.l.b16 %v2367
    %v2518 = vunpack.c.h.b16 %v2367
    %v2519 = vunpack.c.l.b16 %v2368
    %v2520 = vunpack.c.h.b16 %v2368
    %v2521 = vunpack.c.l.b16 %v2369
    %v2522 = vunpack.c.h.b16 %v2369
    %v2523 = vunpack.c.l.b16 %v2370
    %v2524 = vunpack.c.h.b16 %v2370
    %v2525 = vunpack.c.l.b16 %v2371
    %v2526 = vunpack.c.h.b16 %v2371
    %v2527 = vunpack.c.l.b16 %v2372
    %v2528 = vunpack.c.h.b16 %v2372
    %v2529 = vunpack.c.l.b16 %v2373
    %v2530 = vunpack.c.h.b16 %v2373
    %v2531 = vunpack.c.l.b16 %v2374
    %v2532 = vunpack.c.h.b16 %v2374
    %v2533 = vunpack.c.l.b16 %v2375
    %v2534 = vunpack.c.h.b16 %v2375
    %v2535 = vunpack.c.l.b16 %v2376
    %v2536 = vunpack.c.h.b16 %v2376
    %v2537 = vunpack.c.l.b16 %v2377
    %v2538 = vunpack.c.h.b16 %v2377
    %v2539 = vunpack.c.l.b16 %v2378
    %v2540 = vunpack.c.h.b16 %v2378
    %v2541 = vunpack.c.l.b16 %v2379
    %v2542 = vunpack.c.h.b16 %v2379
    %v2543 = vunpack.c.l.b16 %v2380
    %v2544 = vunpack.c.h.b16 %v2380
    %v2545 = vunpack.c.l.b16 %v2381
    %v2546 = vunpack.c.h.b16 %v2381
    %v2547 = vunpack.c.l.b16 %v2382
    %v2548 = vunpack.c.h.b16 %v2382
    %v2549 = vunpack.c.l.b16 %v2383
    %v2550 = vunpack.c.h.b16 %v2383
    %v2551 = vunpack.c.l.b16 %v2384
    %v2552 = vunpack.c.h.b16 %v2384
    %v2553 = vunpack.c.l.b16 %v2385
    %v2554 = vunpack.c.h.b16 %v2385
    %v2555 = vunpack.c.l.b16 %v2386
    %v2556 = vunpack.c.h.b16 %v2386
    %v2557 = vunpack.c.l.b16 %v2387
    %v2558 = vunpack.c.h.b16 %v2387
    %v2559 = vunpack.c.l.b16 %v2388
    %v2560 = vunpack.c.h.b16 %v2388
    %v2561 = vpack.c.b16 %v2465, %v2461
    %v2562 = vpack.c.b16 %v2466, %v2462
    %v2563 = vpack.c.b16 %v2467, %v2463
    %v2564 = vpack.c.b16 %v2468, %v2464
    %v2565 = vpack.c.b16 %v2473, %v2469
    %v2566 = vpack.c.b16 %v2474, %v2470
    %v2567 = vpack.c.b16 %v2475, %v2471
    %v2568 = vpack.c.b16 %v2476, %v2472
    %v2569 = vpack.c.b16 %v2481, %v2477
    %v2570 = vpack.c.b16 %v2482, %v2478
    %v2571 = vpack.c.b16 %v2483, %v2479
    %v2572 = vpack.c.b16 %v2484, %v2480
    %v2573 = vpack.c.b16 %v2489, %v2485
    %v2574 = vpack.c.b16 %v2490, %v2486
    %v2575 = vpack.c.b16 %v2491, %v2487
    %v2576 = vpack.c.b16 %v2492, %v2488
    %v2577 = vpack.c.b16 %v2497, %v2493
    %v2578 = vpack.c.b16 %v2498, %v2494
    %v2579 = vpack.c.b16 %v2499, %v2495
    %v2580 = vpack.c.b16 %v2500, %v2496
    %v2581 = vpack.c.b16 %v2505, %v2501
    %v2582 = vpack.c.b16 %v2506, %v2502
    %v2583 = vpack.c.b16 %v2507, %v2503
    %v2584 = vpack.c.b16 %v2508, %v2504
    %v2585 = vpack.c.b16 %v2513, %v2509
    %v2586 = vpack.c.b16 %v2514, %v2510
    %v2587 = vpack.c.b16 %v2515, %v2511
    %v2588 = vpack.c.b16 %v2516, %v2512
    %v2589 = vpack.c.b16 %v2521, %v2517
    %v2590 = vpack.c.b16 %v2522, %v2518
    %v2591 = vpack.c.b16 %v2523, %v2519
    %v2592 = vpack.c.b16 %v2524, %v2520
    %v2593 = vpack.c.b16 %v2529, %v2525
    %v2594 = vpack.c.b16 %v2530, %v2526
    %v2595 = vpack.c.b16 %v2531, %v2527
    %v2596 = vpack.c.b16 %v2532, %v2528
    %v2597 = vpack.c.b16 %v2537, %v2533
    %v2598 = vpack.c.b16 %v2538, %v2534
    %v2599 = vpack.c.b16 %v2539, %v2535
    %v2600 = vpack.c.b16 %v2540, %v2536
    %v2601 = vpack.c.b16 %v2545, %v2541
    %v2602 = vpack.c.b16 %v2546, %v2542
    %v2603 = vpack.c.b16 %v2547, %v2543
    %v2604 = vpack.c.b16 %v2548, %v2544
    %v2605 = vpack.c.b16 %v2553, %v2549
    %v2606 = vpack.c.b16 %v2554, %v2550
    %v2607 = vpack.c.b16 %v2555, %v2551
    %v2608 = vpack.c.b16 %v2556, %v2552
    %v2609 = vpack.c.b16 %v2557, %v2557
    %v2610 = vpack.c.b16 %v2558, %v2558
    %v2611 = vpack.c.b16 %v2559, %v2559
    %v2612 = vpack.c.b16 %v2560, %v2560
    %v2662 = vsel %vm2125, %v2338, 0
    %v2665 = vsel %vm2129, %v2609, 0
    %v2668 = vsel %vm2129, %v2610, 0
    %v2671 = vsel %vm2129, %v2611, 0
    %v2674 = vsel %vm2129, %v2612, 0
    %2676 = vmatprep.subr.bf16.mxu0 %v2562
    %2677 = vmatpush1.bf16.msra.mxu0 %v2561
    %2678 = vmatprep.subr.bf16.mxu0 %v2566
    %2679 = vmatpush1.bf16.msra.mxu0 %v2565
    %2680 = vmatprep.subr.bf16.mxu0 %v2570
    %2681 = vmatpush1.bf16.msra.mxu0 %v2569
    %2682 = vmatprep.subr.bf16.mxu0 %v2574
    %2683 = vmatpush1.bf16.msra.mxu0 %v2573
    %2684 = vmatprep.subr.bf16.mxu0 %v2578
    %2685 = vmatpush1.bf16.msra.mxu0 %v2577
    %2686 = vmatprep.subr.bf16.mxu0 %v2582
    %2687 = vmatpush1.bf16.msra.mxu0 %v2581
    %2688 = vmatprep.subr.bf16.mxu0 %v2586
    %2689 = vmatpush1.bf16.msra.mxu0 %v2585
    %2690 = vmatprep.subr.bf16.mxu0 %v2590
    %2691 = vmatpush1.bf16.msra.mxu0 %v2589
    %2692 = vmatprep.subr.bf16.mxu0 %v2594
    %2693 = vmatpush1.bf16.msra.mxu0 %v2593
    %2694 = vmatprep.subr.bf16.mxu0 %v2598
    %2695 = vmatpush1.bf16.msra.mxu0 %v2597
    %2696 = vmatprep.subr.bf16.mxu0 %v2602
    %2697 = vmatpush1.bf16.msra.mxu0 %v2601
    %2698 = vmatprep.subr.bf16.mxu0 %v2606
    %2699 = vmatpush1.bf16.msra.mxu0 %v2605
    %2700 = vmatprep.subr.bf16.mxu0 %v2668
    %2701 = vmatpush1.bf16.msra.mxu0 %v2665
    %2702 = vmatprep.subr.bf16.mxu0 0
    %2703 = vmatpush1.bf16.msra.mxu0 0
    %2704 = vmatprep.subr.bf16.mxu0 0
    %2705 = vmatpush1.bf16.msra.mxu0 0
    %2706 = vmatprep.subr.bf16.mxu0 0
    %2707 = vmatpush1.bf16.msra.mxu0 0
    %2708 = vmatprep.mubr.bf16.mxu0 %v2662
    %2709 = vmatmul.mubr.bf16.gmra.mrb[0].mxu0 %v2337
    %v2710 = vpop.f32.mrb[0].mxu0
    %v2711 = vadd.f32 %v2394, %v2710
    %v2712 = vpop.f32.mrb[0].mxu0
    %v2713 = vadd.f32 %v2398, %v2712
    %v2714 = vpop.f32.mrb[0].mxu0
    %v2715 = vpop.f32.mrb[0].mxu0
    %2716 = vdwg.mxu0
    %2717 = vmatprep.subr.bf16.mxu0 %v2564
    %2718 = vmatpush1.bf16.msra.mxu0 %v2563
    %2719 = vmatprep.subr.bf16.mxu0 %v2568
    %2720 = vmatpush1.bf16.msra.mxu0 %v2567
    %2721 = vmatprep.subr.bf16.mxu0 %v2572
    %2722 = vmatpush1.bf16.msra.mxu0 %v2571
    %2723 = vmatprep.subr.bf16.mxu0 %v2576
    %2724 = vmatpush1.bf16.msra.mxu0 %v2575
    %2725 = vmatprep.subr.bf16.mxu0 %v2580
    %2726 = vmatpush1.bf16.msra.mxu0 %v2579
    %2727 = vmatprep.subr.bf16.mxu0 %v2584
    %2728 = vmatpush1.bf16.msra.mxu0 %v2583
    %2729 = vmatprep.subr.bf16.mxu0 %v2588
    %2730 = vmatpush1.bf16.msra.mxu0 %v2587
    %2731 = vmatprep.subr.bf16.mxu0 %v2592
    %2732 = vmatpush1.bf16.msra.mxu0 %v2591
    %2733 = vmatprep.subr.bf16.mxu0 %v2596
    %2734 = vmatpush1.bf16.msra.mxu0 %v2595
    %2735 = vmatprep.subr.bf16.mxu0 %v2600
    %2736 = vmatpush1.bf16.msra.mxu0 %v2599
    %2737 = vmatprep.subr.bf16.mxu0 %v2604
    %2738 = vmatpush1.bf16.msra.mxu0 %v2603
    %2739 = vmatprep.subr.bf16.mxu0 %v2608
    %2740 = vmatpush1.bf16.msra.mxu0 %v2607
    %2741 = vmatprep.subr.bf16.mxu0 %v2674
    %2742 = vmatpush1.bf16.msra.mxu0 %v2671
    %2743 = vmatprep.subr.bf16.mxu0 0
    %2744 = vmatpush1.bf16.msra.mxu0 0
    %2745 = vmatprep.subr.bf16.mxu0 0
    %2746 = vmatpush1.bf16.msra.mxu0 0
    %2747 = vmatprep.subr.bf16.mxu0 0
    %2748 = vmatpush1.bf16.msra.mxu0 0
    %2749 = vmatprep.mubr.bf16.mxu0 %v2662
    %2750 = vmatmul.mubr.bf16.gmra.mrb[0].mxu0 %v2337
    %v2751 = vpop.f32.mrb[0].mxu0
    %v2752 = vadd.f32 %v2402, %v2751
    %v2753 = vpop.f32.mrb[0].mxu0
    %v2754 = vadd.f32 %v2406, %v2753
    %v2755 = vpop.f32.mrb[0].mxu0
    %v2756 = vpop.f32.mrb[0].mxu0
    %2757 = vdwg.mxu0
    %v2758 = vmax.f32 %v2711, 0.0
    %v2759 = vmax.f32 %v2713, 0.0
    %v2760 = vmax.f32 %v2752, 0.0
    %v2761 = vmax.f32 %v2754, 0.0
    %v2762 = vpack.c.bf16 %v2758, %v2758
    %v2763 = vpack.c.bf16 %v2759, %v2759
    %v2764 = vpack.c.bf16 %v2760, %v2760
    %v2765 = vpack.c.bf16 %v2761, %v2761
    %v2766 = vld [vmem:[%s12] sm:$0xff]
    %v2767 = vld [vmem:[%s12 + $0x8] sm:$0xff]
    %v2768 = vld [vmem:[%s12 + $0x10] sm:$0xff]
    %v2769 = vld [vmem:[%s12 + $0x18] sm:$0xf]
    %v2770 = vld [vmem:[%s12 + $0x1c] sm:$0xff]
    %v2771 = vld [vmem:[%s12 + $0x24] sm:$0xff]
    %v2772 = vld [vmem:[%s12 + $0x2c] sm:$0xff]
    %v2773 = vld [vmem:[%s12 + $0x34] sm:$0xf]
    %v2774 = vld [vmem:[%s12 + $0x38] sm:$0xff]
    %v2775 = vld [vmem:[%s12 + $0x40] sm:$0xff]
    %v2776 = vld [vmem:[%s12 + $0x48] sm:$0xff]
    %v2777 = vld [vmem:[%s12 + $0x50] sm:$0xf]
    %v2778 = vld [vmem:[%s12 + $0x54] sm:$0xff]
    %v2779 = vld [vmem:[%s12 + $0x5c] sm:$0xff]
    %v2780 = vld [vmem:[%s12 + $0x64] sm:$0xff]
    %v2781 = vld [vmem:[%s12 + $0x6c] sm:$0xf]
    %v2782 = vld [vmem:[%s12 + $0x70] sm:$0xff]
    %v2783 = vld [vmem:[%s12 + $0x78] sm:$0xff]
    %v2784 = vld [vmem:[%s12 + $0x80] sm:$0xff]
    %v2785 = vld [vmem:[%s12 + $0x88] sm:$0xf]
    %v2786 = vld [vmem:[%s12 + $0x8c] sm:$0xff]
    %v2787 = vld [vmem:[%s12 + $0x94] sm:$0xff]
    %v2788 = vld [vmem:[%s12 + $0x9c] sm:$0xff]
    %v2789 = vld [vmem:[%s12 + $0xa4] sm:$0xf]
    %v2790 = vld [vmem:[%s12 + $0xa8] sm:$0xff]
    %v2791 = vld [vmem:[%s12 + $0xb0] sm:$0xff]
    %v2792 = vld [vmem:[%s12 + $0xb8] sm:$0xff]
    %v2793 = vld [vmem:[%s12 + $0xc0] sm:$0xf]
    %v2794 = vld [vmem:[%s12 + $0xc4] sm:$0xff]
    %v2795 = vld [vmem:[%s12 + $0xcc] sm:$0xff]
    %v2796 = vld [vmem:[%s12 + $0xd4] sm:$0xff]
    %v2797 = vld [vmem:[%s12 + $0xdc] sm:$0xf]
    %v2798 = vld [vmem:[%s12 + $0xe0] sm:$0xff]
    %v2799 = vld [vmem:[%s12 + $0xe8] sm:$0xff]
    %v2800 = vld [vmem:[%s12 + $0xf0] sm:$0xff]
    %v2801 = vld [vmem:[%s12 + $0xf8] sm:$0xf]
    %v2802 = vld [vmem:[%s12 + $0xfc] sm:$0xff]
    %v2803 = vld [vmem:[%s12 + $0x104] sm:$0xff]
    %v2804 = vld [vmem:[%s12 + $0x10c] sm:$0xff]
    %v2805 = vld [vmem:[%s12 + $0x114] sm:$0xf]
    %v2806 = vld [vmem:[%s12 + $0x118] sm:$0xff]
    %v2807 = vld [vmem:[%s12 + $0x120] sm:$0xff]
    %v2808 = vld [vmem:[%s12 + $0x128] sm:$0xff]
    %v2809 = vld [vmem:[%s12 + $0x130] sm:$0xf]
    %v2810 = vld [vmem:[%s12 + $0x134] sm:$0xff]
    %v2811 = vld [vmem:[%s12 + $0x13c] sm:$0xff]
    %v2812 = vld [vmem:[%s12 + $0x144] sm:$0xff]
    %v2813 = vld [vmem:[%s12 + $0x14c] sm:$0xf]
    %v2814 = vld [vmem:[%s12 + $0x150] sm:$0xff]
    %v2815 = vld [vmem:[%s12 + $0x158] sm:$0xff]
    %v2816 = vld [vmem:[%s12 + $0x160] sm:$0xff]
    %v2817 = vld [vmem:[%s12 + $0x168] sm:$0xf]
    %v2818 = vld [vmem:[%s12 + $0x16c] sm:$0xff]
    %v2819 = vld [vmem:[%s12 + $0x174] sm:$0xff]
    %v2820 = vld [vmem:[%s12 + $0x17c] sm:$0xff]
    %v2821 = vld [vmem:[%s12 + $0x184] sm:$0xf]
    %v2822 = vld [vmem:[%s12 + $0x188] sm:$0xff]
    %v2823 = vld [vmem:[%s12 + $0x190] sm:$0xff]
    %v2824 = vld [vmem:[%s12 + $0x198] sm:$0xff]
    %v2825 = vld [vmem:[%s12 + $0x1a0] sm:$0xf]
    %v2826 = vld [vmem:[%s12 + $0x1a4] sm:$0xff]
    %v2827 = vld [vmem:[%s12 + $0x1ac] sm:$0xff]
    %v2828 = vld [vmem:[%s12 + $0x1b4] sm:$0xff]
    %v2829 = vld [vmem:[%s12 + $0x1bc] sm:$0xf]
    %v2830 = vld [vmem:[%s12 + $0x1c0] sm:$0xff]
    %v2831 = vld [vmem:[%s12 + $0x1c8] sm:$0xff]
    %v2832 = vld [vmem:[%s12 + $0x1d0] sm:$0xff]
    %v2833 = vld [vmem:[%s12 + $0x1d8] sm:$0xf]
    %v2834 = vld [vmem:[%s12 + $0x1dc] sm:$0xff]
    %v2835 = vld [vmem:[%s12 + $0x1e4] sm:$0xff]
    %v2836 = vld [vmem:[%s12 + $0x1ec] sm:$0xff]
    %v2837 = vld [vmem:[%s12 + $0x1f4] sm:$0xf]
    %v2838 = vld [vmem:[%s12 + $0x1f8] sm:$0xff]
    %v2839 = vld [vmem:[%s12 + $0x200] sm:$0xff]
    %v2840 = vld [vmem:[%s12 + $0x208] sm:$0xff]
    %v2841 = vld [vmem:[%s12 + $0x210] sm:$0xf]
    %v2842 = vld [vmem:[%s12 + $0x214] sm:$0xff]
    %v2843 = vld [vmem:[%s12 + $0x21c] sm:$0xff]
    %v2844 = vld [vmem:[%s12 + $0x224] sm:$0xff]
    %v2845 = vld [vmem:[%s12 + $0x22c] sm:$0xf]
    %v2846 = vld [vmem:[%s12 + $0x230] sm:$0xff]
    %v2847 = vld [vmem:[%s12 + $0x238] sm:$0xff]
    %v2848 = vld [vmem:[%s12 + $0x240] sm:$0xff]
    %v2849 = vld [vmem:[%s12 + $0x248] sm:$0xf]
    %v2850 = vld [vmem:[%s12 + $0x24c] sm:$0xff]
    %v2851 = vld [vmem:[%s12 + $0x254] sm:$0xff]
    %v2852 = vld [vmem:[%s12 + $0x25c] sm:$0xff]
    %v2853 = vld [vmem:[%s12 + $0x264] sm:$0xf]
    %v2854 = vld [vmem:[%s12 + $0x268] sm:$0xff]
    %v2855 = vld [vmem:[%s12 + $0x270] sm:$0xff]
    %v2856 = vld [vmem:[%s12 + $0x278] sm:$0xff]
    %v2857 = vld [vmem:[%s12 + $0x280] sm:$0xf]
    %v2858 = vld [vmem:[%s12 + $0x284] sm:$0xff]
    %v2859 = vld [vmem:[%s12 + $0x28c] sm:$0xff]
    %v2860 = vld [vmem:[%s12 + $0x294] sm:$0xff]
    %v2861 = vld [vmem:[%s12 + $0x29c] sm:$0xf]
    %v2862 = vld [vmem:[%s12 + $0x2a0] sm:$0xff]
    %v2863 = vld [vmem:[%s12 + $0x2a8] sm:$0xff]
    %v2864 = vld [vmem:[%s12 + $0x2b0] sm:$0xff]
    %v2865 = vld [vmem:[%s12 + $0x2b8] sm:$0xf]
    %v2866 = vld [vmem:[%s12 + $0x2bc] sm:$0xff]
    %v2867 = vld [vmem:[%s12 + $0x2c4] sm:$0xff]
    %v2868 = vld [vmem:[%s12 + $0x2cc] sm:$0xff]
    %v2869 = vld [vmem:[%s12 + $0x2d4] sm:$0xf]
    %v2870 = vld [vmem:[%s12 + $0x2d8] sm:$0xff]
    %v2871 = vld [vmem:[%s12 + $0x2e0] sm:$0xff]
    %v2872 = vld [vmem:[%s12 + $0x2e8] sm:$0xff]
    %v2873 = vld [vmem:[%s12 + $0x2f0] sm:$0xf]
    %v2874 = vld [vmem:[%s12 + $0x2f4] sm:$0xff]
    %v2875 = vld [vmem:[%s12 + $0x2fc] sm:$0xff]
    %v2876 = vld [vmem:[%s12 + $0x304] sm:$0xff]
    %v2877 = vld [vmem:[%s12 + $0x30c] sm:$0xf]
    %v2878 = vld [vmem:[%s12 + $0x310] sm:$0xff]
    %v2879 = vld [vmem:[%s12 + $0x318] sm:$0xff]
    %v2880 = vld [vmem:[%s12 + $0x320] sm:$0xff]
    %v2881 = vld [vmem:[%s12 + $0x328] sm:$0xf]
    %v2882 = vld [vmem:[%s12 + $0x32c] sm:$0xff]
    %v2883 = vld [vmem:[%s12 + $0x334] sm:$0xff]
    %v2884 = vld [vmem:[%s12 + $0x33c] sm:$0xff]
    %v2885 = vld [vmem:[%s12 + $0x344] sm:$0xf]
    %v2886 = vld [vmem:[%s12 + $0x348] sm:$0xff]
    %v2887 = vld [vmem:[%s12 + $0x350] sm:$0xff]
    %v2888 = vld [vmem:[%s12 + $0x358] sm:$0xff]
    %v2889 = vld [vmem:[%s12 + $0x360] sm:$0xf]
    %v2890 = vld [vmem:[%s12 + $0x364] sm:$0xff]
    %v2891 = vld [vmem:[%s12 + $0x36c] sm:$0xff]
    %v2892 = vld [vmem:[%s12 + $0x374] sm:$0xff]
    %v2893 = vld [vmem:[%s12 + $0x37c] sm:$0xf]
    %v2894 = vld [vmem:[%s12 + $0x380] sm:$0xff]
    %v2895 = vld [vmem:[%s12 + $0x388] sm:$0xff]
    %v2896 = vld [vmem:[%s12 + $0x390] sm:$0xff]
    %v2897 = vld [vmem:[%s12 + $0x398] sm:$0xf]
    %v2898 = vld [vmem:[%s12 + $0x39c] sm:$0xff]
    %v2899 = vld [vmem:[%s12 + $0x3a4] sm:$0xff]
    %v2900 = vld [vmem:[%s12 + $0x3ac] sm:$0xff]
    %v2901 = vld [vmem:[%s12 + $0x3b4] sm:$0xf]
    %v2902 = vld [vmem:[%s12 + $0x3b8] sm:$0xff]
    %v2903 = vld [vmem:[%s12 + $0x3c0] sm:$0xff]
    %v2904 = vld [vmem:[%s12 + $0x3c8] sm:$0xff]
    %v2905 = vld [vmem:[%s12 + $0x3d0] sm:$0xf]
    %v2906 = vld [vmem:[%s12 + $0x3d4] sm:$0xff]
    %v2907 = vld [vmem:[%s12 + $0x3dc] sm:$0xff]
    %v2908 = vld [vmem:[%s12 + $0x3e4] sm:$0xff]
    %v2909 = vld [vmem:[%s12 + $0x3ec] sm:$0xf]
    %v2910 = vld [vmem:[%s12 + $0x3f0] sm:$0xff]
    %v2911 = vld [vmem:[%s12 + $0x3f8] sm:$0xff]
    %v2912 = vld [vmem:[%s12 + $0x400] sm:$0xff]
    %v2913 = vld [vmem:[%s12 + $0x408] sm:$0xf]
    %v2914 = vld [vmem:[%s12 + $0x40c] sm:$0xff]
    %v2915 = vld [vmem:[%s12 + $0x414] sm:$0xff]
    %v2916 = vld [vmem:[%s12 + $0x41c] sm:$0xff]
    %v2917 = vld [vmem:[%s12 + $0x424] sm:$0xf]
    %v2918 = vld [vmem:[%s12 + $0x428] sm:$0xff]
    %v2919 = vld [vmem:[%s12 + $0x430] sm:$0xff]
    %v2920 = vld [vmem:[%s12 + $0x438] sm:$0xff]
    %v2921 = vld [vmem:[%s12 + $0x440] sm:$0xf]
    %v2922 = vld [vmem:[%s12 + $0x444] sm:$0xff]
    %v2923 = vld [vmem:[%s12 + $0x44c] sm:$0xff]
    %v2924 = vld [vmem:[%s12 + $0x454] sm:$0xff]
    %v2925 = vld [vmem:[%s12 + $0x45c] sm:$0xf]
    %v2926 = vld [vmem:[%s12 + $0x460] sm:$0xff]
    %v2927 = vld [vmem:[%s12 + $0x468] sm:$0xff]
    %v2928 = vld [vmem:[%s12 + $0x470] sm:$0xff]
    %v2929 = vld [vmem:[%s12 + $0x478] sm:$0xf]
    %v2930 = vld [vmem:[%s12 + $0x47c] sm:$0xff]
    %v2931 = vld [vmem:[%s12 + $0x484] sm:$0xff]
    %v2932 = vld [vmem:[%s12 + $0x48c] sm:$0xff]
    %v2933 = vld [vmem:[%s12 + $0x494] sm:$0xf]
    %v2934 = vld [vmem:[%s12 + $0x498] sm:$0xff]
    %v2935 = vld [vmem:[%s12 + $0x4a0] sm:$0xff]
    %v2936 = vld [vmem:[%s12 + $0x4a8] sm:$0xff]
    %v2937 = vld [vmem:[%s12 + $0x4b0] sm:$0xf]
    %v2938 = vld [vmem:[%s12 + $0x4b4] sm:$0xff]
    %v2939 = vld [vmem:[%s12 + $0x4bc] sm:$0xff]
    %v2940 = vld [vmem:[%s12 + $0x4c4] sm:$0xff]
    %v2941 = vld [vmem:[%s12 + $0x4cc] sm:$0xf]
    %v2942 = vld [vmem:[%s12 + $0x4d0] sm:$0xff]
    %v2943 = vld [vmem:[%s12 + $0x4d8] sm:$0xff]
    %v2944 = vld [vmem:[%s12 + $0x4e0] sm:$0xff]
    %v2945 = vld [vmem:[%s12 + $0x4e8] sm:$0xf]
    %v2946 = vld [vmem:[%s12 + $0x4ec] sm:$0xff]
    %v2947 = vld [vmem:[%s12 + $0x4f4] sm:$0xff]
    %v2948 = vld [vmem:[%s12 + $0x4fc] sm:$0xff]
    %v2949 = vld [vmem:[%s12 + $0x504] sm:$0xf]
    %v2950 = vld [vmem:[%s12 + $0x508] sm:$0xff]
    %v2951 = vld [vmem:[%s12 + $0x510] sm:$0xff]
    %v2952 = vld [vmem:[%s12 + $0x518] sm:$0xff]
    %v2953 = vld [vmem:[%s12 + $0x520] sm:$0xf]
    %v2954 = vld [vmem:[%s12 + $0x524] sm:$0xff]
    %v2955 = vld [vmem:[%s12 + $0x52c] sm:$0xff]
    %v2956 = vld [vmem:[%s12 + $0x534] sm:$0xff]
    %v2957 = vld [vmem:[%s12 + $0x53c] sm:$0xf]
    %v2958 = vld [vmem:[%s12 + $0x540] sm:$0xff]
    %v2959 = vld [vmem:[%s12 + $0x548] sm:$0xff]
    %v2960 = vld [vmem:[%s12 + $0x550] sm:$0xff]
    %v2961 = vld [vmem:[%s12 + $0x558] sm:$0xf]
    %v2962 = vld [vmem:[%s12 + $0x55c] sm:$0xff]
    %v2963 = vld [vmem:[%s12 + $0x564] sm:$0xff]
    %v2964 = vld [vmem:[%s12 + $0x56c] sm:$0xff]
    %v2965 = vld [vmem:[%s12 + $0x574] sm:$0xf]
    %v2966 = vld [vmem:[%s13] sm:$0x7f]
    %v2968 = vlaneseq
    %v2969 = vshrl.u32 %v2968, 7
    %v2970 = vsub.s32 0, %v2969
    %v2971 = vrot.slane %v2966, %v2970
    %v2972 = vlaneseq
    %v2973 = vshrl.u32 %v2972, 7
    %v2974 = vsub.s32 1, %v2973
    %v2975 = vrot.slane %v2966, %v2974
    %v2976 = vlaneseq
    %v2977 = vshrl.u32 %v2976, 7
    %v2978 = vsub.s32 2, %v2977
    %v2979 = vrot.slane %v2966, %v2978
    %v2980 = vlaneseq
    %v2981 = vshrl.u32 %v2980, 7
    %v2982 = vsub.s32 3, %v2981
    %v2983 = vrot.slane %v2966, %v2982
    %v2984 = vlaneseq
    %v2985 = vshrl.u32 %v2984, 7
    %v2986 = vsub.s32 4, %v2985
    %v2987 = vrot.slane %v2966, %v2986
    %v2988 = vlaneseq
    %v2989 = vshrl.u32 %v2988, 7
    %v2990 = vsub.s32 5, %v2989
    %v2991 = vrot.slane %v2966, %v2990
    %v2992 = vlaneseq
    %v2993 = vshrl.u32 %v2992, 7
    %v2994 = vsub.s32 6, %v2993
    %v2995 = vrot.slane %v2966, %v2994
    %v3203 = vunpack.c.l.b16 %v2766
    %v3204 = vunpack.c.h.b16 %v2766
    %v3205 = vunpack.c.l.b16 %v2767
    %v3206 = vunpack.c.h.b16 %v2767
    %v3207 = vunpack.c.l.b16 %v2768
    %v3208 = vunpack.c.h.b16 %v2768
    %v3209 = vunpack.c.l.b16 %v2769
    %v3210 = vunpack.c.l.b16 %v2770
    %v3211 = vunpack.c.h.b16 %v2770
    %v3212 = vunpack.c.l.b16 %v2771
    %v3213 = vunpack.c.h.b16 %v2771
    %v3214 = vunpack.c.l.b16 %v2772
    %v3215 = vunpack.c.h.b16 %v2772
    %v3216 = vunpack.c.l.b16 %v2773
    %v3217 = vunpack.c.l.b16 %v2774
    %v3218 = vunpack.c.h.b16 %v2774
    %v3219 = vunpack.c.l.b16 %v2775
    %v3220 = vunpack.c.h.b16 %v2775
    %v3221 = vunpack.c.l.b16 %v2776
    %v3222 = vunpack.c.h.b16 %v2776
    %v3223 = vunpack.c.l.b16 %v2777
    %v3224 = vunpack.c.l.b16 %v2778
    %v3225 = vunpack.c.h.b16 %v2778
    %v3226 = vunpack.c.l.b16 %v2779
    %v3227 = vunpack.c.h.b16 %v2779
    %v3228 = vunpack.c.l.b16 %v2780
    %v3229 = vunpack.c.h.b16 %v2780
    %v3230 = vunpack.c.l.b16 %v2781
    %v3231 = vunpack.c.l.b16 %v2782
    %v3232 = vunpack.c.h.b16 %v2782
    %v3233 = vunpack.c.l.b16 %v2783
    %v3234 = vunpack.c.h.b16 %v2783
    %v3235 = vunpack.c.l.b16 %v2784
    %v3236 = vunpack.c.h.b16 %v2784
    %v3237 = vunpack.c.l.b16 %v2785
    %v3238 = vunpack.c.l.b16 %v2786
    %v3239 = vunpack.c.h.b16 %v2786
    %v3240 = vunpack.c.l.b16 %v2787
    %v3241 = vunpack.c.h.b16 %v2787
    %v3242 = vunpack.c.l.b16 %v2788
    %v3243 = vunpack.c.h.b16 %v2788
    %v3244 = vunpack.c.l.b16 %v2789
    %v3245 = vunpack.c.l.b16 %v2790
    %v3246 = vunpack.c.h.b16 %v2790
    %v3247 = vunpack.c.l.b16 %v2791
    %v3248 = vunpack.c.h.b16 %v2791
    %v3249 = vunpack.c.l.b16 %v2792
    %v3250 = vunpack.c.h.b16 %v2792
    %v3251 = vunpack.c.l.b16 %v2793
    %v3252 = vunpack.c.l.b16 %v2794
    %v3253 = vunpack.c.h.b16 %v2794
    %v3254 = vunpack.c.l.b16 %v2795
    %v3255 = vunpack.c.h.b16 %v2795
    %v3256 = vunpack.c.l.b16 %v2796
    %v3257 = vunpack.c.h.b16 %v2796
    %v3258 = vunpack.c.l.b16 %v2797
    %v3259 = vunpack.c.l.b16 %v2798
    %v3260 = vunpack.c.h.b16 %v2798
    %v3261 = vunpack.c.l.b16 %v2799
    %v3262 = vunpack.c.h.b16 %v2799
    %v3263 = vunpack.c.l.b16 %v2800
    %v3264 = vunpack.c.h.b16 %v2800
    %v3265 = vunpack.c.l.b16 %v2801
    %v3266 = vunpack.c.l.b16 %v2802
    %v3267 = vunpack.c.h.b16 %v2802
    %v3268 = vunpack.c.l.b16 %v2803
    %v3269 = vunpack.c.h.b16 %v2803
    %v3270 = vunpack.c.l.b16 %v2804
    %v3271 = vunpack.c.h.b16 %v2804
    %v3272 = vunpack.c.l.b16 %v2805
    %v3273 = vunpack.c.l.b16 %v2806
    %v3274 = vunpack.c.h.b16 %v2806
    %v3275 = vunpack.c.l.b16 %v2807
    %v3276 = vunpack.c.h.b16 %v2807
    %v3277 = vunpack.c.l.b16 %v2808
    %v3278 = vunpack.c.h.b16 %v2808
    %v3279 = vunpack.c.l.b16 %v2809
    %v3280 = vunpack.c.l.b16 %v2810
    %v3281 = vunpack.c.h.b16 %v2810
    %v3282 = vunpack.c.l.b16 %v2811
    %v3283 = vunpack.c.h.b16 %v2811
    %v3284 = vunpack.c.l.b16 %v2812
    %v3285 = vunpack.c.h.b16 %v2812
    %v3286 = vunpack.c.l.b16 %v2813
    %v3287 = vunpack.c.l.b16 %v2814
    %v3288 = vunpack.c.h.b16 %v2814
    %v3289 = vunpack.c.l.b16 %v2815
    %v3290 = vunpack.c.h.b16 %v2815
    %v3291 = vunpack.c.l.b16 %v2816
    %v3292 = vunpack.c.h.b16 %v2816
    %v3293 = vunpack.c.l.b16 %v2817
    %v3294 = vunpack.c.l.b16 %v2818
    %v3295 = vunpack.c.h.b16 %v2818
    %v3296 = vunpack.c.l.b16 %v2819
    %v3297 = vunpack.c.h.b16 %v2819
    %v3298 = vunpack.c.l.b16 %v2820
    %v3299 = vunpack.c.h.b16 %v2820
    %v3300 = vunpack.c.l.b16 %v2821
    %v3301 = vunpack.c.l.b16 %v2822
    %v3302 = vunpack.c.h.b16 %v2822
    %v3303 = vunpack.c.l.b16 %v2823
    %v3304 = vunpack.c.h.b16 %v2823
    %v3305 = vunpack.c.l.b16 %v2824
    %v3306 = vunpack.c.h.b16 %v2824
    %v3307 = vunpack.c.l.b16 %v2825
    %v3308 = vunpack.c.l.b16 %v2826
    %v3309 = vunpack.c.h.b16 %v2826
    %v3310 = vunpack.c.l.b16 %v2827
    %v3311 = vunpack.c.h.b16 %v2827
    %v3312 = vunpack.c.l.b16 %v2828
    %v3313 = vunpack.c.h.b16 %v2828
    %v3314 = vunpack.c.l.b16 %v2829
    %v3315 = vunpack.c.l.b16 %v2830
    %v3316 = vunpack.c.h.b16 %v2830
    %v3317 = vunpack.c.l.b16 %v2831
    %v3318 = vunpack.c.h.b16 %v2831
    %v3319 = vunpack.c.l.b16 %v2832
    %v3320 = vunpack.c.h.b16 %v2832
    %v3321 = vunpack.c.l.b16 %v2833
    %v3322 = vunpack.c.l.b16 %v2834
    %v3323 = vunpack.c.h.b16 %v2834
    %v3324 = vunpack.c.l.b16 %v2835
    %v3325 = vunpack.c.h.b16 %v2835
    %v3326 = vunpack.c.l.b16 %v2836
    %v3327 = vunpack.c.h.b16 %v2836
    %v3328 = vunpack.c.l.b16 %v2837
    %v3329 = vunpack.c.l.b16 %v2838
    %v3330 = vunpack.c.h.b16 %v2838
    %v3331 = vunpack.c.l.b16 %v2839
    %v3332 = vunpack.c.h.b16 %v2839
    %v3333 = vunpack.c.l.b16 %v2840
    %v3334 = vunpack.c.h.b16 %v2840
    %v3335 = vunpack.c.l.b16 %v2841
    %v3336 = vunpack.c.l.b16 %v2842
    %v3337 = vunpack.c.h.b16 %v2842
    %v3338 = vunpack.c.l.b16 %v2843
    %v3339 = vunpack.c.h.b16 %v2843
    %v3340 = vunpack.c.l.b16 %v2844
    %v3341 = vunpack.c.h.b16 %v2844
    %v3342 = vunpack.c.l.b16 %v2845
    %v3343 = vunpack.c.l.b16 %v2846
    %v3344 = vunpack.c.h.b16 %v2846
    %v3345 = vunpack.c.l.b16 %v2847
    %v3346 = vunpack.c.h.b16 %v2847
    %v3347 = vunpack.c.l.b16 %v2848
    %v3348 = vunpack.c.h.b16 %v2848
    %v3349 = vunpack.c.l.b16 %v2849
    %v3350 = vunpack.c.l.b16 %v2850
    %v3351 = vunpack.c.h.b16 %v2850
    %v3352 = vunpack.c.l.b16 %v2851
    %v3353 = vunpack.c.h.b16 %v2851
    %v3354 = vunpack.c.l.b16 %v2852
    %v3355 = vunpack.c.h.b16 %v2852
    %v3356 = vunpack.c.l.b16 %v2853
    %v3357 = vunpack.c.l.b16 %v2854
    %v3358 = vunpack.c.h.b16 %v2854
    %v3359 = vunpack.c.l.b16 %v2855
    %v3360 = vunpack.c.h.b16 %v2855
    %v3361 = vunpack.c.l.b16 %v2856
    %v3362 = vunpack.c.h.b16 %v2856
    %v3363 = vunpack.c.l.b16 %v2857
    %v3364 = vunpack.c.l.b16 %v2858
    %v3365 = vunpack.c.h.b16 %v2858
    %v3366 = vunpack.c.l.b16 %v2859
    %v3367 = vunpack.c.h.b16 %v2859
    %v3368 = vunpack.c.l.b16 %v2860
    %v3369 = vunpack.c.h.b16 %v2860
    %v3370 = vunpack.c.l.b16 %v2861
    %v3371 = vunpack.c.l.b16 %v2862
    %v3372 = vunpack.c.h.b16 %v2862
    %v3373 = vunpack.c.l.b16 %v2863
    %v3374 = vunpack.c.h.b16 %v2863
    %v3375 = vunpack.c.l.b16 %v2864
    %v3376 = vunpack.c.h.b16 %v2864
    %v3377 = vunpack.c.l.b16 %v2865
    %v3378 = vunpack.c.l.b16 %v2866
    %v3379 = vunpack.c.h.b16 %v2866
    %v3380 = vunpack.c.l.b16 %v2867
    %v3381 = vunpack.c.h.b16 %v2867
    %v3382 = vunpack.c.l.b16 %v2868
    %v3383 = vunpack.c.h.b16 %v2868
    %v3384 = vunpack.c.l.b16 %v2869
    %v3385 = vunpack.c.l.b16 %v2870
    %v3386 = vunpack.c.h.b16 %v2870
    %v3387 = vunpack.c.l.b16 %v2871
    %v3388 = vunpack.c.h.b16 %v2871
    %v3389 = vunpack.c.l.b16 %v2872
    %v3390 = vunpack.c.h.b16 %v2872
    %v3391 = vunpack.c.l.b16 %v2873
    %v3392 = vunpack.c.l.b16 %v2874
    %v3393 = vunpack.c.h.b16 %v2874
    %v3394 = vunpack.c.l.b16 %v2875
    %v3395 = vunpack.c.h.b16 %v2875
    %v3396 = vunpack.c.l.b16 %v2876
    %v3397 = vunpack.c.h.b16 %v2876
    %v3398 = vunpack.c.l.b16 %v2877
    %v3399 = vunpack.c.l.b16 %v2878
    %v3400 = vunpack.c.h.b16 %v2878
    %v3401 = vunpack.c.l.b16 %v2879
    %v3402 = vunpack.c.h.b16 %v2879
    %v3403 = vunpack.c.l.b16 %v2880
    %v3404 = vunpack.c.h.b16 %v2880
    %v3405 = vunpack.c.l.b16 %v2881
    %v3406 = vunpack.c.l.b16 %v2882
    %v3407 = vunpack.c.h.b16 %v2882
    %v3408 = vunpack.c.l.b16 %v2883
    %v3409 = vunpack.c.h.b16 %v2883
    %v3410 = vunpack.c.l.b16 %v2884
    %v3411 = vunpack.c.h.b16 %v2884
    %v3412 = vunpack.c.l.b16 %v2885
    %v3413 = vunpack.c.l.b16 %v2886
    %v3414 = vunpack.c.h.b16 %v2886
    %v3415 = vunpack.c.l.b16 %v2887
    %v3416 = vunpack.c.h.b16 %v2887
    %v3417 = vunpack.c.l.b16 %v2888
    %v3418 = vunpack.c.h.b16 %v2888
    %v3419 = vunpack.c.l.b16 %v2889
    %v3420 = vunpack.c.l.b16 %v2890
    %v3421 = vunpack.c.h.b16 %v2890
    %v3422 = vunpack.c.l.b16 %v2891
    %v3423 = vunpack.c.h.b16 %v2891
    %v3424 = vunpack.c.l.b16 %v2892
    %v3425 = vunpack.c.h.b16 %v2892
    %v3426 = vunpack.c.l.b16 %v2893
    %v3427 = vunpack.c.l.b16 %v2894
    %v3428 = vunpack.c.h.b16 %v2894
    %v3429 = vunpack.c.l.b16 %v2895
    %v3430 = vunpack.c.h.b16 %v2895
    %v3431 = vunpack.c.l.b16 %v2896
    %v3432 = vunpack.c.h.b16 %v2896
    %v3433 = vunpack.c.l.b16 %v2897
    %v3434 = vunpack.c.l.b16 %v2898
    %v3435 = vunpack.c.h.b16 %v2898
    %v3436 = vunpack.c.l.b16 %v2899
    %v3437 = vunpack.c.h.b16 %v2899
    %v3438 = vunpack.c.l.b16 %v2900
    %v3439 = vunpack.c.h.b16 %v2900
    %v3440 = vunpack.c.l.b16 %v2901
    %v3441 = vunpack.c.l.b16 %v2902
    %v3442 = vunpack.c.h.b16 %v2902
    %v3443 = vunpack.c.l.b16 %v2903
    %v3444 = vunpack.c.h.b16 %v2903
    %v3445 = vunpack.c.l.b16 %v2904
    %v3446 = vunpack.c.h.b16 %v2904
    %v3447 = vunpack.c.l.b16 %v2905
    %v3448 = vunpack.c.l.b16 %v2906
    %v3449 = vunpack.c.h.b16 %v2906
    %v3450 = vunpack.c.l.b16 %v2907
    %v3451 = vunpack.c.h.b16 %v2907
    %v3452 = vunpack.c.l.b16 %v2908
    %v3453 = vunpack.c.h.b16 %v2908
    %v3454 = vunpack.c.l.b16 %v2909
    %v3455 = vunpack.c.l.b16 %v2910
    %v3456 = vunpack.c.h.b16 %v2910
    %v3457 = vunpack.c.l.b16 %v2911
    %v3458 = vunpack.c.h.b16 %v2911
    %v3459 = vunpack.c.l.b16 %v2912
    %v3460 = vunpack.c.h.b16 %v2912
    %v3461 = vunpack.c.l.b16 %v2913
    %v3462 = vunpack.c.l.b16 %v2914
    %v3463 = vunpack.c.h.b16 %v2914
    %v3464 = vunpack.c.l.b16 %v2915
    %v3465 = vunpack.c.h.b16 %v2915
    %v3466 = vunpack.c.l.b16 %v2916
    %v3467 = vunpack.c.h.b16 %v2916
    %v3468 = vunpack.c.l.b16 %v2917
    %v3469 = vunpack.c.l.b16 %v2918
    %v3470 = vunpack.c.h.b16 %v2918
    %v3471 = vunpack.c.l.b16 %v2919
    %v3472 = vunpack.c.h.b16 %v2919
    %v3473 = vunpack.c.l.b16 %v2920
    %v3474 = vunpack.c.h.b16 %v2920
    %v3475 = vunpack.c.l.b16 %v2921
    %v3476 = vunpack.c.l.b16 %v2922
    %v3477 = vunpack.c.h.b16 %v2922
    %v3478 = vunpack.c.l.b16 %v2923
    %v3479 = vunpack.c.h.b16 %v2923
    %v3480 = vunpack.c.l.b16 %v2924
    %v3481 = vunpack.c.h.b16 %v2924
    %v3482 = vunpack.c.l.b16 %v2925
    %v3483 = vunpack.c.l.b16 %v2926
    %v3484 = vunpack.c.h.b16 %v2926
    %v3485 = vunpack.c.l.b16 %v2927
    %v3486 = vunpack.c.h.b16 %v2927
    %v3487 = vunpack.c.l.b16 %v2928
    %v3488 = vunpack.c.h.b16 %v2928
    %v3489 = vunpack.c.l.b16 %v2929
    %v3490 = vunpack.c.l.b16 %v2930
    %v3491 = vunpack.c.h.b16 %v2930
    %v3492 = vunpack.c.l.b16 %v2931
    %v3493 = vunpack.c.h.b16 %v2931
    %v3494 = vunpack.c.l.b16 %v2932
    %v3495 = vunpack.c.h.b16 %v2932
    %v3496 = vunpack.c.l.b16 %v2933
    %v3497 = vunpack.c.l.b16 %v2934
    %v3498 = vunpack.c.h.b16 %v2934
    %v3499 = vunpack.c.l.b16 %v2935
    %v3500 = vunpack.c.h.b16 %v2935
    %v3501 = vunpack.c.l.b16 %v2936
    %v3502 = vunpack.c.h.b16 %v2936
    %v3503 = vunpack.c.l.b16 %v2937
    %v3504 = vunpack.c.l.b16 %v2938
    %v3505 = vunpack.c.h.b16 %v2938
    %v3506 = vunpack.c.l.b16 %v2939
    %v3507 = vunpack.c.h.b16 %v2939
    %v3508 = vunpack.c.l.b16 %v2940
    %v3509 = vunpack.c.h.b16 %v2940
    %v3510 = vunpack.c.l.b16 %v2941
    %v3511 = vunpack.c.l.b16 %v2942
    %v3512 = vunpack.c.h.b16 %v2942
    %v3513 = vunpack.c.l.b16 %v2943
    %v3514 = vunpack.c.h.b16 %v2943
    %v3515 = vunpack.c.l.b16 %v2944
    %v3516 = vunpack.c.h.b16 %v2944
    %v3517 = vunpack.c.l.b16 %v2945
    %v3518 = vunpack.c.l.b16 %v2946
    %v3519 = vunpack.c.h.b16 %v2946
    %v3520 = vunpack.c.l.b16 %v2947
    %v3521 = vunpack.c.h.b16 %v2947
    %v3522 = vunpack.c.l.b16 %v2948
    %v3523 = vunpack.c.h.b16 %v2948
    %v3524 = vunpack.c.l.b16 %v2949
    %v3525 = vunpack.c.l.b16 %v2950
    %v3526 = vunpack.c.h.b16 %v2950
    %v3527 = vunpack.c.l.b16 %v2951
    %v3528 = vunpack.c.h.b16 %v2951
    %v3529 = vunpack.c.l.b16 %v2952
    %v3530 = vunpack.c.h.b16 %v2952
    %v3531 = vunpack.c.l.b16 %v2953
    %v3532 = vunpack.c.l.b16 %v2954
    %v3533 = vunpack.c.h.b16 %v2954
    %v3534 = vunpack.c.l.b16 %v2955
    %v3535 = vunpack.c.h.b16 %v2955
    %v3536 = vunpack.c.l.b16 %v2956
    %v3537 = vunpack.c.h.b16 %v2956
    %v3538 = vunpack.c.l.b16 %v2957
    %v3539 = vunpack.c.l.b16 %v2958
    %v3540 = vunpack.c.h.b16 %v2958
    %v3541 = vunpack.c.l.b16 %v2959
    %v3542 = vunpack.c.h.b16 %v2959
    %v3543 = vunpack.c.l.b16 %v2960
    %v3544 = vunpack.c.h.b16 %v2960
    %v3545 = vunpack.c.l.b16 %v2961
    %v3546 = vunpack.c.l.b16 %v2962
    %v3547 = vunpack.c.h.b16 %v2962
    %v3548 = vunpack.c.l.b16 %v2963
    %v3549 = vunpack.c.h.b16 %v2963
    %v3550 = vunpack.c.l.b16 %v2964
    %v3551 = vunpack.c.h.b16 %v2964
    %v3552 = vunpack.c.l.b16 %v2965
    %v3553 = vpack.c.b16 %v3210, %v3203
    %v3554 = vpack.c.b16 %v3211, %v3204
    %v3555 = vpack.c.b16 %v3212, %v3205
    %v3556 = vpack.c.b16 %v3213, %v3206
    %v3557 = vpack.c.b16 %v3214, %v3207
    %v3558 = vpack.c.b16 %v3215, %v3208
    %v3559 = vpack.c.b16 %v3216, %v3209
    %v3560 = vpack.c.b16 %v3224, %v3217
    %v3561 = vpack.c.b16 %v3225, %v3218
    %v3562 = vpack.c.b16 %v3226, %v3219
    %v3563 = vpack.c.b16 %v3227, %v3220
    %v3564 = vpack.c.b16 %v3228, %v3221
    %v3565 = vpack.c.b16 %v3229, %v3222
    %v3566 = vpack.c.b16 %v3230, %v3223
    %v3567 = vpack.c.b16 %v3238, %v3231
    %v3568 = vpack.c.b16 %v3239, %v3232
    %v3569 = vpack.c.b16 %v3240, %v3233
    %v3570 = vpack.c.b16 %v3241, %v3234
    %v3571 = vpack.c.b16 %v3242, %v3235
    %v3572 = vpack.c.b16 %v3243, %v3236
    %v3573 = vpack.c.b16 %v3244, %v3237
    %v3574 = vpack.c.b16 %v3252, %v3245
    %v3575 = vpack.c.b16 %v3253, %v3246
    %v3576 = vpack.c.b16 %v3254, %v3247
    %v3577 = vpack.c.b16 %v3255, %v3248
    %v3578 = vpack.c.b16 %v3256, %v3249
    %v3579 = vpack.c.b16 %v3257, %v3250
    %v3580 = vpack.c.b16 %v3258, %v3251
    %v3581 = vpack.c.b16 %v3266, %v3259
    %v3582 = vpack.c.b16 %v3267, %v3260
    %v3583 = vpack.c.b16 %v3268, %v3261
    %v3584 = vpack.c.b16 %v3269, %v3262
    %v3585 = vpack.c.b16 %v3270, %v3263
    %v3586 = vpack.c.b16 %v3271, %v3264
    %v3587 = vpack.c.b16 %v3272, %v3265
    %v3588 = vpack.c.b16 %v3280, %v3273
    %v3589 = vpack.c.b16 %v3281, %v3274
    %v3590 = vpack.c.b16 %v3282, %v3275
    %v3591 = vpack.c.b16 %v3283, %v3276
    %v3592 = vpack.c.b16 %v3284, %v3277
    %v3593 = vpack.c.b16 %v3285, %v3278
    %v3594 = vpack.c.b16 %v3286, %v3279
    %v3595 = vpack.c.b16 %v3294, %v3287
    %v3596 = vpack.c.b16 %v3295, %v3288
    %v3597 = vpack.c.b16 %v3296, %v3289
    %v3598 = vpack.c.b16 %v3297, %v3290
    %v3599 = vpack.c.b16 %v3298, %v3291
    %v3600 = vpack.c.b16 %v3299, %v3292
    %v3601 = vpack.c.b16 %v3300, %v3293
    %v3602 = vpack.c.b16 %v3308, %v3301
    %v3603 = vpack.c.b16 %v3309, %v3302
    %v3604 = vpack.c.b16 %v3310, %v3303
    %v3605 = vpack.c.b16 %v3311, %v3304
    %v3606 = vpack.c.b16 %v3312, %v3305
    %v3607 = vpack.c.b16 %v3313, %v3306
    %v3608 = vpack.c.b16 %v3314, %v3307
    %v3609 = vpack.c.b16 %v3322, %v3315
    %v3610 = vpack.c.b16 %v3323, %v3316
    %v3611 = vpack.c.b16 %v3324, %v3317
    %v3612 = vpack.c.b16 %v3325, %v3318
    %v3613 = vpack.c.b16 %v3326, %v3319
    %v3614 = vpack.c.b16 %v3327, %v3320
    %v3615 = vpack.c.b16 %v3328, %v3321
    %v3616 = vpack.c.b16 %v3336, %v3329
    %v3617 = vpack.c.b16 %v3337, %v3330
    %v3618 = vpack.c.b16 %v3338, %v3331
    %v3619 = vpack.c.b16 %v3339, %v3332
    %v3620 = vpack.c.b16 %v3340, %v3333
    %v3621 = vpack.c.b16 %v3341, %v3334
    %v3622 = vpack.c.b16 %v3342, %v3335
    %v3623 = vpack.c.b16 %v3350, %v3343
    %v3624 = vpack.c.b16 %v3351, %v3344
    %v3625 = vpack.c.b16 %v3352, %v3345
    %v3626 = vpack.c.b16 %v3353, %v3346
    %v3627 = vpack.c.b16 %v3354, %v3347
    %v3628 = vpack.c.b16 %v3355, %v3348
    %v3629 = vpack.c.b16 %v3356, %v3349
    %v3630 = vpack.c.b16 %v3364, %v3357
    %v3631 = vpack.c.b16 %v3365, %v3358
    %v3632 = vpack.c.b16 %v3366, %v3359
    %v3633 = vpack.c.b16 %v3367, %v3360
    %v3634 = vpack.c.b16 %v3368, %v3361
    %v3635 = vpack.c.b16 %v3369, %v3362
    %v3636 = vpack.c.b16 %v3370, %v3363
    %v3637 = vpack.c.b16 %v3378, %v3371
    %v3638 = vpack.c.b16 %v3379, %v3372
    %v3639 = vpack.c.b16 %v3380, %v3373
    %v3640 = vpack.c.b16 %v3381, %v3374
    %v3641 = vpack.c.b16 %v3382, %v3375
    %v3642 = vpack.c.b16 %v3383, %v3376
    %v3643 = vpack.c.b16 %v3384, %v3377
    %v3644 = vpack.c.b16 %v3392, %v3385
    %v3645 = vpack.c.b16 %v3393, %v3386
    %v3646 = vpack.c.b16 %v3394, %v3387
    %v3647 = vpack.c.b16 %v3395, %v3388
    %v3648 = vpack.c.b16 %v3396, %v3389
    %v3649 = vpack.c.b16 %v3397, %v3390
    %v3650 = vpack.c.b16 %v3398, %v3391
    %v3651 = vpack.c.b16 %v3406, %v3399
    %v3652 = vpack.c.b16 %v3407, %v3400
    %v3653 = vpack.c.b16 %v3408, %v3401
    %v3654 = vpack.c.b16 %v3409, %v3402
    %v3655 = vpack.c.b16 %v3410, %v3403
    %v3656 = vpack.c.b16 %v3411, %v3404
    %v3657 = vpack.c.b16 %v3412, %v3405
    %v3658 = vpack.c.b16 %v3420, %v3413
    %v3659 = vpack.c.b16 %v3421, %v3414
    %v3660 = vpack.c.b16 %v3422, %v3415
    %v3661 = vpack.c.b16 %v3423, %v3416
    %v3662 = vpack.c.b16 %v3424, %v3417
    %v3663 = vpack.c.b16 %v3425, %v3418
    %v3664 = vpack.c.b16 %v3426, %v3419
    %v3665 = vpack.c.b16 %v3434, %v3427
    %v3666 = vpack.c.b16 %v3435, %v3428
    %v3667 = vpack.c.b16 %v3436, %v3429
    %v3668 = vpack.c.b16 %v3437, %v3430
    %v3669 = vpack.c.b16 %v3438, %v3431
    %v3670 = vpack.c.b16 %v3439, %v3432
    %v3671 = vpack.c.b16 %v3440, %v3433
    %v3672 = vpack.c.b16 %v3448, %v3441
    %v3673 = vpack.c.b16 %v3449, %v3442
    %v3674 = vpack.c.b16 %v3450, %v3443
    %v3675 = vpack.c.b16 %v3451, %v3444
    %v3676 = vpack.c.b16 %v3452, %v3445
    %v3677 = vpack.c.b16 %v3453, %v3446
    %v3678 = vpack.c.b16 %v3454, %v3447
    %v3679 = vpack.c.b16 %v3462, %v3455
    %v3680 = vpack.c.b16 %v3463, %v3456
    %v3681 = vpack.c.b16 %v3464, %v3457
    %v3682 = vpack.c.b16 %v3465, %v3458
    %v3683 = vpack.c.b16 %v3466, %v3459
    %v3684 = vpack.c.b16 %v3467, %v3460
    %v3685 = vpack.c.b16 %v3468, %v3461
    %v3686 = vpack.c.b16 %v3476, %v3469
    %v3687 = vpack.c.b16 %v3477, %v3470
    %v3688 = vpack.c.b16 %v3478, %v3471
    %v3689 = vpack.c.b16 %v3479, %v3472
    %v3690 = vpack.c.b16 %v3480, %v3473
    %v3691 = vpack.c.b16 %v3481, %v3474
    %v3692 = vpack.c.b16 %v3482, %v3475
    %v3693 = vpack.c.b16 %v3490, %v3483
    %v3694 = vpack.c.b16 %v3491, %v3484
    %v3695 = vpack.c.b16 %v3492, %v3485
    %v3696 = vpack.c.b16 %v3493, %v3486
    %v3697 = vpack.c.b16 %v3494, %v3487
    %v3698 = vpack.c.b16 %v3495, %v3488
    %v3699 = vpack.c.b16 %v3496, %v3489
    %v3700 = vpack.c.b16 %v3504, %v3497
    %v3701 = vpack.c.b16 %v3505, %v3498
    %v3702 = vpack.c.b16 %v3506, %v3499
    %v3703 = vpack.c.b16 %v3507, %v3500
    %v3704 = vpack.c.b16 %v3508, %v3501
    %v3705 = vpack.c.b16 %v3509, %v3502
    %v3706 = vpack.c.b16 %v3510, %v3503
    %v3707 = vpack.c.b16 %v3518, %v3511
    %v3708 = vpack.c.b16 %v3519, %v3512
    %v3709 = vpack.c.b16 %v3520, %v3513
    %v3710 = vpack.c.b16 %v3521, %v3514
    %v3711 = vpack.c.b16 %v3522, %v3515
    %v3712 = vpack.c.b16 %v3523, %v3516
    %v3713 = vpack.c.b16 %v3524, %v3517
    %v3714 = vpack.c.b16 %v3532, %v3525
    %v3715 = vpack.c.b16 %v3533, %v3526
    %v3716 = vpack.c.b16 %v3534, %v3527
    %v3717 = vpack.c.b16 %v3535, %v3528
    %v3718 = vpack.c.b16 %v3536, %v3529
    %v3719 = vpack.c.b16 %v3537, %v3530
    %v3720 = vpack.c.b16 %v3538, %v3531
    %v3721 = vpack.c.b16 %v3546, %v3539
    %v3722 = vpack.c.b16 %v3547, %v3540
    %v3723 = vpack.c.b16 %v3548, %v3541
    %v3724 = vpack.c.b16 %v3549, %v3542
    %v3725 = vpack.c.b16 %v3550, %v3543
    %v3726 = vpack.c.b16 %v3551, %v3544
    %v3727 = vpack.c.b16 %v3552, %v3545
    %v3904 = vsel %vm1277, %v2765, 0
    %3906 = vmatprep.subr.bf16.mxu0 %v3554
    %3907 = vmatpush1.bf16.msra.mxu0 %v3553
    %3908 = vmatprep.subr.bf16.mxu0 %v3561
    %3909 = vmatpush1.bf16.msra.mxu0 %v3560
    %3910 = vmatprep.subr.bf16.mxu0 %v3568
    %3911 = vmatpush1.bf16.msra.mxu0 %v3567
    %3912 = vmatprep.subr.bf16.mxu0 %v3575
    %3913 = vmatpush1.bf16.msra.mxu0 %v3574
    %3914 = vmatprep.subr.bf16.mxu0 %v3582
    %3915 = vmatpush1.bf16.msra.mxu0 %v3581
    %3916 = vmatprep.subr.bf16.mxu0 %v3589
    %3917 = vmatpush1.bf16.msra.mxu0 %v3588
    %3918 = vmatprep.subr.bf16.mxu0 %v3596
    %3919 = vmatpush1.bf16.msra.mxu0 %v3595
    %3920 = vmatprep.subr.bf16.mxu0 %v3603
    %3921 = vmatpush1.bf16.msra.mxu0 %v3602
    %3922 = vmatprep.subr.bf16.mxu0 %v3610
    %3923 = vmatpush1.bf16.msra.mxu0 %v3609
    %3924 = vmatprep.subr.bf16.mxu0 %v3617
    %3925 = vmatpush1.bf16.msra.mxu0 %v3616
    %3926 = vmatprep.subr.bf16.mxu0 %v3624
    %3927 = vmatpush1.bf16.msra.mxu0 %v3623
    %3928 = vmatprep.subr.bf16.mxu0 %v3631
    %3929 = vmatpush1.bf16.msra.mxu0 %v3630
    %3930 = vmatprep.subr.bf16.mxu0 %v3638
    %3931 = vmatpush1.bf16.msra.mxu0 %v3637
    %3932 = vmatprep.subr.bf16.mxu0 %v3645
    %3933 = vmatpush1.bf16.msra.mxu0 %v3644
    %3934 = vmatprep.subr.bf16.mxu0 %v3652
    %3935 = vmatpush1.bf16.msra.mxu0 %v3651
    %3936 = vmatprep.subr.bf16.mxu0 %v3659
    %3937 = vmatpush1.bf16.msra.mxu0 %v3658
    %3938 = vmatprep.mubr.bf16.mxu0 %v2763
    %3939 = vmatmul.mubr.bf16.gmra.mrb[0].mxu0 %v2762
    %v3940 = vpop.f32.mrb[0].mxu0
    %v3941 = vadd.f32 %v2971, %v3940
    %v3942 = vpop.f32.mrb[0].mxu0
    %v3943 = vadd.f32 %v2975, %v3942
    %v3944 = vpop.f32.mrb[0].mxu0
    %v3945 = vpop.f32.mrb[0].mxu0
    %3946 = vdwg.mxu0
    %3947 = vmatprep.subr.bf16.mxu0 %v3666
    %3948 = vmatpush1.bf16.msra.mxu0 %v3665
    %3949 = vmatprep.subr.bf16.mxu0 %v3673
    %3950 = vmatpush1.bf16.msra.mxu0 %v3672
    %3951 = vmatprep.subr.bf16.mxu0 %v3680
    %3952 = vmatpush1.bf16.msra.mxu0 %v3679
    %3953 = vmatprep.subr.bf16.mxu0 %v3687
    %3954 = vmatpush1.bf16.msra.mxu0 %v3686
    %3955 = vmatprep.subr.bf16.mxu0 %v3694
    %3956 = vmatpush1.bf16.msra.mxu0 %v3693
    %3957 = vmatprep.subr.bf16.mxu0 %v3701
    %3958 = vmatpush1.bf16.msra.mxu0 %v3700
    %3959 = vmatprep.subr.bf16.mxu0 %v3708
    %3960 = vmatpush1.bf16.msra.mxu0 %v3707
    %3961 = vmatprep.subr.bf16.mxu0 %v3715
    %3962 = vmatpush1.bf16.msra.mxu0 %v3714
    %3963 = vmatprep.subr.bf16.mxu0 %v3722
    %3964 = vmatpush1.bf16.msra.mxu0 %v3721
    %3965 = vmatprep.subr.bf16.mxu0 0
    %3966 = vmatpush1.bf16.msra.mxu0 0
    %3967 = vmatprep.subr.bf16.mxu0 0
    %3968 = vmatpush1.bf16.msra.mxu0 0
    %3969 = vmatprep.subr.bf16.mxu0 0
    %3970 = vmatpush1.bf16.msra.mxu0 0
    %3971 = vmatprep.subr.bf16.mxu0 0
    %3972 = vmatpush1.bf16.msra.mxu0 0
    %3973 = vmatprep.subr.bf16.mxu0 0
    %3974 = vmatpush1.bf16.msra.mxu0 0
    %3975 = vmatprep.subr.bf16.mxu0 0
    %3976 = vmatpush1.bf16.msra.mxu0 0
    %3977 = vmatprep.subr.bf16.mxu0 0
    %3978 = vmatpush1.bf16.msra.mxu0 0
    %3979 = vmatprep.mubr.bf16.mxu0 %v3904
    %3980 = vmatmul.mubr.bf16.gmra.mrb[0].mxu0 %v2764
    %v3981 = vpop.f32.mrb[0].mxu0
    %v3982 = vadd.f32 %v3941, %v3981
    %v3983 = vpop.f32.mrb[0].mxu0
    %v3984 = vadd.f32 %v3943, %v3983
    %v3985 = vpop.f32.mrb[0].mxu0
    %v3986 = vpop.f32.mrb[0].mxu0
    %3987 = vdwg.mxu0
    %3988 = vmatprep.subr.bf16.mxu0 %v3556
    %3989 = vmatpush1.bf16.msra.mxu0 %v3555
    %3990 = vmatprep.subr.bf16.mxu0 %v3563
    %3991 = vmatpush1.bf16.msra.mxu0 %v3562
    %3992 = vmatprep.subr.bf16.mxu0 %v3570
    %3993 = vmatpush1.bf16.msra.mxu0 %v3569
    %3994 = vmatprep.subr.bf16.mxu0 %v3577
    %3995 = vmatpush1.bf16.msra.mxu0 %v3576
    %3996 = vmatprep.subr.bf16.mxu0 %v3584
    %3997 = vmatpush1.bf16.msra.mxu0 %v3583
    %3998 = vmatprep.subr.bf16.mxu0 %v3591
    %3999 = vmatpush1.bf16.msra.mxu0 %v3590
    %4000 = vmatprep.subr.bf16.mxu0 %v3598
    %4001 = vmatpush1.bf16.msra.mxu0 %v3597
    %4002 = vmatprep.subr.bf16.mxu0 %v3605
    %4003 = vmatpush1.bf16.msra.mxu0 %v3604
    %4004 = vmatprep.subr.bf16.mxu0 %v3612
    %4005 = vmatpush1.bf16.msra.mxu0 %v3611
    %4006 = vmatprep.subr.bf16.mxu0 %v3619
    %4007 = vmatpush1.bf16.msra.mxu0 %v3618
    %4008 = vmatprep.subr.bf16.mxu0 %v3626
    %4009 = vmatpush1.bf16.msra.mxu0 %v3625
    %4010 = vmatprep.subr.bf16.mxu0 %v3633
    %4011 = vmatpush1.bf16.msra.mxu0 %v3632
    %4012 = vmatprep.subr.bf16.mxu0 %v3640
    %4013 = vmatpush1.bf16.msra.mxu0 %v3639
    %4014 = vmatprep.subr.bf16.mxu0 %v3647
    %4015 = vmatpush1.bf16.msra.mxu0 %v3646
    %4016 = vmatprep.subr.bf16.mxu0 %v3654
    %4017 = vmatpush1.bf16.msra.mxu0 %v3653
    %4018 = vmatprep.subr.bf16.mxu0 %v3661
    %4019 = vmatpush1.bf16.msra.mxu0 %v3660
    %4020 = vmatprep.mubr.bf16.mxu0 %v2763
    %4021 = vmatmul.mubr.bf16.gmra.mrb[0].mxu0 %v2762
    %v4022 = vpop.f32.mrb[0].mxu0
    %v4023 = vadd.f32 %v2979, %v4022
    %v4024 = vpop.f32.mrb[0].mxu0
    %v4025 = vadd.f32 %v2983, %v4024
    %v4026 = vpop.f32.mrb[0].mxu0
    %v4027 = vpop.f32.mrb[0].mxu0
    %4028 = vdwg.mxu0
    %4029 = vmatprep.subr.bf16.mxu0 %v3668
    %4030 = vmatpush1.bf16.msra.mxu0 %v3667
    %4031 = vmatprep.subr.bf16.mxu0 %v3675
    %4032 = vmatpush1.bf16.msra.mxu0 %v3674
    %4033 = vmatprep.subr.bf16.mxu0 %v3682
    %4034 = vmatpush1.bf16.msra.mxu0 %v3681
    %4035 = vmatprep.subr.bf16.mxu0 %v3689
    %4036 = vmatpush1.bf16.msra.mxu0 %v3688
    %4037 = vmatprep.subr.bf16.mxu0 %v3696
    %4038 = vmatpush1.bf16.msra.mxu0 %v3695
    %4039 = vmatprep.subr.bf16.mxu0 %v3703
    %4040 = vmatpush1.bf16.msra.mxu0 %v3702
    %4041 = vmatprep.subr.bf16.mxu0 %v3710
    %4042 = vmatpush1.bf16.msra.mxu0 %v3709
    %4043 = vmatprep.subr.bf16.mxu0 %v3717
    %4044 = vmatpush1.bf16.msra.mxu0 %v3716
    %4045 = vmatprep.subr.bf16.mxu0 %v3724
    %4046 = vmatpush1.bf16.msra.mxu0 %v3723
    %4047 = vmatprep.subr.bf16.mxu0 0
    %4048 = vmatpush1.bf16.msra.mxu0 0
    %4049 = vmatprep.subr.bf16.mxu0 0
    %4050 = vmatpush1.bf16.msra.mxu0 0
    %4051 = vmatprep.subr.bf16.mxu0 0
    %4052 = vmatpush1.bf16.msra.mxu0 0
    %4053 = vmatprep.subr.bf16.mxu0 0
    %4054 = vmatpush1.bf16.msra.mxu0 0
    %4055 = vmatprep.subr.bf16.mxu0 0
    %4056 = vmatpush1.bf16.msra.mxu0 0
    %4057 = vmatprep.subr.bf16.mxu0 0
    %4058 = vmatpush1.bf16.msra.mxu0 0
    %4059 = vmatprep.subr.bf16.mxu0 0
    %4060 = vmatpush1.bf16.msra.mxu0 0
    %4061 = vmatprep.mubr.bf16.mxu0 %v3904
    %4062 = vmatmul.mubr.bf16.gmra.mrb[0].mxu0 %v2764
    %v4063 = vpop.f32.mrb[0].mxu0
    %v4064 = vadd.f32 %v4023, %v4063
    %v4065 = vpop.f32.mrb[0].mxu0
    %v4066 = vadd.f32 %v4025, %v4065
    %v4067 = vpop.f32.mrb[0].mxu0
    %v4068 = vpop.f32.mrb[0].mxu0
    %4069 = vdwg.mxu0
    %4070 = vmatprep.subr.bf16.mxu0 %v3558
    %4071 = vmatpush1.bf16.msra.mxu0 %v3557
    %4072 = vmatprep.subr.bf16.mxu0 %v3565
    %4073 = vmatpush1.bf16.msra.mxu0 %v3564
    %4074 = vmatprep.subr.bf16.mxu0 %v3572
    %4075 = vmatpush1.bf16.msra.mxu0 %v3571
    %4076 = vmatprep.subr.bf16.mxu0 %v3579
    %4077 = vmatpush1.bf16.msra.mxu0 %v3578
    %4078 = vmatprep.subr.bf16.mxu0 %v3586
    %4079 = vmatpush1.bf16.msra.mxu0 %v3585
    %4080 = vmatprep.subr.bf16.mxu0 %v3593
    %4081 = vmatpush1.bf16.msra.mxu0 %v3592
    %4082 = vmatprep.subr.bf16.mxu0 %v3600
    %4083 = vmatpush1.bf16.msra.mxu0 %v3599
    %4084 = vmatprep.subr.bf16.mxu0 %v3607
    %4085 = vmatpush1.bf16.msra.mxu0 %v3606
    %4086 = vmatprep.subr.bf16.mxu0 %v3614
    %4087 = vmatpush1.bf16.msra.mxu0 %v3613
    %4088 = vmatprep.subr.bf16.mxu0 %v3621
    %4089 = vmatpush1.bf16.msra.mxu0 %v3620
    %4090 = vmatprep.subr.bf16.mxu0 %v3628
    %4091 = vmatpush1.bf16.msra.mxu0 %v3627
    %4092 = vmatprep.subr.bf16.mxu0 %v3635
    %4093 = vmatpush1.bf16.msra.mxu0 %v3634
    %4094 = vmatprep.subr.bf16.mxu0 %v3642
    %4095 = vmatpush1.bf16.msra.mxu0 %v3641
    %4096 = vmatprep.subr.bf16.mxu0 %v3649
    %4097 = vmatpush1.bf16.msra.mxu0 %v3648
    %4098 = vmatprep.subr.bf16.mxu0 %v3656
    %4099 = vmatpush1.bf16.msra.mxu0 %v3655
    %4100 = vmatprep.subr.bf16.mxu0 %v3663
    %4101 = vmatpush1.bf16.msra.mxu0 %v3662
    %4102 = vmatprep.mubr.bf16.mxu0 %v2763
    %4103 = vmatmul.mubr.bf16.gmra.mrb[0].mxu0 %v2762
    %v4104 = vpop.f32.mrb[0].mxu0
    %v4105 = vadd.f32 %v2987, %v4104
    %v4106 = vpop.f32.mrb[0].mxu0
    %v4107 = vadd.f32 %v2991, %v4106
    %v4108 = vpop.f32.mrb[0].mxu0
    %v4109 = vpop.f32.mrb[0].mxu0
    %4110 = vdwg.mxu0
    %4111 = vmatprep.subr.bf16.mxu0 %v3670
    %4112 = vmatpush1.bf16.msra.mxu0 %v3669
    %4113 = vmatprep.subr.bf16.mxu0 %v3677
    %4114 = vmatpush1.bf16.msra.mxu0 %v3676
    %4115 = vmatprep.subr.bf16.mxu0 %v3684
    %4116 = vmatpush1.bf16.msra.mxu0 %v3683
    %4117 = vmatprep.subr.bf16.mxu0 %v3691
    %4118 = vmatpush1.bf16.msra.mxu0 %v3690
    %4119 = vmatprep.subr.bf16.mxu0 %v3698
    %4120 = vmatpush1.bf16.msra.mxu0 %v3697
    %4121 = vmatprep.subr.bf16.mxu0 %v3705
    %4122 = vmatpush1.bf16.msra.mxu0 %v3704
    %4123 = vmatprep.subr.bf16.mxu0 %v3712
    %4124 = vmatpush1.bf16.msra.mxu0 %v3711
    %4125 = vmatprep.subr.bf16.mxu0 %v3719
    %4126 = vmatpush1.bf16.msra.mxu0 %v3718
    %4127 = vmatprep.subr.bf16.mxu0 %v3726
    %4128 = vmatpush1.bf16.msra.mxu0 %v3725
    %4129 = vmatprep.subr.bf16.mxu0 0
    %4130 = vmatpush1.bf16.msra.mxu0 0
    %4131 = vmatprep.subr.bf16.mxu0 0
    %4132 = vmatpush1.bf16.msra.mxu0 0
    %4133 = vmatprep.subr.bf16.mxu0 0
    %4134 = vmatpush1.bf16.msra.mxu0 0
    %4135 = vmatprep.subr.bf16.mxu0 0
    %4136 = vmatpush1.bf16.msra.mxu0 0
    %4137 = vmatprep.subr.bf16.mxu0 0
    %4138 = vmatpush1.bf16.msra.mxu0 0
    %4139 = vmatprep.subr.bf16.mxu0 0
    %4140 = vmatpush1.bf16.msra.mxu0 0
    %4141 = vmatprep.subr.bf16.mxu0 0
    %4142 = vmatpush1.bf16.msra.mxu0 0
    %4143 = vmatprep.mubr.bf16.mxu0 %v3904
    %4144 = vmatmul.mubr.bf16.gmra.mrb[0].mxu0 %v2764
    %v4145 = vpop.f32.mrb[0].mxu0
    %v4146 = vadd.f32 %v4105, %v4145
    %v4147 = vpop.f32.mrb[0].mxu0
    %v4148 = vadd.f32 %v4107, %v4147
    %v4149 = vpop.f32.mrb[0].mxu0
    %v4150 = vpop.f32.mrb[0].mxu0
    %4151 = vdwg.mxu0
    %4152 = vmatprep.subr.bf16.mxu0 0
    %4153 = vmatpush1.bf16.msra.mxu0 %v3559
    %4154 = vmatprep.subr.bf16.mxu0 0
    %4155 = vmatpush1.bf16.msra.mxu0 %v3566
    %4156 = vmatprep.subr.bf16.mxu0 0
    %4157 = vmatpush1.bf16.msra.mxu0 %v3573
    %4158 = vmatprep.subr.bf16.mxu0 0
    %4159 = vmatpush1.bf16.msra.mxu0 %v3580
    %4160 = vmatprep.subr.bf16.mxu0 0
    %4161 = vmatpush1.bf16.msra.mxu0 %v3587
    %4162 = vmatprep.subr.bf16.mxu0 0
    %4163 = vmatpush1.bf16.msra.mxu0 %v3594
    %4164 = vmatprep.subr.bf16.mxu0 0
    %4165 = vmatpush1.bf16.msra.mxu0 %v3601
    %4166 = vmatprep.subr.bf16.mxu0 0
    %4167 = vmatpush1.bf16.msra.mxu0 %v3608
    %4168 = vmatprep.subr.bf16.mxu0 0
    %4169 = vmatpush1.bf16.msra.mxu0 %v3615
    %4170 = vmatprep.subr.bf16.mxu0 0
    %4171 = vmatpush1.bf16.msra.mxu0 %v3622
    %4172 = vmatprep.subr.bf16.mxu0 0
    %4173 = vmatpush1.bf16.msra.mxu0 %v3629
    %4174 = vmatprep.subr.bf16.mxu0 0
    %4175 = vmatpush1.bf16.msra.mxu0 %v3636
    %4176 = vmatprep.subr.bf16.mxu0 0
    %4177 = vmatpush1.bf16.msra.mxu0 %v3643
    %4178 = vmatprep.subr.bf16.mxu0 0
    %4179 = vmatpush1.bf16.msra.mxu0 %v3650
    %4180 = vmatprep.subr.bf16.mxu0 0
    %4181 = vmatpush1.bf16.msra.mxu0 %v3657
    %4182 = vmatprep.subr.bf16.mxu0 0
    %4183 = vmatpush1.bf16.msra.mxu0 %v3664
    %4184 = vmatprep.mubr.bf16.mxu0 %v2763
    %4185 = vmatmul.mubr.bf16.gmra.mrb[0].mxu0 %v2762
    %v4186 = vpop.f32.mrb[0].mxu0
    %v4187 = vadd.f32 %v2995, %v4186
    %v4188 = vpop.f32.mrb[0].mxu0
    %v4189 = vpop.f32.mrb[0].mxu0
    %v4190 = vpop.f32.mrb[0].mxu0
    %4191 = vdwg.mxu0
    %4192 = vmatprep.subr.bf16.mxu0 0
    %4193 = vmatpush1.bf16.msra.mxu0 %v3671
    %4194 = vmatprep.subr.bf16.mxu0 0
    %4195 = vmatpush1.bf16.msra.mxu0 %v3678
    %4196 = vmatprep.subr.bf16.mxu0 0
    %4197 = vmatpush1.bf16.msra.mxu0 %v3685
    %4198 = vmatprep.subr.bf16.mxu0 0
    %4199 = vmatpush1.bf16.msra.mxu0 %v3692
    %4200 = vmatprep.subr.bf16.mxu0 0
    %4201 = vmatpush1.bf16.msra.mxu0 %v3699
    %4202 = vmatprep.subr.bf16.mxu0 0
    %4203 = vmatpush1.bf16.msra.mxu0 %v3706
    %4204 = vmatprep.subr.bf16.mxu0 0
    %4205 = vmatpush1.bf16.msra.mxu0 %v3713
    %4206 = vmatprep.subr.bf16.mxu0 0
    %4207 = vmatpush1.bf16.msra.mxu0 %v3720
    %4208 = vmatprep.subr.bf16.mxu0 0
    %4209 = vmatpush1.bf16.msra.mxu0 %v3727
    %4210 = vmatprep.subr.bf16.mxu0 0
    %4211 = vmatpush1.bf16.msra.mxu0 0
    %4212 = vmatprep.subr.bf16.mxu0 0
    %4213 = vmatpush1.bf16.msra.mxu0 0
    %4214 = vmatprep.subr.bf16.mxu0 0
    %4215 = vmatpush1.bf16.msra.mxu0 0
    %4216 = vmatprep.subr.bf16.mxu0 0
    %4217 = vmatpush1.bf16.msra.mxu0 0
    %4218 = vmatprep.subr.bf16.mxu0 0
    %4219 = vmatpush1.bf16.msra.mxu0 0
    %4220 = vmatprep.subr.bf16.mxu0 0
    %4221 = vmatpush1.bf16.msra.mxu0 0
    %4222 = vmatprep.subr.bf16.mxu0 0
    %4223 = vmatpush1.bf16.msra.mxu0 0
    %4224 = vmatprep.mubr.bf16.mxu0 %v3904
    %4225 = vmatmul.mubr.bf16.gmra.mrb[0].mxu0 %v2764
    %v4226 = vpop.f32.mrb[0].mxu0
    %v4227 = vadd.f32 %v4187, %v4226
    %v4228 = vpop.f32.mrb[0].mxu0
    %v4229 = vpop.f32.mrb[0].mxu0
    %v4230 = vpop.f32.mrb[0].mxu0
    %4231 = vdwg.mxu0
    %v4232 = vxor.u32 %v3982, 2147483648
    %v4233 = vxor.u32 %v3984, 2147483648
    %v4234 = vxor.u32 %v4064, 2147483648
    %v4235 = vxor.u32 %v4066, 2147483648
    %v4236 = vxor.u32 %v4146, 2147483648
    %v4237 = vxor.u32 %v4148, 2147483648
    %v4238 = vxor.u32 %v4227, 2147483648
    %v4239 = vmul.f32 %v4232, 1.442695
    %v4240 = vpow.pop %v4239
    %v4241 = vmul.f32 %v4233, 1.442695
    %v4242 = vpow.pop %v4241
    %v4243 = vmul.f32 %v4234, 1.442695
    %v4244 = vpow.pop %v4243
    %v4245 = vmul.f32 %v4235, 1.442695
    %v4246 = vpow.pop %v4245
    %v4247 = vmul.f32 %v4236, 1.442695
    %v4248 = vpow.pop %v4247
    %v4249 = vmul.f32 %v4237, 1.442695
    %v4250 = vpow.pop %v4249
    %v4251 = vmul.f32 %v4238, 1.442695
    %v4252 = vpow.pop %v4251
    %v4253 = vadd.f32 %v4240, 1.0
    %v4254 = vadd.f32 %v4242, 1.0
    %v4255 = vadd.f32 %v4244, 1.0
    %v4256 = vadd.f32 %v4246, 1.0
    %v4257 = vadd.f32 %v4248, 1.0
    %v4258 = vadd.f32 %v4250, 1.0
    %v4259 = vadd.f32 %v4252, 1.0
    %v4260 = vrcp.pop %v4253
    %v4261 = vmul.f32 1.0, %v4260
    %v4262 = vrcp.pop %v4254
    %v4263 = vmul.f32 1.0, %v4262
    %v4264 = vrcp.pop %v4255
    %v4265 = vmul.f32 1.0, %v4264
    %v4266 = vrcp.pop %v4256
    %v4267 = vmul.f32 1.0, %v4266
    %v4268 = vrcp.pop %v4257
    %v4269 = vmul.f32 1.0, %v4268
    %v4270 = vrcp.pop %v4258
    %v4271 = vmul.f32 1.0, %v4270
    %v4272 = vrcp.pop %v4259
    %v4273 = vmul.f32 1.0, %v4272
    %v4274 = vpack.c.bf16 %v4261, %v4261
    %v4275 = vpack.c.bf16 %v4263, %v4263
    %v4276 = vpack.c.bf16 %v4265, %v4265
    %v4277 = vpack.c.bf16 %v4267, %v4267
    %v4278 = vpack.c.bf16 %v4269, %v4269
    %v4279 = vpack.c.bf16 %v4271, %v4271
    %v4280 = vpack.c.bf16 %v4273, %v4273
    %v4288 = vunpack.c.l.b16 %v4274
    %v4289 = vunpack.c.l.b16 %v4275
    %v4290 = vunpack.c.l.b16 %v4276
    %v4291 = vunpack.c.l.b16 %v4277
    %v4292 = vunpack.c.l.b16 %v4278
    %v4293 = vunpack.c.l.b16 %v4279
    %v4294 = vunpack.c.l.b16 %v4280
    %v4295 = vpack.c.b16 %v4289, %v4288
    %v4296 = vpack.c.b16 %v4291, %v4290
    %v4297 = vpack.c.b16 %v4293, %v4292
    %v4298 = vpack.c.b16 %v4294, %v4294
    %4303 = vst [vmem:[#allocation2] sm:$0xff] %v4295
    %4304 = vst [vmem:[#allocation2 + $0x8] sm:$0xff] %v4296
    %4305 = vst [vmem:[#allocation2 + $0x10] sm:$0xff] %v4297
    %vm4306 = vcmask 125952
    %4307 = vst.msk [vmem:[#allocation2 + $0x18] sm:$0xf] %vm4306, %v4298
    %4308 = vst [vmem:[%s15] sm:$0xff] %v2168
    // Predicated region
    $region58: #{vae_forward.1} parent=1 // pred_check
      _
    $region59: #{vae_forward.1} parent=1 // pred_check_branch
      %4310 = sbr.rel (0) target = $region61
    $region60: #{vae_forward.1} parent=1 // pred_region
      %s4312 = ssub.s32 448, 448
      %4313 = vsyncadd [#allocation3], %s4312
      %s4315 = sshll.u32 [#allocation2], 4
      %s4316 = int_to_ptr.vmem [resolvable:$true] %s4315
      %4318 = dma.vmem_to_hbm [thread:$0]  %s4316, 448, %s14, [#allocation3]
    $region61: #{vae_forward.1} parent=1 // pred_fallthru
      _
    // Predicated region
    $region62: #{vae_forward.1} parent=1 // pred_check
      _
    $region63: #{vae_forward.1} parent=1 // pred_check_branch
      %4320 = sbr.rel (0) target = $region65
    $region64: #{vae_forward.1} parent=1 // pred_region
      _
    $region65: #{vae_forward.1} parent=1 // pred_fallthru
      _
    // Predicated region
    $region66: #{vae_forward.1} parent=1 // pred_check
      _
    $region67: #{vae_forward.1} parent=1 // pred_check_branch
      %4322 = sbr.rel (0) target = $region69
    $region68: #{vae_forward.1} parent=1 // pred_region
      %4323 = dma.done [#allocation3], 448
    $region69: #{vae_forward.1} parent=1 // pred_fallthru
      _
    // Predicated region
    $region70: #{vae_forward.1} parent=1 // pred_check
      _
    $region71: #{vae_forward.1} parent=1 // pred_check_branch
      %4325 = sbr.rel (0) target = $region73
    $region72: #{vae_forward.1} parent=1 // pred_region
      _
    $region73: #{vae_forward.1} parent=1 // pred_fallthru
      _
    %4326 = vsyncpa [#allocation3], 1

</llo_original>
